<compile_context>
chip_gen: v7x
topology: tpu7x:2x2x1
jax: 0.10.0
libtpu: 0.0.40
codegen_flags: <defaults>
</compile_context>

<pallas_src>
import functools
import math

import jax
import jax.numpy as jnp
from jax.experimental import pallas as pl
from jax.experimental.pallas import tpu as pltpu

# ----------------------------- config ---------------------------------------
TEXT_CONFIG = dict(
    vocab_size=50,
    embed_dim=32,
    max_seq_len=8,
    num_heads=4,
    mlp_ratio=4,
    num_layers=2,
    dropout=0.1,
)

LN_EPS = 1e-5
LANE = 128  # TPU lane width; padded channel dims are multiples of this


def _round_up(x, m):
    return ((x + m - 1) // m) * m


def _choose_batch_block(batch, s1):
    """Batch samples per grid step: target ~256 flattened matmul rows
    (fills the v6e/v7x 256-row MXU; >=128 saturates v5e), while keeping at
    least 2 parallel grid steps when the batch allows it (v7x: 2 TensorCores)."""
    bb = max(1, min(batch, -(-256 // s1)))
    if batch >= 2:
        bb = min(bb, batch // 2)
    bb = max(bb, 1)
    while batch % bb:            # need an exact divisor of the batch
        bb -= 1
    return bb


# ------------------------- fused Pallas kernel -------------------------------
def fused_text_transformer_kernel(
    # scalar prefetch
    tok_ref,                                    # (B, S) int32 in SMEM
    # inputs (all VMEM-resident, constant index_maps)
    emb_ref, cls_ref, pos_ref,
    ln1w_ref, ln1b_ref, wqkv_ref, bqkv_ref, wo_ref, bo_ref,
    ln2w_ref, ln2b_ref, w1_ref, b1_ref, w2_ref, b2_ref,
    finw_ref, finb_ref,
    # outputs
    out_ref,                                    # (BB, 1, Dp)
    *, num_layers, num_heads, head_dim, d_real, seq_len, batch_block,
):
    S = seq_len
    S1 = S + 1
    BB = batch_block
    M = BB * S1                                  # flattened rows per grid step
    Dp = cls_ref.shape[-1]                       # padded embed dim (128)
    NH = num_heads
    inv_d = 1.0 / d_real
    scale = 1.0 / math.sqrt(head_dim)

    # ---- lane masks (hoisted: built once per grid step) ---------------------
    # 1.0 on the d_real real embedding lanes, 0.0 on padding lanes.
    ln_mask = (jax.lax.broadcasted_iota(jnp.int32, (1, Dp), 1)
               < d_real).astype(jnp.float32)
    lane3 = jax.lax.broadcasted_iota(jnp.int32, (1, 1, LANE), 2)
    head_masks = [
        ((lane3 >= h * head_dim) & (lane3 < (h + 1) * head_dim)
         ).astype(jnp.float32)
        for h in range(NH)
    ]

    def layer_norm(v, gamma, beta):
        # mean/var over the d_real real lanes only (padding lanes hold zeros);
        # gamma/beta are zero on padding lanes so the output stays zero there.
        mu = jnp.sum(v, axis=-1, keepdims=True) * inv_d
        c = (v - mu) * ln_mask
        var = jnp.sum(c * c, axis=-1, keepdims=True) * inv_d
        return c * jax.lax.rsqrt(var + LN_EPS) * gamma + beta

    # ---- x = [cls ; gather(token_emb)] + pos, built in registers ------------
    cls_row = cls_ref[...]                       # (1, Dp)
    pos = pos_ref[...]                           # (S1, Dp)
    base = pl.program_id(0) * BB
    sample_blocks = []
    for b in range(BB):
        rows = [cls_row]
        for s in range(S):
            tid = tok_ref[base + b, s]           # SMEM scalar read
            rows.append(emb_ref[pl.ds(tid, 1), :])   # dynamic row gather
        sample_blocks.append(jnp.concatenate(rows, axis=0) + pos)   # (S1, Dp)
    x = (jnp.concatenate(sample_blocks, axis=0)
         if BB > 1 else sample_blocks[0])        # (M, Dp) f32
    # dropout: inference-mode identity

    # ---- pre-norm transformer blocks, unrolled over layers ------------------
    for l in range(num_layers):
        # --- attention branch ---
        h = layer_norm(x, ln1w_ref[l], ln1b_ref[l]).astype(jnp.bfloat16)
        qkv = jnp.dot(h, wqkv_ref[l],
                      preferred_element_type=jnp.float32) + bqkv_ref[l]  # (M, 384)
        # lane-tile-aligned Q/K/V sections (heads at lane offsets h*head_dim)
        q3 = qkv[:, 0 * LANE:1 * LANE].reshape(BB, S1, LANE)
        k3 = qkv[:, 1 * LANE:2 * LANE].reshape(BB, S1, LANE)
        v3 = qkv[:, 2 * LANE:3 * LANE].reshape(BB, S1, LANE)
        qb = q3.astype(jnp.bfloat16)

        o3 = jnp.zeros((BB, S1, LANE), jnp.float32)
        for hi in range(NH):
            mask = head_masks[hi]                          # (1, 1, LANE)
            kh = (k3 * mask).astype(jnp.bfloat16)
            s_h = jnp.einsum('bqd,bkd->bqk', qb, kh,
                             preferred_element_type=jnp.float32) * scale
            m_h = jnp.max(s_h, axis=-1, keepdims=True)
            p_h = jnp.exp(s_h - m_h)
            p_h = p_h * pl.reciprocal(jnp.sum(p_h, axis=-1, keepdims=True),
                                      approx=True)
            vh = (v3 * mask).astype(jnp.bfloat16)
            # head output lands on its own 8 lanes -> accumulation == concat
            o3 = o3 + jnp.einsum('bqk,bkd->bqd', p_h.astype(jnp.bfloat16), vh,
                                 preferred_element_type=jnp.float32)
        attn = o3.reshape(M, LANE).astype(jnp.bfloat16)
        x = x + jnp.dot(attn, wo_ref[l],
                        preferred_element_type=jnp.float32) + bo_ref[l]

        # --- MLP branch ---
        h2 = layer_norm(x, ln2w_ref[l], ln2b_ref[l]).astype(jnp.bfloat16)
        m1 = jnp.dot(h2, w1_ref[l],
                     preferred_element_type=jnp.float32) + b1_ref[l]
        m1 = jax.nn.gelu(m1)     # tanh approx; see TODO at top
        m2 = jnp.dot(m1.astype(jnp.bfloat16), w2_ref[l],
                     preferred_element_type=jnp.float32) + b2_ref[l]
        x = x + m2

    # ---- final LayerNorm on the CLS row of each sample -----------------------
    cls_rows = (jnp.concatenate([x[b * S1:b * S1 + 1, :] for b in range(BB)],
                                axis=0)
                if BB > 1 else x[0:1, :])        # (BB, Dp)
    y = layer_norm(cls_rows, finw_ref[...], finb_ref[...])
    out_ref[...] = y[:, None, :]                 # (BB, 1, Dp), lane-dense store


# ------------------------- host-side wrapper ---------------------------------
def run_text_transformer(tokens, kp, cfg, batch_block=None):
    """tokens: (B, S) int32 -> (B, D) f32 CLS representation."""
    B, S = tokens.shape
    S1 = S + 1
    D = cfg["embed_dim"]
    NH = cfg["num_heads"]
    L = cfg["num_layers"]
    head_dim = D // NH
    Dp = kp["cls"].shape[-1]

    BB = batch_block if batch_block is not None else _choose_batch_block(B, S1)
    assert B % BB == 0
    grid = (B // BB,)

    def _full_spec(arr):
        n = arr.ndim
        return pl.BlockSpec(arr.shape, lambda i, tok, _n=n: (0,) * _n)

    in_specs = [
        _full_spec(kp["token_embedding"]),
        _full_spec(kp["cls"]), _full_spec(kp["pos"]),
        _full_spec(kp["ln1_w"]), _full_spec(kp["ln1_b"]),
        _full_spec(kp["w_qkv"]), _full_spec(kp["b_qkv"]),
        _full_spec(kp["w_o"]), _full_spec(kp["b_o"]),
        _full_spec(kp["ln2_w"]), _full_spec(kp["ln2_b"]),
        _full_spec(kp["w1"]), _full_spec(kp["b1"]),
        _full_spec(kp["w2"]), _full_spec(kp["b2"]),
        _full_spec(kp["final_ln_w"]), _full_spec(kp["final_ln_b"]),
    ]
    kernel = functools.partial(
        fused_text_transformer_kernel,
        num_layers=L, num_heads=NH, head_dim=head_dim, d_real=D,
        seq_len=S, batch_block=BB,
    )
    out = pl.pallas_call(
        kernel,
        out_shape=jax.ShapeDtypeStruct((B, 1, Dp), jnp.float32),
        grid_spec=pltpu.PrefetchScalarGridSpec(
            num_scalar_prefetch=1,          # token ids -> SMEM
            grid=grid,
            in_specs=in_specs,
            out_specs=pl.BlockSpec((BB, 1, Dp), lambda i, tok: (i, 0, 0)),
        ),
        compiler_params=pltpu.CompilerParams(
            dimension_semantics=("parallel",)),
    )(
        tokens,
        kp["token_embedding"], kp["cls"], kp["pos"],
        kp["ln1_w"], kp["ln1_b"], kp["w_qkv"], kp["b_qkv"],
        kp["w_o"], kp["b_o"],
        kp["ln2_w"], kp["ln2_b"], kp["w1"], kp["b1"], kp["w2"], kp["b2"],
        kp["final_ln_w"], kp["final_ln_b"],
    )
    return out[:, 0, :D]


# ------------------------- parameter init / packing --------------------------
def init_params(key, cfg):
    """Real (unpadded, per-layer) parameters, same semantics as the module."""
    D = cfg["embed_dim"]
    V = cfg["vocab_size"]
    S = cfg["max_seq_len"]
    H = cfg["mlp_ratio"] * D
    L = cfg["num_layers"]

    keys = iter(jax.random.split(key, 3 + 4 * L))
    scale = 0.02
    params = {
        "token_embedding": scale * jax.random.normal(next(keys), (V, D), jnp.float32),
        "cls_token": scale * jax.random.normal(next(keys), (1, 1, D), jnp.float32),
        "pos_embeddings": scale * jax.random.normal(next(keys), (1, S + 1, D), jnp.float32),
        "final_ln_w": jnp.ones((1, D), jnp.float32),
        "final_ln_b": jnp.zeros((1, D), jnp.float32),
        "blocks": [],
    }
    for _ in range(L):
        params["blocks"].append({
            "ln1_w": jnp.ones((1, D), jnp.float32),
            "ln1_b": jnp.zeros((1, D), jnp.float32),
            "w_qkv": scale * jax.random.normal(next(keys), (D, 3 * D), jnp.float32),
            "b_qkv": jnp.zeros((1, 3 * D), jnp.float32),
            "w_o": scale * jax.random.normal(next(keys), (D, D), jnp.float32),
            "b_o": jnp.zeros((1, D), jnp.float32),
            "ln2_w": jnp.ones((1, D), jnp.float32),
            "ln2_b": jnp.zeros((1, D), jnp.float32),
            "w1": scale * jax.random.normal(next(keys), (D, H), jnp.float32),
            "b1": jnp.zeros((1, H), jnp.float32),
            "w2": scale * jax.random.normal(next(keys), (H, D), jnp.float32),
            "b2": jnp.zeros((1, D), jnp.float32),
        })
    return params


def pack_params(params, cfg):
    """Zero-pad channel dims to minimal 128-lane tiles and stack per-layer weights.

    QKV: (Dp, 3*128) with section t (Q/K/V) at lanes [t*128, t*128+D); head h of each
    section sits at lanes t*128 + h*head_dim (matches the in-kernel head masks).
    Wo: (Dp, Dp) with the real (D, D) block at the top-left (head-concat rows align
    with the packed per-head attention output lanes)."""
    D = cfg["embed_dim"]
    Hm = cfg["mlp_ratio"] * D
    Dp = _round_up(D, LANE)
    Hp = _round_up(Hm, LANE)
    QKVW = 3 * LANE
    assert D <= LANE and Hm <= Hp

    def pad_lane(a, width):
        return jnp.pad(a, [(0, 0)] * (a.ndim - 1) + [(0, width - a.shape[-1])])

    tok = pad_lane(params["token_embedding"], Dp)                 # (V, Dp)
    cls = pad_lane(params["cls_token"].reshape(1, D), Dp)         # (1, Dp)
    pos = pad_lane(params["pos_embeddings"].reshape(-1, D), Dp)   # (S+1, Dp)

    ln1_w, ln1_b, ln2_w, ln2_b = [], [], [], []
    wqkv, bqkv, wo, bo, w1, b1, w2, b2 = [], [], [], [], [], [], [], []
    for blk in params["blocks"]:
        ln1_w.append(pad_lane(blk["ln1_w"], Dp))
        ln1_b.append(pad_lane(blk["ln1_b"], Dp))
        ln2_w.append(pad_lane(blk["ln2_w"], Dp))
        ln2_b.append(pad_lane(blk["ln2_b"], Dp))

        Wp = jnp.zeros((Dp, QKVW), jnp.float32)
        bp = jnp.zeros((1, QKVW), jnp.float32)
        for t in range(3):                                        # Q, K, V sections
            Wp = Wp.at[:D, t * LANE:t * LANE + D].set(blk["w_qkv"][:, t * D:(t + 1) * D])
            bp = bp.at[:, t * LANE:t * LANE + D].set(blk["b_qkv"][:, t * D:(t + 1) * D])
        wqkv.append(Wp)
        bqkv.append(bp)

        wo.append(jnp.zeros((Dp, Dp), jnp.float32).at[:D, :D].set(blk["w_o"]))
        bo.append(pad_lane(blk["b_o"], Dp))

        w1.append(jnp.zeros((Dp, Hp), jnp.float32).at[:D, :Hm].set(blk["w1"]))
        b1.append(jnp.zeros((1, Hp), jnp.float32).at[:, :Hm].set(blk["b1"]))
        w2.append(jnp.zeros((Hp, Dp), jnp.float32).at[:Hm, :D].set(blk["w2"]))
        b2.append(pad_lane(blk["b2"], Dp))

    stack = lambda xs: jnp.stack(xs, axis=0)
    bf16 = lambda a: a.astype(jnp.bfloat16)      # matmul operands only
    return dict(
        token_embedding=tok, cls=cls, pos=pos,
        ln1_w=stack(ln1_w), ln1_b=stack(ln1_b),
        w_qkv=bf16(stack(wqkv)), b_qkv=stack(bqkv),
        w_o=bf16(stack(wo)), b_o=stack(bo),
        ln2_w=stack(ln2_w), ln2_b=stack(ln2_b),
        w1=bf16(stack(w1)), b1=stack(b1),
        w2=bf16(stack(w2)), b2=stack(b2),
        final_ln_w=pad_lane(params["final_ln_w"], Dp),
        final_ln_b=pad_lane(params["final_ln_b"], Dp),
    )


# ------------------------- full forward ---------------------------------------
def text_transformer_forward(tokens, kparams, cfg):
    """tokens: (B, S) int32 -> (B, D) float32 (CLS representation)."""
    return run_text_transformer(tokens.astype(jnp.int32), kparams, cfg)


# ------------------------------ main ------------------------------------------
if __name__ == "__main__":
    cfg = TEXT_CONFIG
    key = jax.random.PRNGKey(0)
    k_params, k_tokens = jax.random.split(key)

    params = init_params(k_params, cfg)
    kparams = pack_params(params, cfg)

    B, S = 2, cfg["max_seq_len"]
    tokens = jax.random.randint(k_tokens, (B, S), 0, cfg["vocab_size"],
                                dtype=jnp.int32)

    out = text_transformer_forward(tokens, kparams, cfg)
    out = jax.block_until_ready(out)
    assert out.shape == (B, cfg["embed_dim"]), out.shape
    assert bool(jnp.all(jnp.isfinite(out)))
    print("KERNEL_OK")
</pallas_src>

<mosaic_0001>
module attributes {stable_mosaic.version = 11 : i64} {
  func.func @fused_text_transformer_kernel(%arg0: i32, %arg1: memref<2x8xi32, #tpu.memory_space<smem>>, %arg2: memref<50x128xf32, #tpu.memory_space<vmem>>, %arg3: memref<1x128xf32, #tpu.memory_space<vmem>>, %arg4: memref<9x128xf32, #tpu.memory_space<vmem>>, %arg5: memref<2x1x128xf32, #tpu.memory_space<vmem>>, %arg6: memref<2x1x128xf32, #tpu.memory_space<vmem>>, %arg7: memref<2x128x384xbf16, #tpu.memory_space<vmem>>, %arg8: memref<2x1x384xf32, #tpu.memory_space<vmem>>, %arg9: memref<2x128x128xbf16, #tpu.memory_space<vmem>>, %arg10: memref<2x1x128xf32, #tpu.memory_space<vmem>>, %arg11: memref<2x1x128xf32, #tpu.memory_space<vmem>>, %arg12: memref<2x1x128xf32, #tpu.memory_space<vmem>>, %arg13: memref<2x128x128xbf16, #tpu.memory_space<vmem>>, %arg14: memref<2x1x128xf32, #tpu.memory_space<vmem>>, %arg15: memref<2x128x128xbf16, #tpu.memory_space<vmem>>, %arg16: memref<2x1x128xf32, #tpu.memory_space<vmem>>, %arg17: memref<1x128xf32, #tpu.memory_space<vmem>>, %arg18: memref<1x128xf32, #tpu.memory_space<vmem>>, %arg19: memref<1x1x128xf32, #tpu.memory_space<vmem>>) attributes {dimension_semantics = [#tpu.dimension_semantics<parallel>], iteration_bounds = array<i64: 2>, scalar_prefetch = 1 : i64, scratch_operands = 0 : i64, tpu.core_type = #tpu.core_type<tc>, window_params = [{pipeline_mode = #tpu.pipeline_mode<synchronous>, transform_indices = @transform_0, window_bounds = array<i64: 50, 128>}, {pipeline_mode = #tpu.pipeline_mode<synchronous>, transform_indices = @transform_1, window_bounds = array<i64: 1, 128>}, {pipeline_mode = #tpu.pipeline_mode<synchronous>, transform_indices = @transform_2, window_bounds = array<i64: 9, 128>}, {pipeline_mode = #tpu.pipeline_mode<synchronous>, transform_indices = @transform_3, window_bounds = array<i64: 2, 1, 128>}, {pipeline_mode = #tpu.pipeline_mode<synchronous>, transform_indices = @transform_4, window_bounds = array<i64: 2, 1, 128>}, {pipeline_mode = #tpu.pipeline_mode<synchronous>, transform_indices = @transform_5, window_bounds = array<i64: 2, 128, 384>}, {pipeline_mode = #tpu.pipeline_mode<synchronous>, transform_indices = @transform_6, window_bounds = array<i64: 2, 1, 384>}, {pipeline_mode = #tpu.pipeline_mode<synchronous>, transform_indices = @transform_7, window_bounds = array<i64: 2, 128, 128>}, {pipeline_mode = #tpu.pipeline_mode<synchronous>, transform_indices = @transform_8, window_bounds = array<i64: 2, 1, 128>}, {pipeline_mode = #tpu.pipeline_mode<synchronous>, transform_indices = @transform_9, window_bounds = array<i64: 2, 1, 128>}, {pipeline_mode = #tpu.pipeline_mode<synchronous>, transform_indices = @transform_10, window_bounds = array<i64: 2, 1, 128>}, {pipeline_mode = #tpu.pipeline_mode<synchronous>, transform_indices = @transform_11, window_bounds = array<i64: 2, 128, 128>}, {pipeline_mode = #tpu.pipeline_mode<synchronous>, transform_indices = @transform_12, window_bounds = array<i64: 2, 1, 128>}, {pipeline_mode = #tpu.pipeline_mode<synchronous>, transform_indices = @transform_13, window_bounds = array<i64: 2, 128, 128>}, {pipeline_mode = #tpu.pipeline_mode<synchronous>, transform_indices = @transform_14, window_bounds = array<i64: 2, 1, 128>}, {pipeline_mode = #tpu.pipeline_mode<synchronous>, transform_indices = @transform_15, window_bounds = array<i64: 1, 128>}, {pipeline_mode = #tpu.pipeline_mode<synchronous>, transform_indices = @transform_16, window_bounds = array<i64: 1, 128>}, {transform_indices = @transform_17, window_bounds = array<i64: 1, 1, 128>}]} {
    %0 = tpu.iota {dimensions = array<i32: 1>} : vector<1x128xi32>
    %c32_i32 = arith.constant 32 : i32
    %1 = vector.broadcast %c32_i32 : i32 to vector<1x128xi32>
    %2 = arith.cmpi slt, %0, %1 : vector<1x128xi32>
    %3 = arith.extui %2 : vector<1x128xi1> to vector<1x128xi32>
    %4 = arith.sitofp %3 : vector<1x128xi32> to vector<1x128xf32>
    %5 = tpu.iota {dimensions = array<i32: 2>} : vector<1x1x128xi32>
    %c0_i32 = arith.constant 0 : i32
    %6 = vector.broadcast %c0_i32 : i32 to vector<1x1x128xi32>
    %7 = arith.cmpi sge, %5, %6 : vector<1x1x128xi32>
    %c8_i32 = arith.constant 8 : i32
    %8 = vector.broadcast %c8_i32 : i32 to vector<1x1x128xi32>
    %9 = arith.cmpi slt, %5, %8 : vector<1x1x128xi32>
    %10 = arith.andi %7, %9 : vector<1x1x128xi1>
    %11 = arith.extui %10 : vector<1x1x128xi1> to vector<1x1x128xi32>
    %12 = arith.sitofp %11 : vector<1x1x128xi32> to vector<1x1x128xf32>
    %c8_i32_0 = arith.constant 8 : i32
    %13 = vector.broadcast %c8_i32_0 : i32 to vector<1x1x128xi32>
    %14 = arith.cmpi sge, %5, %13 : vector<1x1x128xi32>
    %c16_i32 = arith.constant 16 : i32
    %15 = vector.broadcast %c16_i32 : i32 to vector<1x1x128xi32>
    %16 = arith.cmpi slt, %5, %15 : vector<1x1x128xi32>
    %17 = arith.andi %14, %16 : vector<1x1x128xi1>
    %18 = arith.extui %17 : vector<1x1x128xi1> to vector<1x1x128xi32>
    %19 = arith.sitofp %18 : vector<1x1x128xi32> to vector<1x1x128xf32>
    %c16_i32_1 = arith.constant 16 : i32
    %20 = vector.broadcast %c16_i32_1 : i32 to vector<1x1x128xi32>
    %21 = arith.cmpi sge, %5, %20 : vector<1x1x128xi32>
    %c24_i32 = arith.constant 24 : i32
    %22 = vector.broadcast %c24_i32 : i32 to vector<1x1x128xi32>
    %23 = arith.cmpi slt, %5, %22 : vector<1x1x128xi32>
    %24 = arith.andi %21, %23 : vector<1x1x128xi1>
    %25 = arith.extui %24 : vector<1x1x128xi1> to vector<1x1x128xi32>
    %26 = arith.sitofp %25 : vector<1x1x128xi32> to vector<1x1x128xf32>
    %c24_i32_2 = arith.constant 24 : i32
    %27 = vector.broadcast %c24_i32_2 : i32 to vector<1x1x128xi32>
    %28 = arith.cmpi sge, %5, %27 : vector<1x1x128xi32>
    %c32_i32_3 = arith.constant 32 : i32
    %29 = vector.broadcast %c32_i32_3 : i32 to vector<1x1x128xi32>
    %30 = arith.cmpi slt, %5, %29 : vector<1x1x128xi32>
    %31 = arith.andi %28, %30 : vector<1x1x128xi1>
    %32 = arith.extui %31 : vector<1x1x128xi1> to vector<1x1x128xi32>
    %33 = arith.sitofp %32 : vector<1x1x128xi32> to vector<1x1x128xf32>
    %c0 = arith.constant 0 : index
    %c0_4 = arith.constant 0 : index
    %34 = vector.load %arg3[%c0, %c0_4] : memref<1x128xf32, #tpu.memory_space<vmem>>, vector<1x128xf32>
    %c0_5 = arith.constant 0 : index
    %c0_6 = arith.constant 0 : index
    %35 = vector.load %arg4[%c0_5, %c0_6] : memref<9x128xf32, #tpu.memory_space<vmem>>, vector<9x128xf32>
    %c1_i32 = arith.constant 1 : i32
    %36 = arith.muli %arg0, %c1_i32 : i32
    %c0_i32_7 = arith.constant 0 : i32
    %37 = arith.addi %36, %c0_i32_7 : i32
    %38 = arith.index_cast %37 : i32 to index
    %c0_8 = arith.constant 0 : index
    %39 = memref.load %arg1[%38, %c0_8] : memref<2x8xi32, #tpu.memory_space<smem>>
    %40 = arith.index_cast %39 : i32 to index
    %c0_9 = arith.constant 0 : index
    %41 = vector.load %arg2[%40, %c0_9] : memref<50x128xf32, #tpu.memory_space<vmem>>, vector<1x128xf32>
    %c0_i32_10 = arith.constant 0 : i32
    %42 = arith.addi %36, %c0_i32_10 : i32
    %43 = arith.index_cast %42 : i32 to index
    %c1 = arith.constant 1 : index
    %44 = memref.load %arg1[%43, %c1] : memref<2x8xi32, #tpu.memory_space<smem>>
    %45 = arith.index_cast %44 : i32 to index
    %c0_11 = arith.constant 0 : index
    %46 = vector.load %arg2[%45, %c0_11] : memref<50x128xf32, #tpu.memory_space<vmem>>, vector<1x128xf32>
    %c0_i32_12 = arith.constant 0 : i32
    %47 = arith.addi %36, %c0_i32_12 : i32
    %48 = arith.index_cast %47 : i32 to index
    %c2 = arith.constant 2 : index
    %49 = memref.load %arg1[%48, %c2] : memref<2x8xi32, #tpu.memory_space<smem>>
    %50 = arith.index_cast %49 : i32 to index
    %c0_13 = arith.constant 0 : index
    %51 = vector.load %arg2[%50, %c0_13] : memref<50x128xf32, #tpu.memory_space<vmem>>, vector<1x128xf32>
    %c0_i32_14 = arith.constant 0 : i32
    %52 = arith.addi %36, %c0_i32_14 : i32
    %53 = arith.index_cast %52 : i32 to index
    %c3 = arith.constant 3 : index
    %54 = memref.load %arg1[%53, %c3] : memref<2x8xi32, #tpu.memory_space<smem>>
    %55 = arith.index_cast %54 : i32 to index
    %c0_15 = arith.constant 0 : index
    %56 = vector.load %arg2[%55, %c0_15] : memref<50x128xf32, #tpu.memory_space<vmem>>, vector<1x128xf32>
    %c0_i32_16 = arith.constant 0 : i32
    %57 = arith.addi %36, %c0_i32_16 : i32
    %58 = arith.index_cast %57 : i32 to index
    %c4 = arith.constant 4 : index
    %59 = memref.load %arg1[%58, %c4] : memref<2x8xi32, #tpu.memory_space<smem>>
    %60 = arith.index_cast %59 : i32 to index
    %c0_17 = arith.constant 0 : index
    %61 = vector.load %arg2[%60, %c0_17] : memref<50x128xf32, #tpu.memory_space<vmem>>, vector<1x128xf32>
    %c0_i32_18 = arith.constant 0 : i32
    %62 = arith.addi %36, %c0_i32_18 : i32
    %63 = arith.index_cast %62 : i32 to index
    %c5 = arith.constant 5 : index
    %64 = memref.load %arg1[%63, %c5] : memref<2x8xi32, #tpu.memory_space<smem>>
    %65 = arith.index_cast %64 : i32 to index
    %c0_19 = arith.constant 0 : index
    %66 = vector.load %arg2[%65, %c0_19] : memref<50x128xf32, #tpu.memory_space<vmem>>, vector<1x128xf32>
    %c0_i32_20 = arith.constant 0 : i32
    %67 = arith.addi %36, %c0_i32_20 : i32
    %68 = arith.index_cast %67 : i32 to index
    %c6 = arith.constant 6 : index
    %69 = memref.load %arg1[%68, %c6] : memref<2x8xi32, #tpu.memory_space<smem>>
    %70 = arith.index_cast %69 : i32 to index
    %c0_21 = arith.constant 0 : index
    %71 = vector.load %arg2[%70, %c0_21] : memref<50x128xf32, #tpu.memory_space<vmem>>, vector<1x128xf32>
    %c0_i32_22 = arith.constant 0 : i32
    %72 = arith.addi %36, %c0_i32_22 : i32
    %73 = arith.index_cast %72 : i32 to index
    %c7 = arith.constant 7 : index
    %74 = memref.load %arg1[%73, %c7] : memref<2x8xi32, #tpu.memory_space<smem>>
    %75 = arith.index_cast %74 : i32 to index
    %c0_23 = arith.constant 0 : index
    %76 = vector.load %arg2[%75, %c0_23] : memref<50x128xf32, #tpu.memory_space<vmem>>, vector<1x128xf32>
    %77 = tpu.concatenate %34, %41, %46, %51, %56, %61, %66, %71, %76 in 0 : vector<1x128xf32>, vector<1x128xf32>, vector<1x128xf32>, vector<1x128xf32>, vector<1x128xf32>, vector<1x128xf32>, vector<1x128xf32>, vector<1x128xf32>, vector<1x128xf32> -> vector<9x128xf32>
    %78 = arith.addf %77, %35 : vector<9x128xf32>
    %c0_24 = arith.constant 0 : index
    %c0_25 = arith.constant 0 : index
    %c0_26 = arith.constant 0 : index
    %79 = vector.load %arg5[%c0_24, %c0_25, %c0_26] : memref<2x1x128xf32, #tpu.memory_space<vmem>>, vector<1x1x128xf32>
    %80 = vector.shape_cast %79 : vector<1x1x128xf32> to vector<1x128xf32>
    %c0_27 = arith.constant 0 : index
    %c0_28 = arith.constant 0 : index
    %c0_29 = arith.constant 0 : index
    %81 = vector.load %arg6[%c0_27, %c0_28, %c0_29] : memref<2x1x128xf32, #tpu.memory_space<vmem>>, vector<1x1x128xf32>
    %82 = vector.shape_cast %81 : vector<1x1x128xf32> to vector<1x128xf32>
    %cst = arith.constant dense<0.000000e+00> : vector<9xf32>
    %83 = vector.multi_reduction <add>, %78, %cst [1] : vector<9x128xf32> to vector<9xf32>
    %84 = vector.shape_cast %83 : vector<9xf32> to vector<9x1xf32>
    %cst_30 = arith.constant 3.125000e-02 : f32
    %85 = vector.broadcast %cst_30 : f32 to vector<9x1xf32>
    %86 = arith.mulf %84, %85 : vector<9x1xf32>
    %87 = vector.broadcast %86 : vector<9x1xf32> to vector<9x128xf32>
    %88 = arith.subf %78, %87 : vector<9x128xf32>
    %89 = vector.broadcast %4 : vector<1x128xf32> to vector<9x128xf32>
    %90 = arith.mulf %88, %89 : vector<9x128xf32>
    %91 = arith.mulf %90, %90 : vector<9x128xf32>
    %cst_31 = arith.constant dense<0.000000e+00> : vector<9xf32>
    %92 = vector.multi_reduction <add>, %91, %cst_31 [1] : vector<9x128xf32> to vector<9xf32>
    %93 = vector.shape_cast %92 : vector<9xf32> to vector<9x1xf32>
    %cst_32 = arith.constant 3.125000e-02 : f32
    %94 = vector.broadcast %cst_32 : f32 to vector<9x1xf32>
    %95 = arith.mulf %93, %94 : vector<9x1xf32>
    %cst_33 = arith.constant 9.99999974E-6 : f32
    %96 = vector.broadcast %cst_33 : f32 to vector<9x1xf32>
    %97 = arith.addf %95, %96 : vector<9x1xf32>
    %98 = math.rsqrt %97 : vector<9x1xf32>
    %99 = vector.broadcast %98 : vector<9x1xf32> to vector<9x128xf32>
    %100 = arith.mulf %90, %99 : vector<9x128xf32>
    %101 = vector.broadcast %80 : vector<1x128xf32> to vector<9x128xf32>
    %102 = arith.mulf %100, %101 : vector<9x128xf32>
    %103 = vector.broadcast %82 : vector<1x128xf32> to vector<9x128xf32>
    %104 = arith.addf %102, %103 : vector<9x128xf32>
    %105 = arith.truncf %104 : vector<9x128xf32> to vector<9x128xbf16>
    %c0_34 = arith.constant 0 : index
    %c0_35 = arith.constant 0 : index
    %c0_36 = arith.constant 0 : index
    %106 = vector.load %arg7[%c0_34, %c0_35, %c0_36] : memref<2x128x384xbf16, #tpu.memory_space<vmem>>, vector<1x128x384xbf16>
    %107 = vector.shape_cast %106 : vector<1x128x384xbf16> to vector<128x384xbf16>
    %cst_37 = arith.constant dense<0.000000e+00> : vector<9x384xf32>
    %108 = tpu.matmul %105, %107, %cst_37 {dimension_numbers = #tpu.dot_dimension_numbers<[1], [0], [0], [1], [0, 0, 1, 1], [], []>} : vector<9x128xbf16>, vector<128x384xbf16>, vector<9x384xf32> -> vector<9x384xf32>
    %c0_38 = arith.constant 0 : index
    %c0_39 = arith.constant 0 : index
    %c0_40 = arith.constant 0 : index
    %109 = vector.load %arg8[%c0_38, %c0_39, %c0_40] : memref<2x1x384xf32, #tpu.memory_space<vmem>>, vector<1x1x384xf32>
    %110 = vector.shape_cast %109 : vector<1x1x384xf32> to vector<1x384xf32>
    %111 = vector.broadcast %110 : vector<1x384xf32> to vector<9x384xf32>
    %112 = arith.addf %108, %111 : vector<9x384xf32>
    %113 = vector.extract_strided_slice %112 {offsets = [0, 0], sizes = [9, 128], strides = [1, 1]} : vector<9x384xf32> to vector<9x128xf32>
    %114 = vector.shape_cast %113 : vector<9x128xf32> to vector<1x9x128xf32>
    %115 = vector.extract_strided_slice %112 {offsets = [0, 128], sizes = [9, 128], strides = [1, 1]} : vector<9x384xf32> to vector<9x128xf32>
    %116 = vector.shape_cast %115 : vector<9x128xf32> to vector<1x9x128xf32>
    %117 = vector.extract_strided_slice %112 {offsets = [0, 256], sizes = [9, 128], strides = [1, 1]} : vector<9x384xf32> to vector<9x128xf32>
    %118 = vector.shape_cast %117 : vector<9x128xf32> to vector<1x9x128xf32>
    %119 = arith.truncf %114 : vector<1x9x128xf32> to vector<1x9x128xbf16>
    %cst_41 = arith.constant 0.000000e+00 : f32
    %120 = vector.broadcast %cst_41 : f32 to vector<1x9x128xf32>
    %121 = vector.broadcast %12 : vector<1x1x128xf32> to vector<1x9x128xf32>
    %122 = arith.mulf %116, %121 : vector<1x9x128xf32>
    %123 = arith.truncf %122 : vector<1x9x128xf32> to vector<1x9x128xbf16>
    "tpu.trace_start"() <{level = 10 : i32, message = "bqd,bkd->bqk"}> : () -> ()
    %cst_42 = arith.constant dense<0.000000e+00> : vector<1x9x9xf32>
    %124 = tpu.matmul %119, %123, %cst_42 {dimension_numbers = #tpu.dot_dimension_numbers<[2], [2], [1], [1], [0, 0, 0, 1, 1, 1], [0], [0]>} : vector<1x9x128xbf16>, vector<1x9x128xbf16>, vector<1x9x9xf32> -> vector<1x9x9xf32>
    "tpu.trace_stop"() : () -> ()
    %cst_43 = arith.constant 0.353553385 : f32
    %125 = vector.broadcast %cst_43 : f32 to vector<1x9x9xf32>
    %126 = arith.mulf %124, %125 : vector<1x9x9xf32>
    %cst_44 = arith.constant dense<0xFF800000> : vector<1x9xf32>
    %127 = vector.multi_reduction <maximumf>, %126, %cst_44 [2] : vector<1x9x9xf32> to vector<1x9xf32>
    %128 = vector.shape_cast %127 : vector<1x9xf32> to vector<1x9x1xf32>
    %129 = vector.broadcast %128 : vector<1x9x1xf32> to vector<1x9x9xf32>
    %130 = arith.subf %126, %129 : vector<1x9x9xf32>
    %131 = math.exp %130 : vector<1x9x9xf32>
    %cst_45 = arith.constant dense<0.000000e+00> : vector<1x9xf32>
    %132 = vector.multi_reduction <add>, %131, %cst_45 [2] : vector<1x9x9xf32> to vector<1x9xf32>
    %133 = vector.shape_cast %132 : vector<1x9xf32> to vector<1x9x1xf32>
    %134 = tpu.reciprocal %133 {approx = true} : vector<1x9x1xf32> -> vector<1x9x1xf32>
    %135 = vector.broadcast %134 : vector<1x9x1xf32> to vector<1x9x9xf32>
    %136 = arith.mulf %131, %135 : vector<1x9x9xf32>
    %137 = vector.broadcast %12 : vector<1x1x128xf32> to vector<1x9x128xf32>
    %138 = arith.mulf %118, %137 : vector<1x9x128xf32>
    %139 = arith.truncf %138 : vector<1x9x128xf32> to vector<1x9x128xbf16>
    %140 = arith.truncf %136 : vector<1x9x9xf32> to vector<1x9x9xbf16>
    "tpu.trace_start"() <{level = 10 : i32, message = "bqk,bkd->bqd"}> : () -> ()
    %cst_46 = arith.constant dense<0.000000e+00> : vector<1x9x128xf32>
    %141 = tpu.matmul %140, %139, %cst_46 {dimension_numbers = #tpu.dot_dimension_numbers<[2], [1], [1], [2], [0, 0, 0, 1, 1, 2], [0], [0]>} : vector<1x9x9xbf16>, vector<1x9x128xbf16>, vector<1x9x128xf32> -> vector<1x9x128xf32>
    "tpu.trace_stop"() : () -> ()
    %142 = arith.addf %120, %141 : vector<1x9x128xf32>
    %143 = vector.broadcast %19 : vector<1x1x128xf32> to vector<1x9x128xf32>
    %144 = arith.mulf %116, %143 : vector<1x9x128xf32>
    %145 = arith.truncf %144 : vector<1x9x128xf32> to vector<1x9x128xbf16>
    "tpu.trace_start"() <{level = 10 : i32, message = "bqd,bkd->bqk"}> : () -> ()
    %cst_47 = arith.constant dense<0.000000e+00> : vector<1x9x9xf32>
    %146 = tpu.matmul %119, %145, %cst_47 {dimension_numbers = #tpu.dot_dimension_numbers<[2], [2], [1], [1], [0, 0, 0, 1, 1, 1], [0], [0]>} : vector<1x9x128xbf16>, vector<1x9x128xbf16>, vector<1x9x9xf32> -> vector<1x9x9xf32>
    "tpu.trace_stop"() : () -> ()
    %cst_48 = arith.constant 0.353553385 : f32
    %147 = vector.broadcast %cst_48 : f32 to vector<1x9x9xf32>
    %148 = arith.mulf %146, %147 : vector<1x9x9xf32>
    %cst_49 = arith.constant dense<0xFF800000> : vector<1x9xf32>
    %149 = vector.multi_reduction <maximumf>, %148, %cst_49 [2] : vector<1x9x9xf32> to vector<1x9xf32>
    %150 = vector.shape_cast %149 : vector<1x9xf32> to vector<1x9x1xf32>
    %151 = vector.broadcast %150 : vector<1x9x1xf32> to vector<1x9x9xf32>
    %152 = arith.subf %148, %151 : vector<1x9x9xf32>
    %153 = math.exp %152 : vector<1x9x9xf32>
    %cst_50 = arith.constant dense<0.000000e+00> : vector<1x9xf32>
    %154 = vector.multi_reduction <add>, %153, %cst_50 [2] : vector<1x9x9xf32> to vector<1x9xf32>
    %155 = vector.shape_cast %154 : vector<1x9xf32> to vector<1x9x1xf32>
    %156 = tpu.reciprocal %155 {approx = true} : vector<1x9x1xf32> -> vector<1x9x1xf32>
    %157 = vector.broadcast %156 : vector<1x9x1xf32> to vector<1x9x9xf32>
    %158 = arith.mulf %153, %157 : vector<1x9x9xf32>
    %159 = vector.broadcast %19 : vector<1x1x128xf32> to vector<1x9x128xf32>
    %160 = arith.mulf %118, %159 : vector<1x9x128xf32>
    %161 = arith.truncf %160 : vector<1x9x128xf32> to vector<1x9x128xbf16>
    %162 = arith.truncf %158 : vector<1x9x9xf32> to vector<1x9x9xbf16>
    "tpu.trace_start"() <{level = 10 : i32, message = "bqk,bkd->bqd"}> : () -> ()
    %cst_51 = arith.constant dense<0.000000e+00> : vector<1x9x128xf32>
    %163 = tpu.matmul %162, %161, %cst_51 {dimension_numbers = #tpu.dot_dimension_numbers<[2], [1], [1], [2], [0, 0, 0, 1, 1, 2], [0], [0]>} : vector<1x9x9xbf16>, vector<1x9x128xbf16>, vector<1x9x128xf32> -> vector<1x9x128xf32>
    "tpu.trace_stop"() : () -> ()
    %164 = arith.addf %142, %163 : vector<1x9x128xf32>
    %165 = vector.broadcast %26 : vector<1x1x128xf32> to vector<1x9x128xf32>
    %166 = arith.mulf %116, %165 : vector<1x9x128xf32>
    %167 = arith.truncf %166 : vector<1x9x128xf32> to vector<1x9x128xbf16>
    "tpu.trace_start"() <{level = 10 : i32, message = "bqd,bkd->bqk"}> : () -> ()
    %cst_52 = arith.constant dense<0.000000e+00> : vector<1x9x9xf32>
    %168 = tpu.matmul %119, %167, %cst_52 {dimension_numbers = #tpu.dot_dimension_numbers<[2], [2], [1], [1], [0, 0, 0, 1, 1, 1], [0], [0]>} : vector<1x9x128xbf16>, vector<1x9x128xbf16>, vector<1x9x9xf32> -> vector<1x9x9xf32>
    "tpu.trace_stop"() : () -> ()
    %cst_53 = arith.constant 0.353553385 : f32
    %169 = vector.broadcast %cst_53 : f32 to vector<1x9x9xf32>
    %170 = arith.mulf %168, %169 : vector<1x9x9xf32>
    %cst_54 = arith.constant dense<0xFF800000> : vector<1x9xf32>
    %171 = vector.multi_reduction <maximumf>, %170, %cst_54 [2] : vector<1x9x9xf32> to vector<1x9xf32>
    %172 = vector.shape_cast %171 : vector<1x9xf32> to vector<1x9x1xf32>
    %173 = vector.broadcast %172 : vector<1x9x1xf32> to vector<1x9x9xf32>
    %174 = arith.subf %170, %173 : vector<1x9x9xf32>
    %175 = math.exp %174 : vector<1x9x9xf32>
    %cst_55 = arith.constant dense<0.000000e+00> : vector<1x9xf32>
    %176 = vector.multi_reduction <add>, %175, %cst_55 [2] : vector<1x9x9xf32> to vector<1x9xf32>
    %177 = vector.shape_cast %176 : vector<1x9xf32> to vector<1x9x1xf32>
    %178 = tpu.reciprocal %177 {approx = true} : vector<1x9x1xf32> -> vector<1x9x1xf32>
    %179 = vector.broadcast %178 : vector<1x9x1xf32> to vector<1x9x9xf32>
    %180 = arith.mulf %175, %179 : vector<1x9x9xf32>
    %181 = vector.broadcast %26 : vector<1x1x128xf32> to vector<1x9x128xf32>
    %182 = arith.mulf %118, %181 : vector<1x9x128xf32>
    %183 = arith.truncf %182 : vector<1x9x128xf32> to vector<1x9x128xbf16>
    %184 = arith.truncf %180 : vector<1x9x9xf32> to vector<1x9x9xbf16>
    "tpu.trace_start"() <{level = 10 : i32, message = "bqk,bkd->bqd"}> : () -> ()
    %cst_56 = arith.constant dense<0.000000e+00> : vector<1x9x128xf32>
    %185 = tpu.matmul %184, %183, %cst_56 {dimension_numbers = #tpu.dot_dimension_numbers<[2], [1], [1], [2], [0, 0, 0, 1, 1, 2], [0], [0]>} : vector<1x9x9xbf16>, vector<1x9x128xbf16>, vector<1x9x128xf32> -> vector<1x9x128xf32>
    "tpu.trace_stop"() : () -> ()
    %186 = arith.addf %164, %185 : vector<1x9x128xf32>
    %187 = vector.broadcast %33 : vector<1x1x128xf32> to vector<1x9x128xf32>
    %188 = arith.mulf %116, %187 : vector<1x9x128xf32>
    %189 = arith.truncf %188 : vector<1x9x128xf32> to vector<1x9x128xbf16>
    "tpu.trace_start"() <{level = 10 : i32, message = "bqd,bkd->bqk"}> : () -> ()
    %cst_57 = arith.constant dense<0.000000e+00> : vector<1x9x9xf32>
    %190 = tpu.matmul %119, %189, %cst_57 {dimension_numbers = #tpu.dot_dimension_numbers<[2], [2], [1], [1], [0, 0, 0, 1, 1, 1], [0], [0]>} : vector<1x9x128xbf16>, vector<1x9x128xbf16>, vector<1x9x9xf32> -> vector<1x9x9xf32>
    "tpu.trace_stop"() : () -> ()
    %cst_58 = arith.constant 0.353553385 : f32
    %191 = vector.broadcast %cst_58 : f32 to vector<1x9x9xf32>
    %192 = arith.mulf %190, %191 : vector<1x9x9xf32>
    %cst_59 = arith.constant dense<0xFF800000> : vector<1x9xf32>
    %193 = vector.multi_reduction <maximumf>, %192, %cst_59 [2] : vector<1x9x9xf32> to vector<1x9xf32>
    %194 = vector.shape_cast %193 : vector<1x9xf32> to vector<1x9x1xf32>
    %195 = vector.broadcast %194 : vector<1x9x1xf32> to vector<1x9x9xf32>
    %196 = arith.subf %192, %195 : vector<1x9x9xf32>
    %197 = math.exp %196 : vector<1x9x9xf32>
    %cst_60 = arith.constant dense<0.000000e+00> : vector<1x9xf32>
    %198 = vector.multi_reduction <add>, %197, %cst_60 [2] : vector<1x9x9xf32> to vector<1x9xf32>
    %199 = vector.shape_cast %198 : vector<1x9xf32> to vector<1x9x1xf32>
    %200 = tpu.reciprocal %199 {approx = true} : vector<1x9x1xf32> -> vector<1x9x1xf32>
    %201 = vector.broadcast %200 : vector<1x9x1xf32> to vector<1x9x9xf32>
    %202 = arith.mulf %197, %201 : vector<1x9x9xf32>
    %203 = vector.broadcast %33 : vector<1x1x128xf32> to vector<1x9x128xf32>
    %204 = arith.mulf %118, %203 : vector<1x9x128xf32>
    %205 = arith.truncf %204 : vector<1x9x128xf32> to vector<1x9x128xbf16>
    %206 = arith.truncf %202 : vector<1x9x9xf32> to vector<1x9x9xbf16>
    "tpu.trace_start"() <{level = 10 : i32, message = "bqk,bkd->bqd"}> : () -> ()
    %cst_61 = arith.constant dense<0.000000e+00> : vector<1x9x128xf32>
    %207 = tpu.matmul %206, %205, %cst_61 {dimension_numbers = #tpu.dot_dimension_numbers<[2], [1], [1], [2], [0, 0, 0, 1, 1, 2], [0], [0]>} : vector<1x9x9xbf16>, vector<1x9x128xbf16>, vector<1x9x128xf32> -> vector<1x9x128xf32>
    "tpu.trace_stop"() : () -> ()
    %208 = arith.addf %186, %207 : vector<1x9x128xf32>
    %209 = vector.shape_cast %208 : vector<1x9x128xf32> to vector<9x128xf32>
    %210 = arith.truncf %209 : vector<9x128xf32> to vector<9x128xbf16>
    %c0_62 = arith.constant 0 : index
    %c0_63 = arith.constant 0 : index
    %c0_64 = arith.constant 0 : index
    %211 = vector.load %arg9[%c0_62, %c0_63, %c0_64] : memref<2x128x128xbf16, #tpu.memory_space<vmem>>, vector<1x128x128xbf16>
    %212 = vector.shape_cast %211 : vector<1x128x128xbf16> to vector<128x128xbf16>
    %cst_65 = arith.constant dense<0.000000e+00> : vector<9x128xf32>
    %213 = tpu.matmul %210, %212, %cst_65 {dimension_numbers = #tpu.dot_dimension_numbers<[1], [0], [0], [1], [0, 0, 1, 1], [], []>} : vector<9x128xbf16>, vector<128x128xbf16>, vector<9x128xf32> -> vector<9x128xf32>
    %214 = arith.addf %78, %213 : vector<9x128xf32>
    %c0_66 = arith.constant 0 : index
    %c0_67 = arith.constant 0 : index
    %c0_68 = arith.constant 0 : index
    %215 = vector.load %arg10[%c0_66, %c0_67, %c0_68] : memref<2x1x128xf32, #tpu.memory_space<vmem>>, vector<1x1x128xf32>
    %216 = vector.shape_cast %215 : vector<1x1x128xf32> to vector<1x128xf32>
    %217 = vector.broadcast %216 : vector<1x128xf32> to vector<9x128xf32>
    %218 = arith.addf %214, %217 : vector<9x128xf32>
    %c0_69 = arith.constant 0 : index
    %c0_70 = arith.constant 0 : index
    %c0_71 = arith.constant 0 : index
    %219 = vector.load %arg11[%c0_69, %c0_70, %c0_71] : memref<2x1x128xf32, #tpu.memory_space<vmem>>, vector<1x1x128xf32>
    %220 = vector.shape_cast %219 : vector<1x1x128xf32> to vector<1x128xf32>
    %c0_72 = arith.constant 0 : index
    %c0_73 = arith.constant 0 : index
    %c0_74 = arith.constant 0 : index
    %221 = vector.load %arg12[%c0_72, %c0_73, %c0_74] : memref<2x1x128xf32, #tpu.memory_space<vmem>>, vector<1x1x128xf32>
    %222 = vector.shape_cast %221 : vector<1x1x128xf32> to vector<1x128xf32>
    %cst_75 = arith.constant dense<0.000000e+00> : vector<9xf32>
    %223 = vector.multi_reduction <add>, %218, %cst_75 [1] : vector<9x128xf32> to vector<9xf32>
    %224 = vector.shape_cast %223 : vector<9xf32> to vector<9x1xf32>
    %cst_76 = arith.constant 3.125000e-02 : f32
    %225 = vector.broadcast %cst_76 : f32 to vector<9x1xf32>
    %226 = arith.mulf %224, %225 : vector<9x1xf32>
    %227 = vector.broadcast %226 : vector<9x1xf32> to vector<9x128xf32>
    %228 = arith.subf %218, %227 : vector<9x128xf32>
    %229 = vector.broadcast %4 : vector<1x128xf32> to vector<9x128xf32>
    %230 = arith.mulf %228, %229 : vector<9x128xf32>
    %231 = arith.mulf %230, %230 : vector<9x128xf32>
    %cst_77 = arith.constant dense<0.000000e+00> : vector<9xf32>
    %232 = vector.multi_reduction <add>, %231, %cst_77 [1] : vector<9x128xf32> to vector<9xf32>
    %233 = vector.shape_cast %232 : vector<9xf32> to vector<9x1xf32>
    %cst_78 = arith.constant 3.125000e-02 : f32
    %234 = vector.broadcast %cst_78 : f32 to vector<9x1xf32>
    %235 = arith.mulf %233, %234 : vector<9x1xf32>
    %cst_79 = arith.constant 9.99999974E-6 : f32
    %236 = vector.broadcast %cst_79 : f32 to vector<9x1xf32>
    %237 = arith.addf %235, %236 : vector<9x1xf32>
    %238 = math.rsqrt %237 : vector<9x1xf32>
    %239 = vector.broadcast %238 : vector<9x1xf32> to vector<9x128xf32>
    %240 = arith.mulf %230, %239 : vector<9x128xf32>
    %241 = vector.broadcast %220 : vector<1x128xf32> to vector<9x128xf32>
    %242 = arith.mulf %240, %241 : vector<9x128xf32>
    %243 = vector.broadcast %222 : vector<1x128xf32> to vector<9x128xf32>
    %244 = arith.addf %242, %243 : vector<9x128xf32>
    %245 = arith.truncf %244 : vector<9x128xf32> to vector<9x128xbf16>
    %c0_80 = arith.constant 0 : index
    %c0_81 = arith.constant 0 : index
    %c0_82 = arith.constant 0 : index
    %246 = vector.load %arg13[%c0_80, %c0_81, %c0_82] : memref<2x128x128xbf16, #tpu.memory_space<vmem>>, vector<1x128x128xbf16>
    %247 = vector.shape_cast %246 : vector<1x128x128xbf16> to vector<128x128xbf16>
    %cst_83 = arith.constant dense<0.000000e+00> : vector<9x128xf32>
    %248 = tpu.matmul %245, %247, %cst_83 {dimension_numbers = #tpu.dot_dimension_numbers<[1], [0], [0], [1], [0, 0, 1, 1], [], []>} : vector<9x128xbf16>, vector<128x128xbf16>, vector<9x128xf32> -> vector<9x128xf32>
    %c0_84 = arith.constant 0 : index
    %c0_85 = arith.constant 0 : index
    %c0_86 = arith.constant 0 : index
    %249 = vector.load %arg14[%c0_84, %c0_85, %c0_86] : memref<2x1x128xf32, #tpu.memory_space<vmem>>, vector<1x1x128xf32>
    %250 = vector.shape_cast %249 : vector<1x1x128xf32> to vector<1x128xf32>
    %251 = vector.broadcast %250 : vector<1x128xf32> to vector<9x128xf32>
    %252 = arith.addf %248, %251 : vector<9x128xf32>
    %253 = arith.mulf %252, %252 : vector<9x128xf32>
    %254 = arith.mulf %252, %253 : vector<9x128xf32>
    %cst_87 = arith.constant 4.471500e-02 : f32
    %255 = vector.broadcast %cst_87 : f32 to vector<9x128xf32>
    %256 = arith.mulf %255, %254 : vector<9x128xf32>
    %257 = arith.addf %252, %256 : vector<9x128xf32>
    %cst_88 = arith.constant 0.797884583 : f32
    %258 = vector.broadcast %cst_88 : f32 to vector<9x128xf32>
    %259 = arith.mulf %258, %257 : vector<9x128xf32>
    %260 = math.tanh %259 : vector<9x128xf32>
    %cst_89 = arith.constant 1.000000e+00 : f32
    %261 = vector.broadcast %cst_89 : f32 to vector<9x128xf32>
    %262 = arith.addf %261, %260 : vector<9x128xf32>
    %cst_90 = arith.constant 5.000000e-01 : f32
    %263 = vector.broadcast %cst_90 : f32 to vector<9x128xf32>
    %264 = arith.mulf %263, %262 : vector<9x128xf32>
    %265 = arith.mulf %252, %264 : vector<9x128xf32>
    %266 = arith.truncf %265 : vector<9x128xf32> to vector<9x128xbf16>
    %c0_91 = arith.constant 0 : index
    %c0_92 = arith.constant 0 : index
    %c0_93 = arith.constant 0 : index
    %267 = vector.load %arg15[%c0_91, %c0_92, %c0_93] : memref<2x128x128xbf16, #tpu.memory_space<vmem>>, vector<1x128x128xbf16>
    %268 = vector.shape_cast %267 : vector<1x128x128xbf16> to vector<128x128xbf16>
    %cst_94 = arith.constant dense<0.000000e+00> : vector<9x128xf32>
    %269 = tpu.matmul %266, %268, %cst_94 {dimension_numbers = #tpu.dot_dimension_numbers<[1], [0], [0], [1], [0, 0, 1, 1], [], []>} : vector<9x128xbf16>, vector<128x128xbf16>, vector<9x128xf32> -> vector<9x128xf32>
    %c0_95 = arith.constant 0 : index
    %c0_96 = arith.constant 0 : index
    %c0_97 = arith.constant 0 : index
    %270 = vector.load %arg16[%c0_95, %c0_96, %c0_97] : memref<2x1x128xf32, #tpu.memory_space<vmem>>, vector<1x1x128xf32>
    %271 = vector.shape_cast %270 : vector<1x1x128xf32> to vector<1x128xf32>
    %272 = vector.broadcast %271 : vector<1x128xf32> to vector<9x128xf32>
    %273 = arith.addf %269, %272 : vector<9x128xf32>
    %274 = arith.addf %218, %273 : vector<9x128xf32>
    %c1_98 = arith.constant 1 : index
    %c0_99 = arith.constant 0 : index
    %c0_100 = arith.constant 0 : index
    %275 = vector.load %arg5[%c1_98, %c0_99, %c0_100] : memref<2x1x128xf32, #tpu.memory_space<vmem>>, vector<1x1x128xf32>
    %276 = vector.shape_cast %275 : vector<1x1x128xf32> to vector<1x128xf32>
    %c1_101 = arith.constant 1 : index
    %c0_102 = arith.constant 0 : index
    %c0_103 = arith.constant 0 : index
    %277 = vector.load %arg6[%c1_101, %c0_102, %c0_103] : memref<2x1x128xf32, #tpu.memory_space<vmem>>, vector<1x1x128xf32>
    %278 = vector.shape_cast %277 : vector<1x1x128xf32> to vector<1x128xf32>
    %cst_104 = arith.constant dense<0.000000e+00> : vector<9xf32>
    %279 = vector.multi_reduction <add>, %274, %cst_104 [1] : vector<9x128xf32> to vector<9xf32>
    %280 = vector.shape_cast %279 : vector<9xf32> to vector<9x1xf32>
    %cst_105 = arith.constant 3.125000e-02 : f32
    %281 = vector.broadcast %cst_105 : f32 to vector<9x1xf32>
    %282 = arith.mulf %280, %281 : vector<9x1xf32>
    %283 = vector.broadcast %282 : vector<9x1xf32> to vector<9x128xf32>
    %284 = arith.subf %274, %283 : vector<9x128xf32>
    %285 = vector.broadcast %4 : vector<1x128xf32> to vector<9x128xf32>
    %286 = arith.mulf %284, %285 : vector<9x128xf32>
    %287 = arith.mulf %286, %286 : vector<9x128xf32>
    %cst_106 = arith.constant dense<0.000000e+00> : vector<9xf32>
    %288 = vector.multi_reduction <add>, %287, %cst_106 [1] : vector<9x128xf32> to vector<9xf32>
    %289 = vector.shape_cast %288 : vector<9xf32> to vector<9x1xf32>
    %cst_107 = arith.constant 3.125000e-02 : f32
    %290 = vector.broadcast %cst_107 : f32 to vector<9x1xf32>
    %291 = arith.mulf %289, %290 : vector<9x1xf32>
    %cst_108 = arith.constant 9.99999974E-6 : f32
    %292 = vector.broadcast %cst_108 : f32 to vector<9x1xf32>
    %293 = arith.addf %291, %292 : vector<9x1xf32>
    %294 = math.rsqrt %293 : vector<9x1xf32>
    %295 = vector.broadcast %294 : vector<9x1xf32> to vector<9x128xf32>
    %296 = arith.mulf %286, %295 : vector<9x128xf32>
    %297 = vector.broadcast %276 : vector<1x128xf32> to vector<9x128xf32>
    %298 = arith.mulf %296, %297 : vector<9x128xf32>
    %299 = vector.broadcast %278 : vector<1x128xf32> to vector<9x128xf32>
    %300 = arith.addf %298, %299 : vector<9x128xf32>
    %301 = arith.truncf %300 : vector<9x128xf32> to vector<9x128xbf16>
    %c1_109 = arith.constant 1 : index
    %c0_110 = arith.constant 0 : index
    %c0_111 = arith.constant 0 : index
    %302 = vector.load %arg7[%c1_109, %c0_110, %c0_111] : memref<2x128x384xbf16, #tpu.memory_space<vmem>>, vector<1x128x384xbf16>
    %303 = vector.shape_cast %302 : vector<1x128x384xbf16> to vector<128x384xbf16>
    %cst_112 = arith.constant dense<0.000000e+00> : vector<9x384xf32>
    %304 = tpu.matmul %301, %303, %cst_112 {dimension_numbers = #tpu.dot_dimension_numbers<[1], [0], [0], [1], [0, 0, 1, 1], [], []>} : vector<9x128xbf16>, vector<128x384xbf16>, vector<9x384xf32> -> vector<9x384xf32>
    %c1_113 = arith.constant 1 : index
    %c0_114 = arith.constant 0 : index
    %c0_115 = arith.constant 0 : index
    %305 = vector.load %arg8[%c1_113, %c0_114, %c0_115] : memref<2x1x384xf32, #tpu.memory_space<vmem>>, vector<1x1x384xf32>
    %306 = vector.shape_cast %305 : vector<1x1x384xf32> to vector<1x384xf32>
    %307 = vector.broadcast %306 : vector<1x384xf32> to vector<9x384xf32>
    %308 = arith.addf %304, %307 : vector<9x384xf32>
    %309 = vector.extract_strided_slice %308 {offsets = [0, 0], sizes = [9, 128], strides = [1, 1]} : vector<9x384xf32> to vector<9x128xf32>
    %310 = vector.shape_cast %309 : vector<9x128xf32> to vector<1x9x128xf32>
    %311 = vector.extract_strided_slice %308 {offsets = [0, 128], sizes = [9, 128], strides = [1, 1]} : vector<9x384xf32> to vector<9x128xf32>
    %312 = vector.shape_cast %311 : vector<9x128xf32> to vector<1x9x128xf32>
    %313 = vector.extract_strided_slice %308 {offsets = [0, 256], sizes = [9, 128], strides = [1, 1]} : vector<9x384xf32> to vector<9x128xf32>
    %314 = vector.shape_cast %313 : vector<9x128xf32> to vector<1x9x128xf32>
    %315 = arith.truncf %310 : vector<1x9x128xf32> to vector<1x9x128xbf16>
    %cst_116 = arith.constant 0.000000e+00 : f32
    %316 = vector.broadcast %cst_116 : f32 to vector<1x9x128xf32>
    %317 = vector.broadcast %12 : vector<1x1x128xf32> to vector<1x9x128xf32>
    %318 = arith.mulf %312, %317 : vector<1x9x128xf32>
    %319 = arith.truncf %318 : vector<1x9x128xf32> to vector<1x9x128xbf16>
    "tpu.trace_start"() <{level = 10 : i32, message = "bqd,bkd->bqk"}> : () -> ()
    %cst_117 = arith.constant dense<0.000000e+00> : vector<1x9x9xf32>
    %320 = tpu.matmul %315, %319, %cst_117 {dimension_numbers = #tpu.dot_dimension_numbers<[2], [2], [1], [1], [0, 0, 0, 1, 1, 1], [0], [0]>} : vector<1x9x128xbf16>, vector<1x9x128xbf16>, vector<1x9x9xf32> -> vector<1x9x9xf32>
    "tpu.trace_stop"() : () -> ()
    %cst_118 = arith.constant 0.353553385 : f32
    %321 = vector.broadcast %cst_118 : f32 to vector<1x9x9xf32>
    %322 = arith.mulf %320, %321 : vector<1x9x9xf32>
    %cst_119 = arith.constant dense<0xFF800000> : vector<1x9xf32>
    %323 = vector.multi_reduction <maximumf>, %322, %cst_119 [2] : vector<1x9x9xf32> to vector<1x9xf32>
    %324 = vector.shape_cast %323 : vector<1x9xf32> to vector<1x9x1xf32>
    %325 = vector.broadcast %324 : vector<1x9x1xf32> to vector<1x9x9xf32>
    %326 = arith.subf %322, %325 : vector<1x9x9xf32>
    %327 = math.exp %326 : vector<1x9x9xf32>
    %cst_120 = arith.constant dense<0.000000e+00> : vector<1x9xf32>
    %328 = vector.multi_reduction <add>, %327, %cst_120 [2] : vector<1x9x9xf32> to vector<1x9xf32>
    %329 = vector.shape_cast %328 : vector<1x9xf32> to vector<1x9x1xf32>
    %330 = tpu.reciprocal %329 {approx = true} : vector<1x9x1xf32> -> vector<1x9x1xf32>
    %331 = vector.broadcast %330 : vector<1x9x1xf32> to vector<1x9x9xf32>
    %332 = arith.mulf %327, %331 : vector<1x9x9xf32>
    %333 = vector.broadcast %12 : vector<1x1x128xf32> to vector<1x9x128xf32>
    %334 = arith.mulf %314, %333 : vector<1x9x128xf32>
    %335 = arith.truncf %334 : vector<1x9x128xf32> to vector<1x9x128xbf16>
    %336 = arith.truncf %332 : vector<1x9x9xf32> to vector<1x9x9xbf16>
    "tpu.trace_start"() <{level = 10 : i32, message = "bqk,bkd->bqd"}> : () -> ()
    %cst_121 = arith.constant dense<0.000000e+00> : vector<1x9x128xf32>
    %337 = tpu.matmul %336, %335, %cst_121 {dimension_numbers = #tpu.dot_dimension_numbers<[2], [1], [1], [2], [0, 0, 0, 1, 1, 2], [0], [0]>} : vector<1x9x9xbf16>, vector<1x9x128xbf16>, vector<1x9x128xf32> -> vector<1x9x128xf32>
    "tpu.trace_stop"() : () -> ()
    %338 = arith.addf %316, %337 : vector<1x9x128xf32>
    %339 = vector.broadcast %19 : vector<1x1x128xf32> to vector<1x9x128xf32>
    %340 = arith.mulf %312, %339 : vector<1x9x128xf32>
    %341 = arith.truncf %340 : vector<1x9x128xf32> to vector<1x9x128xbf16>
    "tpu.trace_start"() <{level = 10 : i32, message = "bqd,bkd->bqk"}> : () -> ()
    %cst_122 = arith.constant dense<0.000000e+00> : vector<1x9x9xf32>
    %342 = tpu.matmul %315, %341, %cst_122 {dimension_numbers = #tpu.dot_dimension_numbers<[2], [2], [1], [1], [0, 0, 0, 1, 1, 1], [0], [0]>} : vector<1x9x128xbf16>, vector<1x9x128xbf16>, vector<1x9x9xf32> -> vector<1x9x9xf32>
    "tpu.trace_stop"() : () -> ()
    %cst_123 = arith.constant 0.353553385 : f32
    %343 = vector.broadcast %cst_123 : f32 to vector<1x9x9xf32>
    %344 = arith.mulf %342, %343 : vector<1x9x9xf32>
    %cst_124 = arith.constant dense<0xFF800000> : vector<1x9xf32>
    %345 = vector.multi_reduction <maximumf>, %344, %cst_124 [2] : vector<1x9x9xf32> to vector<1x9xf32>
    %346 = vector.shape_cast %345 : vector<1x9xf32> to vector<1x9x1xf32>
    %347 = vector.broadcast %346 : vector<1x9x1xf32> to vector<1x9x9xf32>
    %348 = arith.subf %344, %347 : vector<1x9x9xf32>
    %349 = math.exp %348 : vector<1x9x9xf32>
    %cst_125 = arith.constant dense<0.000000e+00> : vector<1x9xf32>
    %350 = vector.multi_reduction <add>, %349, %cst_125 [2] : vector<1x9x9xf32> to vector<1x9xf32>
    %351 = vector.shape_cast %350 : vector<1x9xf32> to vector<1x9x1xf32>
    %352 = tpu.reciprocal %351 {approx = true} : vector<1x9x1xf32> -> vector<1x9x1xf32>
    %353 = vector.broadcast %352 : vector<1x9x1xf32> to vector<1x9x9xf32>
    %354 = arith.mulf %349, %353 : vector<1x9x9xf32>
    %355 = vector.broadcast %19 : vector<1x1x128xf32> to vector<1x9x128xf32>
    %356 = arith.mulf %314, %355 : vector<1x9x128xf32>
    %357 = arith.truncf %356 : vector<1x9x128xf32> to vector<1x9x128xbf16>
    %358 = arith.truncf %354 : vector<1x9x9xf32> to vector<1x9x9xbf16>
    "tpu.trace_start"() <{level = 10 : i32, message = "bqk,bkd->bqd"}> : () -> ()
    %cst_126 = arith.constant dense<0.000000e+00> : vector<1x9x128xf32>
    %359 = tpu.matmul %358, %357, %cst_126 {dimension_numbers = #tpu.dot_dimension_numbers<[2], [1], [1], [2], [0, 0, 0, 1, 1, 2], [0], [0]>} : vector<1x9x9xbf16>, vector<1x9x128xbf16>, vector<1x9x128xf32> -> vector<1x9x128xf32>
    "tpu.trace_stop"() : () -> ()
    %360 = arith.addf %338, %359 : vector<1x9x128xf32>
    %361 = vector.broadcast %26 : vector<1x1x128xf32> to vector<1x9x128xf32>
    %362 = arith.mulf %312, %361 : vector<1x9x128xf32>
    %363 = arith.truncf %362 : vector<1x9x128xf32> to vector<1x9x128xbf16>
    "tpu.trace_start"() <{level = 10 : i32, message = "bqd,bkd->bqk"}> : () -> ()
    %cst_127 = arith.constant dense<0.000000e+00> : vector<1x9x9xf32>
    %364 = tpu.matmul %315, %363, %cst_127 {dimension_numbers = #tpu.dot_dimension_numbers<[2], [2], [1], [1], [0, 0, 0, 1, 1, 1], [0], [0]>} : vector<1x9x128xbf16>, vector<1x9x128xbf16>, vector<1x9x9xf32> -> vector<1x9x9xf32>
    "tpu.trace_stop"() : () -> ()
    %cst_128 = arith.constant 0.353553385 : f32
    %365 = vector.broadcast %cst_128 : f32 to vector<1x9x9xf32>
    %366 = arith.mulf %364, %365 : vector<1x9x9xf32>
    %cst_129 = arith.constant dense<0xFF800000> : vector<1x9xf32>
    %367 = vector.multi_reduction <maximumf>, %366, %cst_129 [2] : vector<1x9x9xf32> to vector<1x9xf32>
    %368 = vector.shape_cast %367 : vector<1x9xf32> to vector<1x9x1xf32>
    %369 = vector.broadcast %368 : vector<1x9x1xf32> to vector<1x9x9xf32>
    %370 = arith.subf %366, %369 : vector<1x9x9xf32>
    %371 = math.exp %370 : vector<1x9x9xf32>
    %cst_130 = arith.constant dense<0.000000e+00> : vector<1x9xf32>
    %372 = vector.multi_reduction <add>, %371, %cst_130 [2] : vector<1x9x9xf32> to vector<1x9xf32>
    %373 = vector.shape_cast %372 : vector<1x9xf32> to vector<1x9x1xf32>
    %374 = tpu.reciprocal %373 {approx = true} : vector<1x9x1xf32> -> vector<1x9x1xf32>
    %375 = vector.broadcast %374 : vector<1x9x1xf32> to vector<1x9x9xf32>
    %376 = arith.mulf %371, %375 : vector<1x9x9xf32>
    %377 = vector.broadcast %26 : vector<1x1x128xf32> to vector<1x9x128xf32>
    %378 = arith.mulf %314, %377 : vector<1x9x128xf32>
    %379 = arith.truncf %378 : vector<1x9x128xf32> to vector<1x9x128xbf16>
    %380 = arith.truncf %376 : vector<1x9x9xf32> to vector<1x9x9xbf16>
    "tpu.trace_start"() <{level = 10 : i32, message = "bqk,bkd->bqd"}> : () -> ()
    %cst_131 = arith.constant dense<0.000000e+00> : vector<1x9x128xf32>
    %381 = tpu.matmul %380, %379, %cst_131 {dimension_numbers = #tpu.dot_dimension_numbers<[2], [1], [1], [2], [0, 0, 0, 1, 1, 2], [0], [0]>} : vector<1x9x9xbf16>, vector<1x9x128xbf16>, vector<1x9x128xf32> -> vector<1x9x128xf32>
    "tpu.trace_stop"() : () -> ()
    %382 = arith.addf %360, %381 : vector<1x9x128xf32>
    %383 = vector.broadcast %33 : vector<1x1x128xf32> to vector<1x9x128xf32>
    %384 = arith.mulf %312, %383 : vector<1x9x128xf32>
    %385 = arith.truncf %384 : vector<1x9x128xf32> to vector<1x9x128xbf16>
    "tpu.trace_start"() <{level = 10 : i32, message = "bqd,bkd->bqk"}> : () -> ()
    %cst_132 = arith.constant dense<0.000000e+00> : vector<1x9x9xf32>
    %386 = tpu.matmul %315, %385, %cst_132 {dimension_numbers = #tpu.dot_dimension_numbers<[2], [2], [1], [1], [0, 0, 0, 1, 1, 1], [0], [0]>} : vector<1x9x128xbf16>, vector<1x9x128xbf16>, vector<1x9x9xf32> -> vector<1x9x9xf32>
    "tpu.trace_stop"() : () -> ()
    %cst_133 = arith.constant 0.353553385 : f32
    %387 = vector.broadcast %cst_133 : f32 to vector<1x9x9xf32>
    %388 = arith.mulf %386, %387 : vector<1x9x9xf32>
    %cst_134 = arith.constant dense<0xFF800000> : vector<1x9xf32>
    %389 = vector.multi_reduction <maximumf>, %388, %cst_134 [2] : vector<1x9x9xf32> to vector<1x9xf32>
    %390 = vector.shape_cast %389 : vector<1x9xf32> to vector<1x9x1xf32>
    %391 = vector.broadcast %390 : vector<1x9x1xf32> to vector<1x9x9xf32>
    %392 = arith.subf %388, %391 : vector<1x9x9xf32>
    %393 = math.exp %392 : vector<1x9x9xf32>
    %cst_135 = arith.constant dense<0.000000e+00> : vector<1x9xf32>
    %394 = vector.multi_reduction <add>, %393, %cst_135 [2] : vector<1x9x9xf32> to vector<1x9xf32>
    %395 = vector.shape_cast %394 : vector<1x9xf32> to vector<1x9x1xf32>
    %396 = tpu.reciprocal %395 {approx = true} : vector<1x9x1xf32> -> vector<1x9x1xf32>
    %397 = vector.broadcast %396 : vector<1x9x1xf32> to vector<1x9x9xf32>
    %398 = arith.mulf %393, %397 : vector<1x9x9xf32>
    %399 = vector.broadcast %33 : vector<1x1x128xf32> to vector<1x9x128xf32>
    %400 = arith.mulf %314, %399 : vector<1x9x128xf32>
    %401 = arith.truncf %400 : vector<1x9x128xf32> to vector<1x9x128xbf16>
    %402 = arith.truncf %398 : vector<1x9x9xf32> to vector<1x9x9xbf16>
    "tpu.trace_start"() <{level = 10 : i32, message = "bqk,bkd->bqd"}> : () -> ()
    %cst_136 = arith.constant dense<0.000000e+00> : vector<1x9x128xf32>
    %403 = tpu.matmul %402, %401, %cst_136 {dimension_numbers = #tpu.dot_dimension_numbers<[2], [1], [1], [2], [0, 0, 0, 1, 1, 2], [0], [0]>} : vector<1x9x9xbf16>, vector<1x9x128xbf16>, vector<1x9x128xf32> -> vector<1x9x128xf32>
    "tpu.trace_stop"() : () -> ()
    %404 = arith.addf %382, %403 : vector<1x9x128xf32>
    %405 = vector.shape_cast %404 : vector<1x9x128xf32> to vector<9x128xf32>
    %406 = arith.truncf %405 : vector<9x128xf32> to vector<9x128xbf16>
    %c1_137 = arith.constant 1 : index
    %c0_138 = arith.constant 0 : index
    %c0_139 = arith.constant 0 : index
    %407 = vector.load %arg9[%c1_137, %c0_138, %c0_139] : memref<2x128x128xbf16, #tpu.memory_space<vmem>>, vector<1x128x128xbf16>
    %408 = vector.shape_cast %407 : vector<1x128x128xbf16> to vector<128x128xbf16>
    %cst_140 = arith.constant dense<0.000000e+00> : vector<9x128xf32>
    %409 = tpu.matmul %406, %408, %cst_140 {dimension_numbers = #tpu.dot_dimension_numbers<[1], [0], [0], [1], [0, 0, 1, 1], [], []>} : vector<9x128xbf16>, vector<128x128xbf16>, vector<9x128xf32> -> vector<9x128xf32>
    %410 = arith.addf %274, %409 : vector<9x128xf32>
    %c1_141 = arith.constant 1 : index
    %c0_142 = arith.constant 0 : index
    %c0_143 = arith.constant 0 : index
    %411 = vector.load %arg10[%c1_141, %c0_142, %c0_143] : memref<2x1x128xf32, #tpu.memory_space<vmem>>, vector<1x1x128xf32>
    %412 = vector.shape_cast %411 : vector<1x1x128xf32> to vector<1x128xf32>
    %413 = vector.broadcast %412 : vector<1x128xf32> to vector<9x128xf32>
    %414 = arith.addf %410, %413 : vector<9x128xf32>
    %c1_144 = arith.constant 1 : index
    %c0_145 = arith.constant 0 : index
    %c0_146 = arith.constant 0 : index
    %415 = vector.load %arg11[%c1_144, %c0_145, %c0_146] : memref<2x1x128xf32, #tpu.memory_space<vmem>>, vector<1x1x128xf32>
    %416 = vector.shape_cast %415 : vector<1x1x128xf32> to vector<1x128xf32>
    %c1_147 = arith.constant 1 : index
    %c0_148 = arith.constant 0 : index
    %c0_149 = arith.constant 0 : index
    %417 = vector.load %arg12[%c1_147, %c0_148, %c0_149] : memref<2x1x128xf32, #tpu.memory_space<vmem>>, vector<1x1x128xf32>
    %418 = vector.shape_cast %417 : vector<1x1x128xf32> to vector<1x128xf32>
    %cst_150 = arith.constant dense<0.000000e+00> : vector<9xf32>
    %419 = vector.multi_reduction <add>, %414, %cst_150 [1] : vector<9x128xf32> to vector<9xf32>
    %420 = vector.shape_cast %419 : vector<9xf32> to vector<9x1xf32>
    %cst_151 = arith.constant 3.125000e-02 : f32
    %421 = vector.broadcast %cst_151 : f32 to vector<9x1xf32>
    %422 = arith.mulf %420, %421 : vector<9x1xf32>
    %423 = vector.broadcast %422 : vector<9x1xf32> to vector<9x128xf32>
    %424 = arith.subf %414, %423 : vector<9x128xf32>
    %425 = vector.broadcast %4 : vector<1x128xf32> to vector<9x128xf32>
    %426 = arith.mulf %424, %425 : vector<9x128xf32>
    %427 = arith.mulf %426, %426 : vector<9x128xf32>
    %cst_152 = arith.constant dense<0.000000e+00> : vector<9xf32>
    %428 = vector.multi_reduction <add>, %427, %cst_152 [1] : vector<9x128xf32> to vector<9xf32>
    %429 = vector.shape_cast %428 : vector<9xf32> to vector<9x1xf32>
    %cst_153 = arith.constant 3.125000e-02 : f32
    %430 = vector.broadcast %cst_153 : f32 to vector<9x1xf32>
    %431 = arith.mulf %429, %430 : vector<9x1xf32>
    %cst_154 = arith.constant 9.99999974E-6 : f32
    %432 = vector.broadcast %cst_154 : f32 to vector<9x1xf32>
    %433 = arith.addf %431, %432 : vector<9x1xf32>
    %434 = math.rsqrt %433 : vector<9x1xf32>
    %435 = vector.broadcast %434 : vector<9x1xf32> to vector<9x128xf32>
    %436 = arith.mulf %426, %435 : vector<9x128xf32>
    %437 = vector.broadcast %416 : vector<1x128xf32> to vector<9x128xf32>
    %438 = arith.mulf %436, %437 : vector<9x128xf32>
    %439 = vector.broadcast %418 : vector<1x128xf32> to vector<9x128xf32>
    %440 = arith.addf %438, %439 : vector<9x128xf32>
    %441 = arith.truncf %440 : vector<9x128xf32> to vector<9x128xbf16>
    %c1_155 = arith.constant 1 : index
    %c0_156 = arith.constant 0 : index
    %c0_157 = arith.constant 0 : index
    %442 = vector.load %arg13[%c1_155, %c0_156, %c0_157] : memref<2x128x128xbf16, #tpu.memory_space<vmem>>, vector<1x128x128xbf16>
    %443 = vector.shape_cast %442 : vector<1x128x128xbf16> to vector<128x128xbf16>
    %cst_158 = arith.constant dense<0.000000e+00> : vector<9x128xf32>
    %444 = tpu.matmul %441, %443, %cst_158 {dimension_numbers = #tpu.dot_dimension_numbers<[1], [0], [0], [1], [0, 0, 1, 1], [], []>} : vector<9x128xbf16>, vector<128x128xbf16>, vector<9x128xf32> -> vector<9x128xf32>
    %c1_159 = arith.constant 1 : index
    %c0_160 = arith.constant 0 : index
    %c0_161 = arith.constant 0 : index
    %445 = vector.load %arg14[%c1_159, %c0_160, %c0_161] : memref<2x1x128xf32, #tpu.memory_space<vmem>>, vector<1x1x128xf32>
    %446 = vector.shape_cast %445 : vector<1x1x128xf32> to vector<1x128xf32>
    %447 = vector.broadcast %446 : vector<1x128xf32> to vector<9x128xf32>
    %448 = arith.addf %444, %447 : vector<9x128xf32>
    %449 = arith.mulf %448, %448 : vector<9x128xf32>
    %450 = arith.mulf %448, %449 : vector<9x128xf32>
    %cst_162 = arith.constant 4.471500e-02 : f32
    %451 = vector.broadcast %cst_162 : f32 to vector<9x128xf32>
    %452 = arith.mulf %451, %450 : vector<9x128xf32>
    %453 = arith.addf %448, %452 : vector<9x128xf32>
    %cst_163 = arith.constant 0.797884583 : f32
    %454 = vector.broadcast %cst_163 : f32 to vector<9x128xf32>
    %455 = arith.mulf %454, %453 : vector<9x128xf32>
    %456 = math.tanh %455 : vector<9x128xf32>
    %cst_164 = arith.constant 1.000000e+00 : f32
    %457 = vector.broadcast %cst_164 : f32 to vector<9x128xf32>
    %458 = arith.addf %457, %456 : vector<9x128xf32>
    %cst_165 = arith.constant 5.000000e-01 : f32
    %459 = vector.broadcast %cst_165 : f32 to vector<9x128xf32>
    %460 = arith.mulf %459, %458 : vector<9x128xf32>
    %461 = arith.mulf %448, %460 : vector<9x128xf32>
    %462 = arith.truncf %461 : vector<9x128xf32> to vector<9x128xbf16>
    %c1_166 = arith.constant 1 : index
    %c0_167 = arith.constant 0 : index
    %c0_168 = arith.constant 0 : index
    %463 = vector.load %arg15[%c1_166, %c0_167, %c0_168] : memref<2x128x128xbf16, #tpu.memory_space<vmem>>, vector<1x128x128xbf16>
    %464 = vector.shape_cast %463 : vector<1x128x128xbf16> to vector<128x128xbf16>
    %cst_169 = arith.constant dense<0.000000e+00> : vector<9x128xf32>
    %465 = tpu.matmul %462, %464, %cst_169 {dimension_numbers = #tpu.dot_dimension_numbers<[1], [0], [0], [1], [0, 0, 1, 1], [], []>} : vector<9x128xbf16>, vector<128x128xbf16>, vector<9x128xf32> -> vector<9x128xf32>
    %c1_170 = arith.constant 1 : index
    %c0_171 = arith.constant 0 : index
    %c0_172 = arith.constant 0 : index
    %466 = vector.load %arg16[%c1_170, %c0_171, %c0_172] : memref<2x1x128xf32, #tpu.memory_space<vmem>>, vector<1x1x128xf32>
    %467 = vector.shape_cast %466 : vector<1x1x128xf32> to vector<1x128xf32>
    %468 = vector.broadcast %467 : vector<1x128xf32> to vector<9x128xf32>
    %469 = arith.addf %465, %468 : vector<9x128xf32>
    %470 = arith.addf %414, %469 : vector<9x128xf32>
    %471 = vector.extract_strided_slice %470 {offsets = [0, 0], sizes = [1, 128], strides = [1, 1]} : vector<9x128xf32> to vector<1x128xf32>
    %c0_173 = arith.constant 0 : index
    %c0_174 = arith.constant 0 : index
    %472 = vector.load %arg17[%c0_173, %c0_174] : memref<1x128xf32, #tpu.memory_space<vmem>>, vector<1x128xf32>
    %c0_175 = arith.constant 0 : index
    %c0_176 = arith.constant 0 : index
    %473 = vector.load %arg18[%c0_175, %c0_176] : memref<1x128xf32, #tpu.memory_space<vmem>>, vector<1x128xf32>
    %cst_177 = arith.constant dense<0.000000e+00> : vector<1xf32>
    %474 = vector.multi_reduction <add>, %471, %cst_177 [1] : vector<1x128xf32> to vector<1xf32>
    %475 = vector.shape_cast %474 : vector<1xf32> to vector<1x1xf32>
    %cst_178 = arith.constant 3.125000e-02 : f32
    %476 = vector.broadcast %cst_178 : f32 to vector<1x1xf32>
    %477 = arith.mulf %475, %476 : vector<1x1xf32>
    %478 = vector.broadcast %477 : vector<1x1xf32> to vector<1x128xf32>
    %479 = arith.subf %471, %478 : vector<1x128xf32>
    %480 = arith.mulf %479, %4 : vector<1x128xf32>
    %481 = arith.mulf %480, %480 : vector<1x128xf32>
    %cst_179 = arith.constant dense<0.000000e+00> : vector<1xf32>
    %482 = vector.multi_reduction <add>, %481, %cst_179 [1] : vector<1x128xf32> to vector<1xf32>
    %483 = vector.shape_cast %482 : vector<1xf32> to vector<1x1xf32>
    %cst_180 = arith.constant 3.125000e-02 : f32
    %484 = vector.broadcast %cst_180 : f32 to vector<1x1xf32>
    %485 = arith.mulf %483, %484 : vector<1x1xf32>
    %cst_181 = arith.constant 9.99999974E-6 : f32
    %486 = vector.broadcast %cst_181 : f32 to vector<1x1xf32>
    %487 = arith.addf %485, %486 : vector<1x1xf32>
    %488 = math.rsqrt %487 : vector<1x1xf32>
    %489 = vector.broadcast %488 : vector<1x1xf32> to vector<1x128xf32>
    %490 = arith.mulf %480, %489 : vector<1x128xf32>
    %491 = arith.mulf %490, %472 : vector<1x128xf32>
    %492 = arith.addf %491, %473 : vector<1x128xf32>
    %493 = vector.shape_cast %492 : vector<1x128xf32> to vector<1x1x128xf32>
    %c0_182 = arith.constant 0 : index
    %c0_183 = arith.constant 0 : index
    %c0_184 = arith.constant 0 : index
    %494 = vector.load %arg19[%c0_182, %c0_183, %c0_184] : memref<1x1x128xf32, #tpu.memory_space<vmem>>, vector<1x1x128xf32>
    tpu.vector_store %arg19[%c0_182, %c0_183, %c0_184], %493 {strides = array<i32>} : memref<1x1x128xf32, #tpu.memory_space<vmem>>, vector<1x1x128xf32>,
    return
  }
  func.func @transform_0(%arg0: i32, %arg1: memref<2x8xi32, #tpu.memory_space<smem>>) -> (i32, i32) {
    %c0_i32 = arith.constant 0 : i32
    %c0_i32_0 = arith.constant 0 : i32
    %c0_i32_1 = arith.constant 0 : i32
    return %c0_i32, %c0_i32_0 : i32, i32
  }
  func.func @transform_1(%arg0: i32, %arg1: memref<2x8xi32, #tpu.memory_space<smem>>) -> (i32, i32) {
    %c0_i32 = arith.constant 0 : i32
    %c0_i32_0 = arith.constant 0 : i32
    %c0_i32_1 = arith.constant 0 : i32
    return %c0_i32, %c0_i32_0 : i32, i32
  }
  func.func @transform_2(%arg0: i32, %arg1: memref<2x8xi32, #tpu.memory_space<smem>>) -> (i32, i32) {
    %c0_i32 = arith.constant 0 : i32
    %c0_i32_0 = arith.constant 0 : i32
    %c0_i32_1 = arith.constant 0 : i32
    return %c0_i32, %c0_i32_0 : i32, i32
  }
  func.func @transform_3(%arg0: i32, %arg1: memref<2x8xi32, #tpu.memory_space<smem>>) -> (i32, i32, i32) {
    %c0_i32 = arith.constant 0 : i32
    %c0_i32_0 = arith.constant 0 : i32
    %c0_i32_1 = arith.constant 0 : i32
    %c0_i32_2 = arith.constant 0 : i32
    return %c0_i32, %c0_i32_0, %c0_i32_1 : i32, i32, i32
  }
  func.func @transform_4(%arg0: i32, %arg1: memref<2x8xi32, #tpu.memory_space<smem>>) -> (i32, i32, i32) {
    %c0_i32 = arith.constant 0 : i32
    %c0_i32_0 = arith.constant 0 : i32
    %c0_i32_1 = arith.constant 0 : i32
    %c0_i32_2 = arith.constant 0 : i32
    return %c0_i32, %c0_i32_0, %c0_i32_1 : i32, i32, i32
  }
  func.func @transform_5(%arg0: i32, %arg1: memref<2x8xi32, #tpu.memory_space<smem>>) -> (i32, i32, i32) {
    %c0_i32 = arith.constant 0 : i32
    %c0_i32_0 = arith.constant 0 : i32
    %c0_i32_1 = arith.constant 0 : i32
    %c0_i32_2 = arith.constant 0 : i32
    return %c0_i32, %c0_i32_0, %c0_i32_1 : i32, i32, i32
  }
  func.func @transform_6(%arg0: i32, %arg1: memref<2x8xi32, #tpu.memory_space<smem>>) -> (i32, i32, i32) {
    %c0_i32 = arith.constant 0 : i32
    %c0_i32_0 = arith.constant 0 : i32
    %c0_i32_1 = arith.constant 0 : i32
    %c0_i32_2 = arith.constant 0 : i32
    return %c0_i32, %c0_i32_0, %c0_i32_1 : i32, i32, i32
  }
  func.func @transform_7(%arg0: i32, %arg1: memref<2x8xi32, #tpu.memory_space<smem>>) -> (i32, i32, i32) {
    %c0_i32 = arith.constant 0 : i32
    %c0_i32_0 = arith.constant 0 : i32
    %c0_i32_1 = arith.constant 0 : i32
    %c0_i32_2 = arith.constant 0 : i32
    return %c0_i32, %c0_i32_0, %c0_i32_1 : i32, i32, i32
  }
  func.func @transform_8(%arg0: i32, %arg1: memref<2x8xi32, #tpu.memory_space<smem>>) -> (i32, i32, i32) {
    %c0_i32 = arith.constant 0 : i32
    %c0_i32_0 = arith.constant 0 : i32
    %c0_i32_1 = arith.constant 0 : i32
    %c0_i32_2 = arith.constant 0 : i32
    return %c0_i32, %c0_i32_0, %c0_i32_1 : i32, i32, i32
  }
  func.func @transform_9(%arg0: i32, %arg1: memref<2x8xi32, #tpu.memory_space<smem>>) -> (i32, i32, i32) {
    %c0_i32 = arith.constant 0 : i32
    %c0_i32_0 = arith.constant 0 : i32
    %c0_i32_1 = arith.constant 0 : i32
    %c0_i32_2 = arith.constant 0 : i32
    return %c0_i32, %c0_i32_0, %c0_i32_1 : i32, i32, i32
  }
  func.func @transform_10(%arg0: i32, %arg1: memref<2x8xi32, #tpu.memory_space<smem>>) -> (i32, i32, i32) {
    %c0_i32 = arith.constant 0 : i32
    %c0_i32_0 = arith.constant 0 : i32
    %c0_i32_1 = arith.constant 0 : i32
    %c0_i32_2 = arith.constant 0 : i32
    return %c0_i32, %c0_i32_0, %c0_i32_1 : i32, i32, i32
  }
  func.func @transform_11(%arg0: i32, %arg1: memref<2x8xi32, #tpu.memory_space<smem>>) -> (i32, i32, i32) {
    %c0_i32 = arith.constant 0 : i32
    %c0_i32_0 = arith.constant 0 : i32
    %c0_i32_1 = arith.constant 0 : i32
    %c0_i32_2 = arith.constant 0 : i32
    return %c0_i32, %c0_i32_0, %c0_i32_1 : i32, i32, i32
  }
  func.func @transform_12(%arg0: i32, %arg1: memref<2x8xi32, #tpu.memory_space<smem>>) -> (i32, i32, i32) {
    %c0_i32 = arith.constant 0 : i32
    %c0_i32_0 = arith.constant 0 : i32
    %c0_i32_1 = arith.constant 0 : i32
    %c0_i32_2 = arith.constant 0 : i32
    return %c0_i32, %c0_i32_0, %c0_i32_1 : i32, i32, i32
  }
  func.func @transform_13(%arg0: i32, %arg1: memref<2x8xi32, #tpu.memory_space<smem>>) -> (i32, i32, i32) {
    %c0_i32 = arith.constant 0 : i32
    %c0_i32_0 = arith.constant 0 : i32
    %c0_i32_1 = arith.constant 0 : i32
    %c0_i32_2 = arith.constant 0 : i32
    return %c0_i32, %c0_i32_0, %c0_i32_1 : i32, i32, i32
  }
  func.func @transform_14(%arg0: i32, %arg1: memref<2x8xi32, #tpu.memory_space<smem>>) -> (i32, i32, i32) {
    %c0_i32 = arith.constant 0 : i32
    %c0_i32_0 = arith.constant 0 : i32
    %c0_i32_1 = arith.constant 0 : i32
    %c0_i32_2 = arith.constant 0 : i32
    return %c0_i32, %c0_i32_0, %c0_i32_1 : i32, i32, i32
  }
  func.func @transform_15(%arg0: i32, %arg1: memref<2x8xi32, #tpu.memory_space<smem>>) -> (i32, i32) {
    %c0_i32 = arith.constant 0 : i32
    %c0_i32_0 = arith.constant 0 : i32
    %c0_i32_1 = arith.constant 0 : i32
    return %c0_i32, %c0_i32_0 : i32, i32
  }
  func.func @transform_16(%arg0: i32, %arg1: memref<2x8xi32, #tpu.memory_space<smem>>) -> (i32, i32) {
    %c0_i32 = arith.constant 0 : i32
    %c0_i32_0 = arith.constant 0 : i32
    %c0_i32_1 = arith.constant 0 : i32
    return %c0_i32, %c0_i32_0 : i32, i32
  }
  func.func @transform_17(%arg0: i32, %arg1: memref<2x8xi32, #tpu.memory_space<smem>>) -> (i32, i32, i32) {
    %c0_i32 = arith.constant 0 : i32
    %c0_i32_0 = arith.constant 0 : i32
    %c0_i32_1 = arith.constant 0 : i32
    return %arg0, %c0_i32, %c0_i32_0 : i32, i32, i32
  }
}

</mosaic_0001>

<llo_original>
// kernel: tpu_custom_call.1
$region0: #{tpu_custom_call.1}
  #allocation0 [shape = 'u32[]', space=smem, size = 0x4, offset = 0x4, fixed_abs, tag = 'smem constant byte address 0x4 - core index']
  #allocation1 [shape = 'u32[144,128]{1,0:T(1,128)}', space=vmem, size = 0x12000, scoped, tag = 'internal scratch']
  #allocation2 [shape = 's32[1]{0}', space=sflag, size = 0x4, scoped, tag = 'scoped memory for tpu_custom_call.1']
  #allocation3 [shape = 'u8[1024]{0}', space=smem, size = 0x400, scoped, tag = 'prefetched SMEM operand 0']
  %s0 = inlined_call_operand.hbm [shape: s32[2,8], index: 0, kind: input, shape index: {}]
  %s1 = inlined_call_operand.hbm [shape: f32[50,128], index: 1, kind: input, shape index: {}]
  %s2 = inlined_call_operand.hbm [shape: f32[1,128], index: 2, kind: input, shape index: {}]
  %s3 = inlined_call_operand.hbm [shape: f32[9,128], index: 3, kind: input, shape index: {}]
  %s4 = inlined_call_operand.vmem [shape: f32[2,1,128], index: 4, kind: input, shape index: {}]
  %s5 = inlined_call_operand.vmem [shape: f32[2,1,128], index: 5, kind: input, shape index: {}]
  %s6 = inlined_call_operand.hbm [shape: bf16[2,128,384], index: 6, kind: input, shape index: {}]
  %s7 = inlined_call_operand.vmem [shape: f32[2,1,384], index: 7, kind: input, shape index: {}]
  %s8 = inlined_call_operand.hbm [shape: bf16[2,128,128], index: 8, kind: input, shape index: {}]
  %s9 = inlined_call_operand.vmem [shape: f32[2,1,128], index: 9, kind: input, shape index: {}]
  %s10 = inlined_call_operand.vmem [shape: f32[2,1,128], index: 10, kind: input, shape index: {}]
  %s11 = inlined_call_operand.vmem [shape: f32[2,1,128], index: 11, kind: input, shape index: {}]
  %s12 = inlined_call_operand.hbm [shape: bf16[2,128,128], index: 12, kind: input, shape index: {}]
  %s13 = inlined_call_operand.vmem [shape: f32[2,1,128], index: 13, kind: input, shape index: {}]
  %s14 = inlined_call_operand.hbm [shape: bf16[2,128,128], index: 14, kind: input, shape index: {}]
  %s15 = inlined_call_operand.vmem [shape: f32[2,1,128], index: 15, kind: input, shape index: {}]
  %s16 = inlined_call_operand.vmem [shape: f32[1,128], index: 16, kind: input, shape index: {}]
  %s17 = inlined_call_operand.vmem [shape: f32[1,128], index: 17, kind: input, shape index: {}]
  %s18 = inlined_call_operand.hbm [shape: f32[2,1,128], index: 18, kind: output, shape index: {}]
  %s19 = sld [smem:[#allocation0]]
  $region129: #{tpu_custom_call.1} parent=0
    _
  %s21 = ssub.s32 1, %s19
  %s22 = scalar_select 0, %s21, %s19
  %24 = dma.hbm_to_smem %s0, 32, [#allocation3], [#allocation2]
  %25 = dma.done [#allocation2], 32
  %26 = sfence
  $region1: #{tpu_custom_call.1} parent=0
    #allocation4 [shape = 'u8[28672]{0}', space=vmem, size = 0x7000, scoped, tag = 'input window, operand 1, single buffered']
    #allocation5 [shape = 's32[2]{0}', space=sflag, size = 0x8, scoped, tag = 'scoped memory for tpu_custom_call.1']
    #allocation6 [shape = 's32[2]{0}', space=sflag, size = 0x8, scoped, tag = 'scoped memory for tpu_custom_call.1']
    #allocation7 [shape = 'u8[512]{0}', space=vmem, size = 0x400, scoped, tag = 'input window, operand 2, single buffered']
    #allocation8 [shape = 's32[1]{0}', space=sflag, size = 0x4, scoped, tag = 'scoped memory for tpu_custom_call.1']
    #allocation9 [shape = 'u8[8192]{0}', space=vmem, size = 0x2000, scoped, tag = 'input window, operand 3, single buffered']
    #allocation10 [shape = 'u8[196608]{0}', space=vmem, size = 0x30000, scoped, tag = 'input window, operand 6, single buffered']
    #allocation11 [shape = 's32[1]{0}', space=sflag, size = 0x4, scoped, tag = 'scoped memory for tpu_custom_call.1']
    #allocation12 [shape = 'u8[65536]{0}', space=vmem, size = 0x10000, scoped, tag = 'input window, operand 8, single buffered']
    #allocation13 [shape = 'u8[65536]{0}', space=vmem, size = 0x10000, scoped, tag = 'input window, operand 12, single buffered']
    #allocation14 [shape = 's32[1]{0}', space=sflag, size = 0x4, scoped, tag = 'scoped memory for tpu_custom_call.1']
    #allocation15 [shape = 'u8[65536]{0}', space=vmem, size = 0x10000, scoped, tag = 'input window, operand 14, single buffered']
    #allocation16 [shape = 'u8[1024]{0}', space=vmem, size = 0x400, scoped, tag = 'output window, operand 0']
    %27 = vsyncpa [#allocation5], 0
    %28 = vsyncpa [#allocation8], 0
    %29 = vsyncpa [#allocation11], 0
    %30 = vsyncpa [#allocation14], 0
    %31 = vsyncpa [#allocation6], 0
    %s32 = scalar_lea.sflag [#allocation6], 1
    %33 = vsyncpa %s32, 0
    loop: start=0, step=1, limit=4
    $region2: #{tpu_custom_call.1} parent=1 // loop_pre_header
      _
    $region3: #{tpu_custom_call.1} parent=1 // loop_header
      %s35 = sphi 0, %s39
      %p36 = scmp.ge.s32.totalorder %s35, 4
      %s43 = sphi 0, %s43
      %s45 = sphi 0, %s43
      %s46 = sphi 0, %s45
      %s60 = sphi 0, %s46
      %s64 = sphi 0, %s64
      %s66 = sphi 0, %s64
      %s67 = sphi 0, %s66
      %s81 = sphi 0, %s67
      %s85 = sphi 0, %s85
      %s87 = sphi 0, %s85
      %s88 = sphi 0, %s87
      %s102 = sphi 0, %s88
      %s106 = sphi 0, %s106
      %s108 = sphi 0, %s106
      %s109 = sphi 0, %s108
      %s123 = sphi 0, %s109
      %s127 = sphi 0, %s127
      %s129 = sphi 0, %s127
      %s130 = sphi 0, %s129
      %s144 = sphi 0, %s130
      %s148 = sphi 0, %s148
      %s150 = sphi 0, %s148
      %s151 = sphi 0, %s150
      %s165 = sphi 0, %s151
      %s169 = sphi 0, %s169
      %s171 = sphi 0, %s169
      %s172 = sphi 0, %s171
      %s186 = sphi 0, %s172
      %s190 = sphi 0, %s190
      %s192 = sphi 0, %s190
      %s193 = sphi 0, %s192
      %s207 = sphi 0, %s193
      %s211 = sphi 0, %s211
      %s213 = sphi 0, %s211
      %s214 = sphi 0, %s213
      %s228 = sphi 0, %s214
      %s232 = sphi 0, %s232
      %s234 = sphi 0, %s232
      %s235 = sphi 0, %s234
      %s249 = sphi 0, %s235
      %s253 = sphi 0, %s253
      %s255 = sphi 0, %s253
      %s256 = sphi 0, %s255
      %s270 = sphi 0, %s256
      %s274 = sphi 0, %s274
      %s276 = sphi 0, %s274
      %s277 = sphi 0, %s276
      %s291 = sphi 0, %s277
      %s295 = sphi 0, %s295
      %s297 = sphi 0, %s295
      %s298 = sphi 0, %s297
      %s312 = sphi 0, %s298
      %s316 = sphi 0, %s316
      %s318 = sphi 0, %s316
      %s319 = sphi 0, %s318
      %s333 = sphi 0, %s319
      %s337 = sphi 0, %s337
      %s339 = sphi 0, %s337
      %s340 = sphi 0, %s339
      %s354 = sphi 0, %s340
      %s358 = sphi 0, %s358
      %s360 = sphi 0, %s358
      %s361 = sphi 0, %s360
      %s375 = sphi 0, %s361
      %s379 = sphi 0, %s379
      %s381 = sphi 0, %s379
      %s382 = sphi 0, %s381
      %s396 = sphi 0, %s382
      %s402 = sphi 0, %s404
      %s405 = sphi 0, %s402
      %s406 = sphi 0, %s405
      %s422 = sphi 0, %s406
    $region4: #{tpu_custom_call.1} parent=1 // loop_header_branch
      %38 = sbr.rel (%p36) target = $region8
    $region5: #{tpu_custom_call.1} parent=1 // loop_body
      %s40 = ssub.s32 %s35, 1
      %s41 = ssub.s32 %s35, 2
      %s42 = sadd.s32 %s35, 1
      %s44 = sadd.s32 %s43, 1
      %p47 = scmp.eq.s32.totalorder %s35, 1
      %p48 = scmp.ne.s32.totalorder %s43, %s45
      %p49 = scmp.eq.s32.totalorder %s35, 0
      %p50 = por %p48, %p49
      %p51 = scmp.ne.s32.totalorder %s43, %s45
      %p52 = scmp.eq.s32.totalorder %s40, 1
      %p53 = por %p51, %p52
      %p54 = scmp.ne.s32.totalorder %s45, %s46
      %p55 = scmp.eq.s32.totalorder %s40, 0
      %p56 = por %p54, %p55
      %p57 = scmp.ne.s32.totalorder %s45, %s46
      %p58 = scmp.eq.s32.totalorder %s41, 1
      %p59 = por %p57, %p58
      %p61 = scmp.ne.s32.totalorder %s46, %s60
      %p62 = scmp.eq.s32.totalorder %s41, 0
      %p63 = por %p61, %p62
      %s65 = sadd.s32 %s64, 1
      %p68 = scmp.eq.s32.totalorder %s35, 1
      %p69 = scmp.ne.s32.totalorder %s64, %s66
      %p70 = scmp.eq.s32.totalorder %s35, 0
      %p71 = por %p69, %p70
      %p72 = scmp.ne.s32.totalorder %s64, %s66
      %p73 = scmp.eq.s32.totalorder %s40, 1
      %p74 = por %p72, %p73
      %p75 = scmp.ne.s32.totalorder %s66, %s67
      %p76 = scmp.eq.s32.totalorder %s40, 0
      %p77 = por %p75, %p76
      %p78 = scmp.ne.s32.totalorder %s66, %s67
      %p79 = scmp.eq.s32.totalorder %s41, 1
      %p80 = por %p78, %p79
      %p82 = scmp.ne.s32.totalorder %s67, %s81
      %p83 = scmp.eq.s32.totalorder %s41, 0
      %p84 = por %p82, %p83
      %s86 = sadd.s32 %s85, 1
      %p89 = scmp.eq.s32.totalorder %s35, 1
      %p90 = scmp.ne.s32.totalorder %s85, %s87
      %p91 = scmp.eq.s32.totalorder %s35, 0
      %p92 = por %p90, %p91
      %p93 = scmp.ne.s32.totalorder %s85, %s87
      %p94 = scmp.eq.s32.totalorder %s40, 1
      %p95 = por %p93, %p94
      %p96 = scmp.ne.s32.totalorder %s87, %s88
      %p97 = scmp.eq.s32.totalorder %s40, 0
      %p98 = por %p96, %p97
      %p99 = scmp.ne.s32.totalorder %s87, %s88
      %p100 = scmp.eq.s32.totalorder %s41, 1
      %p101 = por %p99, %p100
      %p103 = scmp.ne.s32.totalorder %s88, %s102
      %p104 = scmp.eq.s32.totalorder %s41, 0
      %p105 = por %p103, %p104
      %s107 = sadd.s32 %s106, 1
      %p110 = scmp.eq.s32.totalorder %s35, 1
      %p111 = scmp.ne.s32.totalorder %s106, %s108
      %p112 = scmp.eq.s32.totalorder %s35, 0
      %p113 = por %p111, %p112
      %p114 = scmp.ne.s32.totalorder %s106, %s108
      %p115 = scmp.eq.s32.totalorder %s40, 1
      %p116 = por %p114, %p115
      %p117 = scmp.ne.s32.totalorder %s108, %s109
      %p118 = scmp.eq.s32.totalorder %s40, 0
      %p119 = por %p117, %p118
      %p120 = scmp.ne.s32.totalorder %s108, %s109
      %p121 = scmp.eq.s32.totalorder %s41, 1
      %p122 = por %p120, %p121
      %p124 = scmp.ne.s32.totalorder %s109, %s123
      %p125 = scmp.eq.s32.totalorder %s41, 0
      %p126 = por %p124, %p125
      %s128 = sadd.s32 %s127, 1
      %p131 = scmp.eq.s32.totalorder %s35, 1
      %p132 = scmp.ne.s32.totalorder %s127, %s129
      %p133 = scmp.eq.s32.totalorder %s35, 0
      %p134 = por %p132, %p133
      %p135 = scmp.ne.s32.totalorder %s127, %s129
      %p136 = scmp.eq.s32.totalorder %s40, 1
      %p137 = por %p135, %p136
      %p138 = scmp.ne.s32.totalorder %s129, %s130
      %p139 = scmp.eq.s32.totalorder %s40, 0
      %p140 = por %p138, %p139
      %p141 = scmp.ne.s32.totalorder %s129, %s130
      %p142 = scmp.eq.s32.totalorder %s41, 1
      %p143 = por %p141, %p142
      %p145 = scmp.ne.s32.totalorder %s130, %s144
      %p146 = scmp.eq.s32.totalorder %s41, 0
      %p147 = por %p145, %p146
      %s149 = sadd.s32 %s148, 1
      %p152 = scmp.eq.s32.totalorder %s35, 1
      %p153 = scmp.ne.s32.totalorder %s148, %s150
      %p154 = scmp.eq.s32.totalorder %s35, 0
      %p155 = por %p153, %p154
      %p156 = scmp.ne.s32.totalorder %s148, %s150
      %p157 = scmp.eq.s32.totalorder %s40, 1
      %p158 = por %p156, %p157
      %p159 = scmp.ne.s32.totalorder %s150, %s151
      %p160 = scmp.eq.s32.totalorder %s40, 0
      %p161 = por %p159, %p160
      %p162 = scmp.ne.s32.totalorder %s150, %s151
      %p163 = scmp.eq.s32.totalorder %s41, 1
      %p164 = por %p162, %p163
      %p166 = scmp.ne.s32.totalorder %s151, %s165
      %p167 = scmp.eq.s32.totalorder %s41, 0
      %p168 = por %p166, %p167
      %s170 = sadd.s32 %s169, 1
      %p173 = scmp.eq.s32.totalorder %s35, 1
      %p174 = scmp.ne.s32.totalorder %s169, %s171
      %p175 = scmp.eq.s32.totalorder %s35, 0
      %p176 = por %p174, %p175
      %p177 = scmp.ne.s32.totalorder %s169, %s171
      %p178 = scmp.eq.s32.totalorder %s40, 1
      %p179 = por %p177, %p178
      %p180 = scmp.ne.s32.totalorder %s171, %s172
      %p181 = scmp.eq.s32.totalorder %s40, 0
      %p182 = por %p180, %p181
      %p183 = scmp.ne.s32.totalorder %s171, %s172
      %p184 = scmp.eq.s32.totalorder %s41, 1
      %p185 = por %p183, %p184
      %p187 = scmp.ne.s32.totalorder %s172, %s186
      %p188 = scmp.eq.s32.totalorder %s41, 0
      %p189 = por %p187, %p188
      %s191 = sadd.s32 %s190, 1
      %p194 = scmp.eq.s32.totalorder %s35, 1
      %p195 = scmp.ne.s32.totalorder %s190, %s192
      %p196 = scmp.eq.s32.totalorder %s35, 0
      %p197 = por %p195, %p196
      %p198 = scmp.ne.s32.totalorder %s190, %s192
      %p199 = scmp.eq.s32.totalorder %s40, 1
      %p200 = por %p198, %p199
      %p201 = scmp.ne.s32.totalorder %s192, %s193
      %p202 = scmp.eq.s32.totalorder %s40, 0
      %p203 = por %p201, %p202
      %p204 = scmp.ne.s32.totalorder %s192, %s193
      %p205 = scmp.eq.s32.totalorder %s41, 1
      %p206 = por %p204, %p205
      %p208 = scmp.ne.s32.totalorder %s193, %s207
      %p209 = scmp.eq.s32.totalorder %s41, 0
      %p210 = por %p208, %p209
      %s212 = sadd.s32 %s211, 1
      %p215 = scmp.eq.s32.totalorder %s35, 1
      %p216 = scmp.ne.s32.totalorder %s211, %s213
      %p217 = scmp.eq.s32.totalorder %s35, 0
      %p218 = por %p216, %p217
      %p219 = scmp.ne.s32.totalorder %s211, %s213
      %p220 = scmp.eq.s32.totalorder %s40, 1
      %p221 = por %p219, %p220
      %p222 = scmp.ne.s32.totalorder %s213, %s214
      %p223 = scmp.eq.s32.totalorder %s40, 0
      %p224 = por %p222, %p223
      %p225 = scmp.ne.s32.totalorder %s213, %s214
      %p226 = scmp.eq.s32.totalorder %s41, 1
      %p227 = por %p225, %p226
      %p229 = scmp.ne.s32.totalorder %s214, %s228
      %p230 = scmp.eq.s32.totalorder %s41, 0
      %p231 = por %p229, %p230
      %s233 = sadd.s32 %s232, 1
      %p236 = scmp.eq.s32.totalorder %s35, 1
      %p237 = scmp.ne.s32.totalorder %s232, %s234
      %p238 = scmp.eq.s32.totalorder %s35, 0
      %p239 = por %p237, %p238
      %p240 = scmp.ne.s32.totalorder %s232, %s234
      %p241 = scmp.eq.s32.totalorder %s40, 1
      %p242 = por %p240, %p241
      %p243 = scmp.ne.s32.totalorder %s234, %s235
      %p244 = scmp.eq.s32.totalorder %s40, 0
      %p245 = por %p243, %p244
      %p246 = scmp.ne.s32.totalorder %s234, %s235
      %p247 = scmp.eq.s32.totalorder %s41, 1
      %p248 = por %p246, %p247
      %p250 = scmp.ne.s32.totalorder %s235, %s249
      %p251 = scmp.eq.s32.totalorder %s41, 0
      %p252 = por %p250, %p251
      %s254 = sadd.s32 %s253, 1
      %p257 = scmp.eq.s32.totalorder %s35, 1
      %p258 = scmp.ne.s32.totalorder %s253, %s255
      %p259 = scmp.eq.s32.totalorder %s35, 0
      %p260 = por %p258, %p259
      %p261 = scmp.ne.s32.totalorder %s253, %s255
      %p262 = scmp.eq.s32.totalorder %s40, 1
      %p263 = por %p261, %p262
      %p264 = scmp.ne.s32.totalorder %s255, %s256
      %p265 = scmp.eq.s32.totalorder %s40, 0
      %p266 = por %p264, %p265
      %p267 = scmp.ne.s32.totalorder %s255, %s256
      %p268 = scmp.eq.s32.totalorder %s41, 1
      %p269 = por %p267, %p268
      %p271 = scmp.ne.s32.totalorder %s256, %s270
      %p272 = scmp.eq.s32.totalorder %s41, 0
      %p273 = por %p271, %p272
      %s275 = sadd.s32 %s274, 1
      %p278 = scmp.eq.s32.totalorder %s35, 1
      %p279 = scmp.ne.s32.totalorder %s274, %s276
      %p280 = scmp.eq.s32.totalorder %s35, 0
      %p281 = por %p279, %p280
      %p282 = scmp.ne.s32.totalorder %s274, %s276
      %p283 = scmp.eq.s32.totalorder %s40, 1
      %p284 = por %p282, %p283
      %p285 = scmp.ne.s32.totalorder %s276, %s277
      %p286 = scmp.eq.s32.totalorder %s40, 0
      %p287 = por %p285, %p286
      %p288 = scmp.ne.s32.totalorder %s276, %s277
      %p289 = scmp.eq.s32.totalorder %s41, 1
      %p290 = por %p288, %p289
      %p292 = scmp.ne.s32.totalorder %s277, %s291
      %p293 = scmp.eq.s32.totalorder %s41, 0
      %p294 = por %p292, %p293
      %s296 = sadd.s32 %s295, 1
      %p299 = scmp.eq.s32.totalorder %s35, 1
      %p300 = scmp.ne.s32.totalorder %s295, %s297
      %p301 = scmp.eq.s32.totalorder %s35, 0
      %p302 = por %p300, %p301
      %p303 = scmp.ne.s32.totalorder %s295, %s297
      %p304 = scmp.eq.s32.totalorder %s40, 1
      %p305 = por %p303, %p304
      %p306 = scmp.ne.s32.totalorder %s297, %s298
      %p307 = scmp.eq.s32.totalorder %s40, 0
      %p308 = por %p306, %p307
      %p309 = scmp.ne.s32.totalorder %s297, %s298
      %p310 = scmp.eq.s32.totalorder %s41, 1
      %p311 = por %p309, %p310
      %p313 = scmp.ne.s32.totalorder %s298, %s312
      %p314 = scmp.eq.s32.totalorder %s41, 0
      %p315 = por %p313, %p314
      %s317 = sadd.s32 %s316, 1
      %p320 = scmp.eq.s32.totalorder %s35, 1
      %p321 = scmp.ne.s32.totalorder %s316, %s318
      %p322 = scmp.eq.s32.totalorder %s35, 0
      %p323 = por %p321, %p322
      %p324 = scmp.ne.s32.totalorder %s316, %s318
      %p325 = scmp.eq.s32.totalorder %s40, 1
      %p326 = por %p324, %p325
      %p327 = scmp.ne.s32.totalorder %s318, %s319
      %p328 = scmp.eq.s32.totalorder %s40, 0
      %p329 = por %p327, %p328
      %p330 = scmp.ne.s32.totalorder %s318, %s319
      %p331 = scmp.eq.s32.totalorder %s41, 1
      %p332 = por %p330, %p331
      %p334 = scmp.ne.s32.totalorder %s319, %s333
      %p335 = scmp.eq.s32.totalorder %s41, 0
      %p336 = por %p334, %p335
      %s338 = sadd.s32 %s337, 1
      %p341 = scmp.eq.s32.totalorder %s35, 1
      %p342 = scmp.ne.s32.totalorder %s337, %s339
      %p343 = scmp.eq.s32.totalorder %s35, 0
      %p344 = por %p342, %p343
      %p345 = scmp.ne.s32.totalorder %s337, %s339
      %p346 = scmp.eq.s32.totalorder %s40, 1
      %p347 = por %p345, %p346
      %p348 = scmp.ne.s32.totalorder %s339, %s340
      %p349 = scmp.eq.s32.totalorder %s40, 0
      %p350 = por %p348, %p349
      %p351 = scmp.ne.s32.totalorder %s339, %s340
      %p352 = scmp.eq.s32.totalorder %s41, 1
      %p353 = por %p351, %p352
      %p355 = scmp.ne.s32.totalorder %s340, %s354
      %p356 = scmp.eq.s32.totalorder %s41, 0
      %p357 = por %p355, %p356
      %s359 = sadd.s32 %s358, 1
      %p362 = scmp.eq.s32.totalorder %s35, 1
      %p363 = scmp.ne.s32.totalorder %s358, %s360
      %p364 = scmp.eq.s32.totalorder %s35, 0
      %p365 = por %p363, %p364
      %p366 = scmp.ne.s32.totalorder %s358, %s360
      %p367 = scmp.eq.s32.totalorder %s40, 1
      %p368 = por %p366, %p367
      %p369 = scmp.ne.s32.totalorder %s360, %s361
      %p370 = scmp.eq.s32.totalorder %s40, 0
      %p371 = por %p369, %p370
      %p372 = scmp.ne.s32.totalorder %s360, %s361
      %p373 = scmp.eq.s32.totalorder %s41, 1
      %p374 = por %p372, %p373
      %p376 = scmp.ne.s32.totalorder %s361, %s375
      %p377 = scmp.eq.s32.totalorder %s41, 0
      %p378 = por %p376, %p377
      %s380 = sadd.s32 %s379, 1
      %p383 = scmp.eq.s32.totalorder %s35, 1
      %p384 = scmp.ne.s32.totalorder %s379, %s381
      %p385 = scmp.eq.s32.totalorder %s35, 0
      %p386 = por %p384, %p385
      %p387 = scmp.ne.s32.totalorder %s379, %s381
      %p388 = scmp.eq.s32.totalorder %s40, 1
      %p389 = por %p387, %p388
      %p390 = scmp.ne.s32.totalorder %s381, %s382
      %p391 = scmp.eq.s32.totalorder %s40, 0
      %p392 = por %p390, %p391
      %p393 = scmp.ne.s32.totalorder %s381, %s382
      %p394 = scmp.eq.s32.totalorder %s41, 1
      %p395 = por %p393, %p394
      %p397 = scmp.ne.s32.totalorder %s382, %s396
      %p398 = scmp.eq.s32.totalorder %s41, 0
      %p399 = por %p397, %p398
      %s400 = ssub.s32 %s35, %s42
      %p401 = scmp.eq.s32.totalorder %s400, 0
      %s403 = sadd.s32 %s402, 1
      %s404 = scalar_select %p401, %s402, %s403
      %p407 = pneg %p401
      %p408 = scmp.eq.s32.totalorder %s35, 1
      %p409 = por %p407, %p408
      %p410 = scmp.ne.s32.totalorder %s402, %s405
      %p411 = scmp.eq.s32.totalorder %s35, 0
      %p412 = por %p410, %p411
      %p413 = scmp.ne.s32.totalorder %s402, %s405
      %p414 = scmp.eq.s32.totalorder %s40, 1
      %p415 = por %p413, %p414
      %p416 = scmp.ne.s32.totalorder %s405, %s406
      %p417 = scmp.eq.s32.totalorder %s40, 0
      %p418 = por %p416, %p417
      %p419 = scmp.ne.s32.totalorder %s405, %s406
      %p420 = scmp.eq.s32.totalorder %s41, 1
      %p421 = por %p419, %p420
      %p423 = scmp.ne.s32.totalorder %s406, %s422
      %p424 = scmp.eq.s32.totalorder %s41, 0
      %p425 = por %p423, %p424
      %p426 = scmp.le.s32.totalorder 1, %s35
      %p427 = scmp.lt.s32.totalorder %s35, 3
      %p428 = pnand %p426, %p427
      %p429 = pneg %p428
      // Predicated region
      $region9: #{tpu_custom_call.1} parent=5 // pred_check
        _
      $region10: #{tpu_custom_call.1} parent=5 // pred_check_branch
        %431 = sbr.rel (%p428) target = $region12
      $region11: #{tpu_custom_call.1} parent=5 // pred_region
        %s432 = ssub.s32 %s35, 1
        // Predicated region
        $region13: #{tpu_custom_call.1} parent=11 // pred_check
          %p433 = pneg %p56
        $region14: #{tpu_custom_call.1} parent=11 // pred_check_branch
          %435 = sbr.rel (%p433) target = $region16
        $region15: #{tpu_custom_call.1} parent=11 // pred_region
          %s437 = ssub.s32 896, 896
          %438 = vsyncadd [#allocation5], %s437
          %s439 = sshll.u32 [#allocation4], 4
          %s440 = int_to_ptr.vmem [resolvable:$true] %s439
          %445 = dma.hbm_to_vmem [thread:$0]  %s1, 896, %s440, [#allocation5], 128, 128, 8
        $region16: #{tpu_custom_call.1} parent=11 // pred_fallthru
          _
        // Predicated region
        $region17: #{tpu_custom_call.1} parent=11 // pred_check
          %p446 = pneg %p77
        $region18: #{tpu_custom_call.1} parent=11 // pred_check_branch
          %448 = sbr.rel (%p446) target = $region20
        $region19: #{tpu_custom_call.1} parent=11 // pred_region
          %s450 = ssub.s32 16, 16
          %451 = vsyncadd [#allocation8], %s450
          %s453 = sshll.u32 [#allocation7], 4
          %s454 = int_to_ptr.vmem [resolvable:$true] %s453
          %456 = dma.hbm_to_vmem [thread:$0]  %s2, 16, %s454, [#allocation8]
        $region20: #{tpu_custom_call.1} parent=11 // pred_fallthru
          _
        // Predicated region
        $region21: #{tpu_custom_call.1} parent=11 // pred_check
          %p457 = pneg %p98
        $region22: #{tpu_custom_call.1} parent=11 // pred_check_branch
          %459 = sbr.rel (%p457) target = $region24
        $region23: #{tpu_custom_call.1} parent=11 // pred_region
          %s461 = ssub.s32 256, 256
          %462 = vsyncadd [#allocation8], %s461
          %s463 = sshll.u32 [#allocation9], 4
          %s464 = int_to_ptr.vmem [resolvable:$true] %s463
          %469 = dma.hbm_to_vmem [thread:$0]  %s3, 256, %s464, [#allocation8], 128, 128, 8
        $region24: #{tpu_custom_call.1} parent=11 // pred_fallthru
          _
        // Predicated region
        $region25: #{tpu_custom_call.1} parent=11 // pred_check
          %p470 = pneg %p119
        $region26: #{tpu_custom_call.1} parent=11 // pred_check_branch
          %472 = sbr.rel (%p470) target = $region28
        $region27: #{tpu_custom_call.1} parent=11 // pred_region
          _
        $region28: #{tpu_custom_call.1} parent=11 // pred_fallthru
          _
        // Predicated region
        $region29: #{tpu_custom_call.1} parent=11 // pred_check
          %p473 = pneg %p140
        $region30: #{tpu_custom_call.1} parent=11 // pred_check_branch
          %475 = sbr.rel (%p473) target = $region32
        $region31: #{tpu_custom_call.1} parent=11 // pred_region
          _
        $region32: #{tpu_custom_call.1} parent=11 // pred_fallthru
          _
        // Predicated region
        $region33: #{tpu_custom_call.1} parent=11 // pred_check
          %p476 = pneg %p161
        $region34: #{tpu_custom_call.1} parent=11 // pred_check_branch
          %478 = sbr.rel (%p476) target = $region36
        $region35: #{tpu_custom_call.1} parent=11 // pred_region
          %s480 = ssub.s32 6144, 6144
          %481 = vsyncadd [#allocation11], %s480
          %s482 = sshll.u32 [#allocation10], 4
          %s483 = int_to_ptr.vmem [resolvable:$true] %s482
          %488 = dma.hbm_to_vmem [thread:$0]  %s6, 6144, %s483, [#allocation11], 192, 192, 12
        $region36: #{tpu_custom_call.1} parent=11 // pred_fallthru
          _
        // Predicated region
        $region37: #{tpu_custom_call.1} parent=11 // pred_check
          %p489 = pneg %p182
        $region38: #{tpu_custom_call.1} parent=11 // pred_check_branch
          %491 = sbr.rel (%p489) target = $region40
        $region39: #{tpu_custom_call.1} parent=11 // pred_region
          _
        $region40: #{tpu_custom_call.1} parent=11 // pred_fallthru
          _
        // Predicated region
        $region41: #{tpu_custom_call.1} parent=11 // pred_check
          %p492 = pneg %p203
        $region42: #{tpu_custom_call.1} parent=11 // pred_check_branch
          %494 = sbr.rel (%p492) target = $region44
        $region43: #{tpu_custom_call.1} parent=11 // pred_region
          %s496 = ssub.s32 2048, 2048
          %497 = vsyncadd [#allocation11], %s496
          %s498 = sshll.u32 [#allocation12], 4
          %s499 = int_to_ptr.vmem [resolvable:$true] %s498
          %504 = dma.hbm_to_vmem [thread:$0]  %s8, 2048, %s499, [#allocation11], 64, 64, 4
        $region44: #{tpu_custom_call.1} parent=11 // pred_fallthru
          _
        // Predicated region
        $region45: #{tpu_custom_call.1} parent=11 // pred_check
          %p505 = pneg %p224
        $region46: #{tpu_custom_call.1} parent=11 // pred_check_branch
          %507 = sbr.rel (%p505) target = $region48
        $region47: #{tpu_custom_call.1} parent=11 // pred_region
          _
        $region48: #{tpu_custom_call.1} parent=11 // pred_fallthru
          _
        // Predicated region
        $region49: #{tpu_custom_call.1} parent=11 // pred_check
          %p508 = pneg %p245
        $region50: #{tpu_custom_call.1} parent=11 // pred_check_branch
          %510 = sbr.rel (%p508) target = $region52
        $region51: #{tpu_custom_call.1} parent=11 // pred_region
          _
        $region52: #{tpu_custom_call.1} parent=11 // pred_fallthru
          _
        // Predicated region
        $region53: #{tpu_custom_call.1} parent=11 // pred_check
          %p511 = pneg %p266
        $region54: #{tpu_custom_call.1} parent=11 // pred_check_branch
          %513 = sbr.rel (%p511) target = $region56
        $region55: #{tpu_custom_call.1} parent=11 // pred_region
          _
        $region56: #{tpu_custom_call.1} parent=11 // pred_fallthru
          _
        // Predicated region
        $region57: #{tpu_custom_call.1} parent=11 // pred_check
          %p514 = pneg %p287
        $region58: #{tpu_custom_call.1} parent=11 // pred_check_branch
          %516 = sbr.rel (%p514) target = $region60
        $region59: #{tpu_custom_call.1} parent=11 // pred_region
          %s518 = ssub.s32 2048, 2048
          %519 = vsyncadd [#allocation14], %s518
          %s520 = sshll.u32 [#allocation13], 4
          %s521 = int_to_ptr.vmem [resolvable:$true] %s520
          %526 = dma.hbm_to_vmem [thread:$0]  %s12, 2048, %s521, [#allocation14], 64, 64, 4
        $region60: #{tpu_custom_call.1} parent=11 // pred_fallthru
          _
        // Predicated region
        $region61: #{tpu_custom_call.1} parent=11 // pred_check
          %p527 = pneg %p308
        $region62: #{tpu_custom_call.1} parent=11 // pred_check_branch
          %529 = sbr.rel (%p527) target = $region64
        $region63: #{tpu_custom_call.1} parent=11 // pred_region
          _
        $region64: #{tpu_custom_call.1} parent=11 // pred_fallthru
          _
        // Predicated region
        $region65: #{tpu_custom_call.1} parent=11 // pred_check
          %p530 = pneg %p329
        $region66: #{tpu_custom_call.1} parent=11 // pred_check_branch
          %532 = sbr.rel (%p530) target = $region68
        $region67: #{tpu_custom_call.1} parent=11 // pred_region
          %s534 = ssub.s32 2048, 2048
          %535 = vsyncadd [#allocation14], %s534
          %s536 = sshll.u32 [#allocation15], 4
          %s537 = int_to_ptr.vmem [resolvable:$true] %s536
          %542 = dma.hbm_to_vmem [thread:$0]  %s14, 2048, %s537, [#allocation14], 64, 64, 4
        $region68: #{tpu_custom_call.1} parent=11 // pred_fallthru
          _
        // Predicated region
        $region69: #{tpu_custom_call.1} parent=11 // pred_check
          %p543 = pneg %p350
        $region70: #{tpu_custom_call.1} parent=11 // pred_check_branch
          %545 = sbr.rel (%p543) target = $region72
        $region71: #{tpu_custom_call.1} parent=11 // pred_region
          _
        $region72: #{tpu_custom_call.1} parent=11 // pred_fallthru
          _
        // Predicated region
        $region73: #{tpu_custom_call.1} parent=11 // pred_check
          %p546 = pneg %p371
        $region74: #{tpu_custom_call.1} parent=11 // pred_check_branch
          %548 = sbr.rel (%p546) target = $region76
        $region75: #{tpu_custom_call.1} parent=11 // pred_region
          _
        $region76: #{tpu_custom_call.1} parent=11 // pred_fallthru
          _
        // Predicated region
        $region77: #{tpu_custom_call.1} parent=11 // pred_check
          %p549 = pneg %p392
        $region78: #{tpu_custom_call.1} parent=11 // pred_check_branch
          %551 = sbr.rel (%p549) target = $region80
        $region79: #{tpu_custom_call.1} parent=11 // pred_region
          _
        $region80: #{tpu_custom_call.1} parent=11 // pred_fallthru
          _
      $region12: #{tpu_custom_call.1} parent=5 // pred_fallthru
        _
      %p552 = scmp.lt.s32.totalorder %s35, 2
      // Predicated region
      $region81: #{tpu_custom_call.1} parent=5 // pred_check
        %p553 = pneg %p552
      $region82: #{tpu_custom_call.1} parent=5 // pred_check_branch
        %555 = sbr.rel (%p553) target = $region84
      $region83: #{tpu_custom_call.1} parent=5 // pred_region
        _
      $region84: #{tpu_custom_call.1} parent=5 // pred_fallthru
        _
      %p556 = scmp.le.s32.totalorder 1, %s35
      %p557 = scmp.lt.s32.totalorder %s35, 3
      %p558 = pnand %p556, %p557
      %p559 = pneg %p558
      // Predicated region
      $region85: #{tpu_custom_call.1} parent=5 // pred_check
        _
      $region86: #{tpu_custom_call.1} parent=5 // pred_check_branch
        %561 = sbr.rel (%p558) target = $region88
      $region87: #{tpu_custom_call.1} parent=5 // pred_region
        %s562 = ssub.s32 %s35, 1
        // Predicated region
        $region89: #{tpu_custom_call.1} parent=87 // pred_check
          %p563 = pneg %p56
        $region90: #{tpu_custom_call.1} parent=87 // pred_check_branch
          %565 = sbr.rel (%p563) target = $region92
        $region91: #{tpu_custom_call.1} parent=87 // pred_region
          %566 = dma.done [#allocation5], 896
        $region92: #{tpu_custom_call.1} parent=87 // pred_fallthru
          _
        // Predicated region
        $region93: #{tpu_custom_call.1} parent=87 // pred_check
          %p567 = pneg %p77
        $region94: #{tpu_custom_call.1} parent=87 // pred_check_branch
          %569 = sbr.rel (%p567) target = $region96
        $region95: #{tpu_custom_call.1} parent=87 // pred_region
          %570 = dma.done [#allocation8], 16
        $region96: #{tpu_custom_call.1} parent=87 // pred_fallthru
          _
        // Predicated region
        $region97: #{tpu_custom_call.1} parent=87 // pred_check
          %p571 = pneg %p98
        $region98: #{tpu_custom_call.1} parent=87 // pred_check_branch
          %573 = sbr.rel (%p571) target = $region100
        $region99: #{tpu_custom_call.1} parent=87 // pred_region
          %574 = dma.done [#allocation8], 256
        $region100: #{tpu_custom_call.1} parent=87 // pred_fallthru
          _
        // Predicated region
        $region101: #{tpu_custom_call.1} parent=87 // pred_check
          %p575 = pneg %p161
        $region102: #{tpu_custom_call.1} parent=87 // pred_check_branch
          %577 = sbr.rel (%p575) target = $region104
        $region103: #{tpu_custom_call.1} parent=87 // pred_region
          %578 = dma.done [#allocation11], 6144
        $region104: #{tpu_custom_call.1} parent=87 // pred_fallthru
          _
        // Predicated region
        $region105: #{tpu_custom_call.1} parent=87 // pred_check
          %p579 = pneg %p203
        $region106: #{tpu_custom_call.1} parent=87 // pred_check_branch
          %581 = sbr.rel (%p579) target = $region108
        $region107: #{tpu_custom_call.1} parent=87 // pred_region
          %582 = dma.done [#allocation11], 2048
        $region108: #{tpu_custom_call.1} parent=87 // pred_fallthru
          _
        // Predicated region
        $region109: #{tpu_custom_call.1} parent=87 // pred_check
          %p583 = pneg %p287
        $region110: #{tpu_custom_call.1} parent=87 // pred_check_branch
          %585 = sbr.rel (%p583) target = $region112
        $region111: #{tpu_custom_call.1} parent=87 // pred_region
          %586 = dma.done [#allocation14], 2048
        $region112: #{tpu_custom_call.1} parent=87 // pred_fallthru
          _
        // Predicated region
        $region113: #{tpu_custom_call.1} parent=87 // pred_check
          %p587 = pneg %p329
        $region114: #{tpu_custom_call.1} parent=87 // pred_check_branch
          %589 = sbr.rel (%p587) target = $region116
        $region115: #{tpu_custom_call.1} parent=87 // pred_region
          %590 = dma.done [#allocation14], 2048
        $region116: #{tpu_custom_call.1} parent=87 // pred_fallthru
          _
        %p591 = pneg %p56
        %p592 = pneg %p53
        %p593 = pneg %p77
        %p594 = pneg %p74
        %p595 = pneg %p98
        %p596 = pneg %p95
        %p597 = pneg %p119
        %p598 = pneg %p116
        %p599 = pneg %p140
        %p600 = pneg %p137
        %p601 = pneg %p161
        %p602 = pneg %p158
        %p603 = pneg %p182
        %p604 = pneg %p179
        %p605 = pneg %p203
        %p606 = pneg %p200
        %p607 = pneg %p224
        %p608 = pneg %p221
        %p609 = pneg %p245
        %p610 = pneg %p242
        %p611 = pneg %p266
        %p612 = pneg %p263
        %p613 = pneg %p287
        %p614 = pneg %p284
        %p615 = pneg %p308
        %p616 = pneg %p305
        %p617 = pneg %p329
        %p618 = pneg %p326
        %p619 = pneg %p350
        %p620 = pneg %p347
        %p621 = pneg %p371
        %p622 = pneg %p368
        %p623 = pneg %p392
        %p624 = pneg %p389
        %p625 = pneg %p418
        %p626 = pneg %p415
        %s627 = sand.u32 %s405, 1
        %s628 = scalar_lea.sflag [#allocation6], %s627
        %s629 = sand.u32 %s405, 1
        %s630 = scalar_lea.vmem [#allocation16], %s629
        %v632 = vlaneseq
        %v633 = vand.u32 %v632, 127
        %vm634 = vcmp.lt.s32.totalorder %v633, 32
        %v635 = vsel %vm634, 1, 0
        %v636 = vcvt.s32.f32 %v635
        %vm637 = vcmp.ge.s32.totalorder %v633, 0
        %vm638 = vcmp.lt.s32.totalorder %v633, 8
        %vm639 = vmand %vm637, %vm638
        %v640 = vsel %vm639, 1, 0
        %v641 = vcvt.s32.f32 %v640
        %vm642 = vcmp.ge.s32.totalorder %v633, 8
        %vm643 = vcmp.lt.s32.totalorder %v633, 16
        %vm644 = vmand %vm642, %vm643
        %v645 = vsel %vm644, 1, 0
        %v646 = vcvt.s32.f32 %v645
        %vm647 = vcmp.ge.s32.totalorder %v633, 16
        %vm648 = vcmp.lt.s32.totalorder %v633, 24
        %vm649 = vmand %vm647, %vm648
        %v650 = vsel %vm649, 1, 0
        %v651 = vcvt.s32.f32 %v650
        %vm652 = vcmp.ge.s32.totalorder %v633, 24
        %vm653 = vmand %vm652, %vm634
        %v654 = vsel %vm653, 1, 0
        %v655 = vcvt.s32.f32 %v654
        %v656 = vld [vmem:[#allocation7] sm:$0x1]
        %v657 = vld [vmem:[#allocation9] sm:$0xff]
        %v658 = vld [vmem:[#allocation9 + $0x8] sm:$0x1]
        %s659 = smul.u32 %s40, 128
        %s660 = sld [smem:[#allocation3 + %s659]]
        %s661 = scalar_lea.vmem [#allocation4], %s660
        %v662 = vld [vmem:[%s661] sm:$0x1]
        %s663 = sadd.s32 %s659, 1
        %s664 = sld [smem:[#allocation3 + %s663]]
        %s665 = scalar_lea.vmem [#allocation4], %s664
        %v666 = vld [vmem:[%s665] sm:$0x1]
        %s667 = sadd.s32 %s659, 2
        %s668 = sld [smem:[#allocation3 + %s667]]
        %s669 = scalar_lea.vmem [#allocation4], %s668
        %v670 = vld [vmem:[%s669] sm:$0x1]
        %s671 = sadd.s32 %s659, 3
        %s672 = sld [smem:[#allocation3 + %s671]]
        %s673 = scalar_lea.vmem [#allocation4], %s672
        %v674 = vld [vmem:[%s673] sm:$0x1]
        %s675 = sadd.s32 %s659, 4
        %s676 = sld [smem:[#allocation3 + %s675]]
        %s677 = scalar_lea.vmem [#allocation4], %s676
        %v678 = vld [vmem:[%s677] sm:$0x1]
        %s679 = sadd.s32 %s659, 5
        %s680 = sld [smem:[#allocation3 + %s679]]
        %s681 = scalar_lea.vmem [#allocation4], %s680
        %v682 = vld [vmem:[%s681] sm:$0x1]
        %s683 = sadd.s32 %s659, 6
        %s684 = sld [smem:[#allocation3 + %s683]]
        %s685 = scalar_lea.vmem [#allocation4], %s684
        %v686 = vld [vmem:[%s685] sm:$0x1]
        %s687 = sadd.s32 %s659, 7
        %s688 = sld [smem:[#allocation3 + %s687]]
        %s689 = scalar_lea.vmem [#allocation4], %s688
        %v690 = vld [vmem:[%s689] sm:$0x1]
        %v692 = vrot.slane %v662, 7
        %v695 = vrot.slane %v666, 6
        %v698 = vrot.slane %v670, 5
        %v701 = vrot.slane %v674, 4
        %v704 = vrot.slane %v678, 3
        %v707 = vrot.slane %v682, 2
        %v710 = vrot.slane %v686, 1
        %vm712 = vcmask 1040384
        %v713 = vsel %vm712, %v656, %v692
        %vm714 = vcmask 1041408
        %v715 = vsel %vm714, %v713, %v695
        %vm716 = vcmask 1042432
        %v717 = vsel %vm716, %v715, %v698
        %vm718 = vcmask 1043456
        %v719 = vsel %vm718, %v717, %v701
        %vm720 = vcmask 1044480
        %v721 = vsel %vm720, %v719, %v704
        %vm722 = vcmask 1045504
        %v723 = vsel %vm722, %v721, %v707
        %vm724 = vcmask 1046528
        %v725 = vsel %vm724, %v723, %v710
        %v726 = vadd.f32 %v725, %v657
        %v727 = vadd.f32 %v690, %v658
        %v728 = vld [vmem:[%s4] sm:$0x1]
        %v729 = vld [vmem:[%s5] sm:$0x1]
        %730 = vadd.xlane.f32.xlu0 %v726
        %v731 = vpop.xlane.xlu0 %730
        %v732 = vsel %vm712, %v727, 0.0
        %733 = vadd.xlane.f32.xlu0 %v732
        %v734 = vpop.xlane.xlu0 %733
        %v735 = vmul.f32 %v731, 0.03125
        %v736 = vmul.f32 %v734, 0.03125
        %v737 = vsub.f32 %v726, %v735
        %v738 = vsub.f32 %v727, %v736
        %v739 = vmul.f32 %v737, %v636
        %v740 = vmul.f32 %v738, %v636
        %v741 = vmul.f32 %v739, %v739
        %v742 = vmul.f32 %v740, %v740
        %743 = vadd.xlane.f32.xlu0 %v741
        %v744 = vpop.xlane.xlu0 %743
        %v745 = vsel %vm712, %v742, 0.0
        %746 = vadd.xlane.f32.xlu0 %v745
        %v747 = vpop.xlane.xlu0 %746
        %v748 = vmul.f32 %v744, 0.03125
        %v749 = vmul.f32 %v747, 0.03125
        %v750 = vadd.f32 %v748, 1e-05
        %v751 = vadd.f32 %v749, 1e-05
        %v752 = vrsqrt.pop %v750
        %v753 = vrsqrt.pop %v751
        %v754 = vmul.f32 %v739, %v752
        %v755 = vmul.f32 %v740, %v753
        %v757 = vlaneseq
        %v758 = vshrl.u32 %v757, 7
        %v759 = vsub.s32 0, %v758
        %v760 = vrot.slane %v728, %v759
        %v762 = vmul.f32 %v754, %v760
        %v763 = vmul.f32 %v755, %v760
        %v765 = vlaneseq
        %v766 = vshrl.u32 %v765, 7
        %v767 = vsub.s32 0, %v766
        %v768 = vrot.slane %v729, %v767
        %v770 = vadd.f32 %v762, %v768
        %v771 = vadd.f32 %v763, %v768
        %v772 = vpack.c.bf16 %v771, %v770
        %v773 = vld [vmem:[#allocation10] sm:$0xff]
        %v774 = vld [vmem:[#allocation10 + $0x8] sm:$0xf]
        %v775 = vld [vmem:[#allocation10 + $0xc] sm:$0xff]
        %v776 = vld [vmem:[#allocation10 + $0x14] sm:$0xf]
        %v777 = vld [vmem:[#allocation10 + $0x18] sm:$0xff]
        %v778 = vld [vmem:[#allocation10 + $0x20] sm:$0xf]
        %v779 = vld [vmem:[#allocation10 + $0x24] sm:$0xff]
        %v780 = vld [vmem:[#allocation10 + $0x2c] sm:$0xf]
        %v781 = vld [vmem:[#allocation10 + $0x30] sm:$0xff]
        %v782 = vld [vmem:[#allocation10 + $0x38] sm:$0xf]
        %v783 = vld [vmem:[#allocation10 + $0x3c] sm:$0xff]
        %v784 = vld [vmem:[#allocation10 + $0x44] sm:$0xf]
        %v785 = vld [vmem:[#allocation10 + $0x48] sm:$0xff]
        %v786 = vld [vmem:[#allocation10 + $0x50] sm:$0xf]
        %v787 = vld [vmem:[#allocation10 + $0x54] sm:$0xff]
        %v788 = vld [vmem:[#allocation10 + $0x5c] sm:$0xf]
        %v789 = vld [vmem:[#allocation10 + $0x60] sm:$0xff]
        %v790 = vld [vmem:[#allocation10 + $0x68] sm:$0xf]
        %v791 = vld [vmem:[#allocation10 + $0x6c] sm:$0xff]
        %v792 = vld [vmem:[#allocation10 + $0x74] sm:$0xf]
        %v793 = vld [vmem:[#allocation10 + $0x78] sm:$0xff]
        %v794 = vld [vmem:[#allocation10 + $0x80] sm:$0xf]
        %v795 = vld [vmem:[#allocation10 + $0x84] sm:$0xff]
        %v796 = vld [vmem:[#allocation10 + $0x8c] sm:$0xf]
        %v797 = vld [vmem:[#allocation10 + $0x90] sm:$0xff]
        %v798 = vld [vmem:[#allocation10 + $0x98] sm:$0xf]
        %v799 = vld [vmem:[#allocation10 + $0x9c] sm:$0xff]
        %v800 = vld [vmem:[#allocation10 + $0xa4] sm:$0xf]
        %v801 = vld [vmem:[#allocation10 + $0xa8] sm:$0xff]
        %v802 = vld [vmem:[#allocation10 + $0xb0] sm:$0xf]
        %v803 = vld [vmem:[#allocation10 + $0xb4] sm:$0xff]
        %v804 = vld [vmem:[#allocation10 + $0xbc] sm:$0xf]
        %v805 = vld [vmem:[%s7] sm:$0x7]
        %v807 = vlaneseq
        %v808 = vshrl.u32 %v807, 7
        %v809 = vsub.s32 0, %v808
        %v810 = vrot.slane %v805, %v809
        %v811 = vlaneseq
        %v812 = vshrl.u32 %v811, 7
        %v813 = vsub.s32 1, %v812
        %v814 = vrot.slane %v805, %v813
        %v815 = vlaneseq
        %v816 = vshrl.u32 %v815, 7
        %v817 = vsub.s32 2, %v816
        %v818 = vrot.slane %v805, %v817
        %v854 = vunpack.c.l.b16 %v773
        %v855 = vunpack.c.h.b16 %v773
        %v856 = vunpack.c.l.b16 %v774
        %v857 = vunpack.c.l.b16 %v775
        %v858 = vunpack.c.h.b16 %v775
        %v859 = vunpack.c.l.b16 %v776
        %v860 = vunpack.c.l.b16 %v777
        %v861 = vunpack.c.h.b16 %v777
        %v862 = vunpack.c.l.b16 %v778
        %v863 = vunpack.c.l.b16 %v779
        %v864 = vunpack.c.h.b16 %v779
        %v865 = vunpack.c.l.b16 %v780
        %v866 = vunpack.c.l.b16 %v781
        %v867 = vunpack.c.h.b16 %v781
        %v868 = vunpack.c.l.b16 %v782
        %v869 = vunpack.c.l.b16 %v783
        %v870 = vunpack.c.h.b16 %v783
        %v871 = vunpack.c.l.b16 %v784
        %v872 = vunpack.c.l.b16 %v785
        %v873 = vunpack.c.h.b16 %v785
        %v874 = vunpack.c.l.b16 %v786
        %v875 = vunpack.c.l.b16 %v787
        %v876 = vunpack.c.h.b16 %v787
        %v877 = vunpack.c.l.b16 %v788
        %v878 = vunpack.c.l.b16 %v789
        %v879 = vunpack.c.h.b16 %v789
        %v880 = vunpack.c.l.b16 %v790
        %v881 = vunpack.c.l.b16 %v791
        %v882 = vunpack.c.h.b16 %v791
        %v883 = vunpack.c.l.b16 %v792
        %v884 = vunpack.c.l.b16 %v793
        %v885 = vunpack.c.h.b16 %v793
        %v886 = vunpack.c.l.b16 %v794
        %v887 = vunpack.c.l.b16 %v795
        %v888 = vunpack.c.h.b16 %v795
        %v889 = vunpack.c.l.b16 %v796
        %v890 = vunpack.c.l.b16 %v797
        %v891 = vunpack.c.h.b16 %v797
        %v892 = vunpack.c.l.b16 %v798
        %v893 = vunpack.c.l.b16 %v799
        %v894 = vunpack.c.h.b16 %v799
        %v895 = vunpack.c.l.b16 %v800
        %v896 = vunpack.c.l.b16 %v801
        %v897 = vunpack.c.h.b16 %v801
        %v898 = vunpack.c.l.b16 %v802
        %v899 = vunpack.c.l.b16 %v803
        %v900 = vunpack.c.h.b16 %v803
        %v901 = vunpack.c.l.b16 %v804
        %v902 = vpack.c.b16 %v857, %v854
        %v903 = vpack.c.b16 %v858, %v855
        %v904 = vpack.c.b16 %v859, %v856
        %v905 = vpack.c.b16 %v863, %v860
        %v906 = vpack.c.b16 %v864, %v861
        %v907 = vpack.c.b16 %v865, %v862
        %v908 = vpack.c.b16 %v869, %v866
        %v909 = vpack.c.b16 %v870, %v867
        %v910 = vpack.c.b16 %v871, %v868
        %v911 = vpack.c.b16 %v875, %v872
        %v912 = vpack.c.b16 %v876, %v873
        %v913 = vpack.c.b16 %v877, %v874
        %v914 = vpack.c.b16 %v881, %v878
        %v915 = vpack.c.b16 %v882, %v879
        %v916 = vpack.c.b16 %v883, %v880
        %v917 = vpack.c.b16 %v887, %v884
        %v918 = vpack.c.b16 %v888, %v885
        %v919 = vpack.c.b16 %v889, %v886
        %v920 = vpack.c.b16 %v893, %v890
        %v921 = vpack.c.b16 %v894, %v891
        %v922 = vpack.c.b16 %v895, %v892
        %v923 = vpack.c.b16 %v899, %v896
        %v924 = vpack.c.b16 %v900, %v897
        %v925 = vpack.c.b16 %v901, %v898
        %950 = vmatprep.subr.bf16.mxu0 %v903
        %951 = vmatpush1.bf16.msra.mxu0 %v902
        %952 = vmatprep.subr.bf16.mxu0 %v906
        %953 = vmatpush1.bf16.msra.mxu0 %v905
        %954 = vmatprep.subr.bf16.mxu0 %v909
        %955 = vmatpush1.bf16.msra.mxu0 %v908
        %956 = vmatprep.subr.bf16.mxu0 %v912
        %957 = vmatpush1.bf16.msra.mxu0 %v911
        %958 = vmatprep.subr.bf16.mxu0 %v915
        %959 = vmatpush1.bf16.msra.mxu0 %v914
        %960 = vmatprep.subr.bf16.mxu0 %v918
        %961 = vmatpush1.bf16.msra.mxu0 %v917
        %962 = vmatprep.subr.bf16.mxu0 %v921
        %963 = vmatpush1.bf16.msra.mxu0 %v920
        %964 = vmatprep.subr.bf16.mxu0 %v924
        %965 = vmatpush1.bf16.msra.mxu0 %v923
        %966 = vmatprep.subr.bf16.mxu0 0
        %967 = vmatpush1.bf16.msra.mxu0 0
        %968 = vmatprep.subr.bf16.mxu0 0
        %969 = vmatpush1.bf16.msra.mxu0 0
        %970 = vmatprep.subr.bf16.mxu0 0
        %971 = vmatpush1.bf16.msra.mxu0 0
        %972 = vmatprep.subr.bf16.mxu0 0
        %973 = vmatpush1.bf16.msra.mxu0 0
        %974 = vmatprep.subr.bf16.mxu0 0
        %975 = vmatpush1.bf16.msra.mxu0 0
        %976 = vmatprep.subr.bf16.mxu0 0
        %977 = vmatpush1.bf16.msra.mxu0 0
        %978 = vmatprep.subr.bf16.mxu0 0
        %979 = vmatpush1.bf16.msra.mxu0 0
        %980 = vmatprep.subr.bf16.mxu0 0
        %981 = vmatpush1.bf16.msra.mxu0 0
        %982 = vmatprep.mubr.bf16.mxu0 0
        %983 = vmatmul.mubr.bf16.gmra.mrb[0].mxu0 %v772
        %v984 = vpop.f32.mrb[0].mxu0
        %v985 = vadd.f32 %v810, %v984
        %v986 = vpop.f32.mrb[0].mxu0
        %v987 = vadd.f32 %v814, %v986
        %v988 = vpop.f32.mrb[0].mxu0
        %v989 = vadd.f32 %v810, %v988
        %v990 = vpop.f32.mrb[0].mxu0
        %v991 = vadd.f32 %v814, %v990
        %992 = vdwg.mxu0
        %993 = vmatprep.subr.bf16.mxu0 0
        %994 = vmatpush1.bf16.msra.mxu0 %v904
        %995 = vmatprep.subr.bf16.mxu0 0
        %996 = vmatpush1.bf16.msra.mxu0 %v907
        %997 = vmatprep.subr.bf16.mxu0 0
        %998 = vmatpush1.bf16.msra.mxu0 %v910
        %999 = vmatprep.subr.bf16.mxu0 0
        %1000 = vmatpush1.bf16.msra.mxu0 %v913
        %1001 = vmatprep.subr.bf16.mxu0 0
        %1002 = vmatpush1.bf16.msra.mxu0 %v916
        %1003 = vmatprep.subr.bf16.mxu0 0
        %1004 = vmatpush1.bf16.msra.mxu0 %v919
        %1005 = vmatprep.subr.bf16.mxu0 0
        %1006 = vmatpush1.bf16.msra.mxu0 %v922
        %1007 = vmatprep.subr.bf16.mxu0 0
        %1008 = vmatpush1.bf16.msra.mxu0 %v925
        %1009 = vmatprep.subr.bf16.mxu0 0
        %1010 = vmatpush1.bf16.msra.mxu0 0
        %1011 = vmatprep.subr.bf16.mxu0 0
        %1012 = vmatpush1.bf16.msra.mxu0 0
        %1013 = vmatprep.subr.bf16.mxu0 0
        %1014 = vmatpush1.bf16.msra.mxu0 0
        %1015 = vmatprep.subr.bf16.mxu0 0
        %1016 = vmatpush1.bf16.msra.mxu0 0
        %1017 = vmatprep.subr.bf16.mxu0 0
        %1018 = vmatpush1.bf16.msra.mxu0 0
        %1019 = vmatprep.subr.bf16.mxu0 0
        %1020 = vmatpush1.bf16.msra.mxu0 0
        %1021 = vmatprep.subr.bf16.mxu0 0
        %1022 = vmatpush1.bf16.msra.mxu0 0
        %1023 = vmatprep.subr.bf16.mxu0 0
        %1024 = vmatpush1.bf16.msra.mxu0 0
        %1025 = vmatprep.mubr.bf16.mxu0 0
        %1026 = vmatmul.mubr.bf16.gmra.mrb[0].mxu0 %v772
        %v1027 = vpop.f32.mrb[0].mxu0
        %v1028 = vadd.f32 %v818, %v1027
        %v1029 = vpop.f32.mrb[0].mxu0
        %v1030 = vpop.f32.mrb[0].mxu0
        %v1031 = vadd.f32 %v818, %v1030
        %v1032 = vpop.f32.mrb[0].mxu0
        %1033 = vdwg.mxu0
        %v1034 = vpack.c.bf16 %v989, %v985
        %v1035 = vmul.f32 %v987, %v641
        %v1036 = vmul.f32 %v991, %v641
        %v1037 = vpack.c.bf16 %v1036, %v1035
        %1038 = vmatprep.subr.bf16.mxu0 0
        %1039 = vmatpush1.bf16.xpose.msra.mxu0 %v1037
        %1040 = vmatprep.subr.bf16.mxu0 0
        %1041 = vmatpush1.bf16.xpose.msra.mxu0 0
        %1042 = vmatprep.subr.bf16.mxu0 0
        %1043 = vmatpush1.bf16.xpose.msra.mxu0 0
        %1044 = vmatprep.subr.bf16.mxu0 0
        %1045 = vmatpush1.bf16.xpose.msra.mxu0 0
        %1046 = vmatprep.subr.bf16.mxu0 0
        %1047 = vmatpush1.bf16.xpose.msra.mxu0 0
        %1048 = vmatprep.subr.bf16.mxu0 0
        %1049 = vmatpush1.bf16.xpose.msra.mxu0 0
        %1050 = vmatprep.subr.bf16.mxu0 0
        %1051 = vmatpush1.bf16.xpose.msra.mxu0 0
        %1052 = vmatprep.subr.bf16.mxu0 0
        %1053 = vmatpush1.bf16.xpose.msra.mxu0 0
        %1054 = vmatprep.subr.bf16.mxu0 0
        %1055 = vmatpush1.bf16.xpose.msra.mxu0 0
        %1056 = vmatprep.subr.bf16.mxu0 0
        %1057 = vmatpush1.bf16.xpose.msra.mxu0 0
        %1058 = vmatprep.subr.bf16.mxu0 0
        %1059 = vmatpush1.bf16.xpose.msra.mxu0 0
        %1060 = vmatprep.subr.bf16.mxu0 0
        %1061 = vmatpush1.bf16.xpose.msra.mxu0 0
        %1062 = vmatprep.subr.bf16.mxu0 0
        %1063 = vmatpush1.bf16.xpose.msra.mxu0 0
        %1064 = vmatprep.subr.bf16.mxu0 0
        %1065 = vmatpush1.bf16.xpose.msra.mxu0 0
        %1066 = vmatprep.subr.bf16.mxu0 0
        %1067 = vmatpush1.bf16.xpose.msra.mxu0 0
        %1068 = vmatprep.subr.bf16.mxu0 0
        %1069 = vmatpush1.bf16.xpose.msra.mxu0 0
        %1070 = vmatprep.mubr.bf16.mxu0 0
        %1071 = vmatmul.mubr.bf16.gmra.mrb[0].mxu0 %v1034
        %v1072 = vpop.f32.mrb[0].mxu0
        %v1073 = vadd.f32 0.0, %v1072
        %v1074 = vpop.f32.mrb[0].mxu0
        %v1075 = vpop.f32.mrb[0].mxu0
        %v1076 = vadd.f32 0.0, %v1075
        %v1077 = vpop.f32.mrb[0].mxu0
        %1078 = vdwg.mxu0
        %v1079 = vmul.f32 %v1073, 0.35355338
        %v1080 = vmul.f32 %v1076, 0.35355338
        %vm1081 = vcmask 72704
        %v1082 = vsel %vm1081, %v1079, -inf
        %1083 = vmax.xlane.f32.xlu0 %v1082
        %v1084 = vpop.xlane.xlu0 %1083
        %vm1085 = vcmask 65536
        %v1086 = vsel %vm1085, %v1080, -inf
        %1087 = vmax.xlane.f32.xlu0 %v1086
        %v1088 = vpop.xlane.xlu0 %1087
        %v1089 = vsub.f32 %v1079, %v1084
        %v1090 = vsub.f32 %v1080, %v1088
        %v1091 = vmul.f32 %v1089, 1.442695
        %v1092 = vpow.pop %v1091
        %v1093 = vmul.f32 %v1090, 1.442695
        %v1094 = vpow.pop %v1093
        %v1095 = vsel %vm1081, %v1092, 0.0
        %1096 = vadd.xlane.f32.xlu0 %v1095
        %v1097 = vpop.xlane.xlu0 %1096
        %v1098 = vsel %vm1085, %v1094, 0.0
        %1099 = vadd.xlane.f32.xlu0 %v1098
        %v1100 = vpop.xlane.xlu0 %1099
        %v1101 = vrcp.pop %v1097
        %v1102 = vrcp.pop %v1100
        %v1103 = vmul.f32 %v1092, %v1101
        %v1104 = vmul.f32 %v1094, %v1102
        %v1105 = vmul.f32 %v1028, %v641
        %v1106 = vmul.f32 %v1031, %v641
        %v1107 = vpack.c.bf16 %v1106, %v1105
        %v1108 = vpack.c.bf16 %v1104, %v1103
        %v1109 = vmul.f32 %v987, %v646
        %v1110 = vmul.f32 %v991, %v646
        %v1111 = vpack.c.bf16 %v1110, %v1109
        %1112 = vmatprep.subr.bf16.mxu0 0
        %1113 = vmatpush1.bf16.xpose.msra.mxu0 %v1111
        %1114 = vmatprep.subr.bf16.mxu0 0
        %1115 = vmatpush1.bf16.xpose.msra.mxu0 0
        %1116 = vmatprep.subr.bf16.mxu0 0
        %1117 = vmatpush1.bf16.xpose.msra.mxu0 0
        %1118 = vmatprep.subr.bf16.mxu0 0
        %1119 = vmatpush1.bf16.xpose.msra.mxu0 0
        %1120 = vmatprep.subr.bf16.mxu0 0
        %1121 = vmatpush1.bf16.xpose.msra.mxu0 0
        %1122 = vmatprep.subr.bf16.mxu0 0
        %1123 = vmatpush1.bf16.xpose.msra.mxu0 0
        %1124 = vmatprep.subr.bf16.mxu0 0
        %1125 = vmatpush1.bf16.xpose.msra.mxu0 0
        %1126 = vmatprep.subr.bf16.mxu0 0
        %1127 = vmatpush1.bf16.xpose.msra.mxu0 0
        %1128 = vmatprep.subr.bf16.mxu0 0
        %1129 = vmatpush1.bf16.xpose.msra.mxu0 0
        %1130 = vmatprep.subr.bf16.mxu0 0
        %1131 = vmatpush1.bf16.xpose.msra.mxu0 0
        %1132 = vmatprep.subr.bf16.mxu0 0
        %1133 = vmatpush1.bf16.xpose.msra.mxu0 0
        %1134 = vmatprep.subr.bf16.mxu0 0
        %1135 = vmatpush1.bf16.xpose.msra.mxu0 0
        %1136 = vmatprep.subr.bf16.mxu0 0
        %1137 = vmatpush1.bf16.xpose.msra.mxu0 0
        %1138 = vmatprep.subr.bf16.mxu0 0
        %1139 = vmatpush1.bf16.xpose.msra.mxu0 0
        %1140 = vmatprep.subr.bf16.mxu0 0
        %1141 = vmatpush1.bf16.xpose.msra.mxu0 0
        %1142 = vmatprep.subr.bf16.mxu0 0
        %1143 = vmatpush1.bf16.xpose.msra.mxu0 0
        %1144 = vmatprep.mubr.bf16.mxu0 0
        %1145 = vmatmul.mubr.bf16.gmra.mrb[0].mxu0 %v1034
        %v1146 = vpop.f32.mrb[0].mxu0
        %v1147 = vadd.f32 0.0, %v1146
        %v1148 = vpop.f32.mrb[0].mxu0
        %v1149 = vpop.f32.mrb[0].mxu0
        %v1150 = vadd.f32 0.0, %v1149
        %v1151 = vpop.f32.mrb[0].mxu0
        %1152 = vdwg.mxu0
        %v1153 = vmul.f32 %v1147, 0.35355338
        %v1154 = vmul.f32 %v1150, 0.35355338
        %v1155 = vsel %vm1081, %v1153, -inf
        %1156 = vmax.xlane.f32.xlu0 %v1155
        %v1157 = vpop.xlane.xlu0 %1156
        %v1158 = vsel %vm1085, %v1154, -inf
        %1159 = vmax.xlane.f32.xlu0 %v1158
        %v1160 = vpop.xlane.xlu0 %1159
        %v1161 = vsub.f32 %v1153, %v1157
        %v1162 = vsub.f32 %v1154, %v1160
        %v1163 = vmul.f32 %v1161, 1.442695
        %v1164 = vpow.pop %v1163
        %v1165 = vmul.f32 %v1162, 1.442695
        %v1166 = vpow.pop %v1165
        %v1167 = vsel %vm1081, %v1164, 0.0
        %1168 = vadd.xlane.f32.xlu0 %v1167
        %v1169 = vpop.xlane.xlu0 %1168
        %v1170 = vsel %vm1085, %v1166, 0.0
        %1171 = vadd.xlane.f32.xlu0 %v1170
        %v1172 = vpop.xlane.xlu0 %1171
        %v1173 = vrcp.pop %v1169
        %v1174 = vrcp.pop %v1172
        %v1175 = vmul.f32 %v1164, %v1173
        %v1176 = vmul.f32 %v1166, %v1174
        %v1177 = vmul.f32 %v1028, %v646
        %v1178 = vmul.f32 %v1031, %v646
        %v1179 = vpack.c.bf16 %v1178, %v1177
        %v1180 = vpack.c.bf16 %v1176, %v1175
        %v1182 = vsel %vm1081, %v1180, 0
        %v1184 = vsel %vm718, 4294967295, 65535
        %v1185 = vsel %vm720, %v1184, 0
        %v1187 = vand.u32 %v1179, %v1185
        %1189 = vmatprep.subr.bf16.mxu0 0
        %1190 = vmatpush1.bf16.msra.mxu0 %v1187
        %1191 = vmatprep.subr.bf16.mxu0 0
        %1192 = vmatpush1.bf16.msra.mxu0 0
        %1193 = vmatprep.subr.bf16.mxu0 0
        %1194 = vmatpush1.bf16.msra.mxu0 0
        %1195 = vmatprep.subr.bf16.mxu0 0
        %1196 = vmatpush1.bf16.msra.mxu0 0
        %1197 = vmatprep.subr.bf16.mxu0 0
        %1198 = vmatpush1.bf16.msra.mxu0 0
        %1199 = vmatprep.subr.bf16.mxu0 0
        %1200 = vmatpush1.bf16.msra.mxu0 0
        %1201 = vmatprep.subr.bf16.mxu0 0
        %1202 = vmatpush1.bf16.msra.mxu0 0
        %1203 = vmatprep.subr.bf16.mxu0 0
        %1204 = vmatpush1.bf16.msra.mxu0 0
        %1205 = vmatprep.subr.bf16.mxu0 0
        %1206 = vmatpush1.bf16.msra.mxu0 0
        %1207 = vmatprep.subr.bf16.mxu0 0
        %1208 = vmatpush1.bf16.msra.mxu0 0
        %1209 = vmatprep.subr.bf16.mxu0 0
        %1210 = vmatpush1.bf16.msra.mxu0 0
        %1211 = vmatprep.subr.bf16.mxu0 0
        %1212 = vmatpush1.bf16.msra.mxu0 0
        %1213 = vmatprep.subr.bf16.mxu0 0
        %1214 = vmatpush1.bf16.msra.mxu0 0
        %1215 = vmatprep.subr.bf16.mxu0 0
        %1216 = vmatpush1.bf16.msra.mxu0 0
        %1217 = vmatprep.subr.bf16.mxu0 0
        %1218 = vmatpush1.bf16.msra.mxu0 0
        %1219 = vmatprep.subr.bf16.mxu0 0
        %1220 = vmatpush1.bf16.msra.mxu0 0
        %1221 = vmatprep.mubr.bf16.mxu0 0
        %1222 = vmatmul.mubr.bf16.gmra.mrb[0].mxu0 %v1182
        %v1223 = vpop.f32.mrb[0].mxu0
        %v1224 = vadd.f32 0.0, %v1223
        %v1225 = vpop.f32.mrb[0].mxu0
        %v1226 = vpop.f32.mrb[0].mxu0
        %v1227 = vadd.f32 0.0, %v1226
        %v1228 = vpop.f32.mrb[0].mxu0
        %1229 = vdwg.mxu0
        %v1231 = vsel %vm1081, %v1108, 0
        %v1234 = vand.u32 %v1107, %v1185
        %1236 = vmatprep.subr.bf16.mxu0 0
        %1237 = vmatpush1.bf16.msra.mxu0 %v1234
        %1238 = vmatprep.subr.bf16.mxu0 0
        %1239 = vmatpush1.bf16.msra.mxu0 0
        %1240 = vmatprep.subr.bf16.mxu0 0
        %1241 = vmatpush1.bf16.msra.mxu0 0
        %1242 = vmatprep.subr.bf16.mxu0 0
        %1243 = vmatpush1.bf16.msra.mxu0 0
        %1244 = vmatprep.subr.bf16.mxu0 0
        %1245 = vmatpush1.bf16.msra.mxu0 0
        %1246 = vmatprep.subr.bf16.mxu0 0
        %1247 = vmatpush1.bf16.msra.mxu0 0
        %1248 = vmatprep.subr.bf16.mxu0 0
        %1249 = vmatpush1.bf16.msra.mxu0 0
        %1250 = vmatprep.subr.bf16.mxu0 0
        %1251 = vmatpush1.bf16.msra.mxu0 0
        %1252 = vmatprep.subr.bf16.mxu0 0
        %1253 = vmatpush1.bf16.msra.mxu0 0
        %1254 = vmatprep.subr.bf16.mxu0 0
        %1255 = vmatpush1.bf16.msra.mxu0 0
        %1256 = vmatprep.subr.bf16.mxu0 0
        %1257 = vmatpush1.bf16.msra.mxu0 0
        %1258 = vmatprep.subr.bf16.mxu0 0
        %1259 = vmatpush1.bf16.msra.mxu0 0
        %1260 = vmatprep.subr.bf16.mxu0 0
        %1261 = vmatpush1.bf16.msra.mxu0 0
        %1262 = vmatprep.subr.bf16.mxu0 0
        %1263 = vmatpush1.bf16.msra.mxu0 0
        %1264 = vmatprep.subr.bf16.mxu0 0
        %1265 = vmatpush1.bf16.msra.mxu0 0
        %1266 = vmatprep.subr.bf16.mxu0 0
        %1267 = vmatpush1.bf16.msra.mxu0 0
        %1268 = vmatprep.mubr.bf16.mxu0 0
        %1269 = vmatmul.mubr.bf16.gmra.mrb[0].mxu0 %v1231
        %v1270 = vpop.f32.mrb[0].mxu0
        %v1271 = vadd.f32 %v1224, %v1270
        %v1272 = vpop.f32.mrb[0].mxu0
        %v1273 = vpop.f32.mrb[0].mxu0
        %v1274 = vadd.f32 %v1227, %v1273
        %v1275 = vpop.f32.mrb[0].mxu0
        %1276 = vdwg.mxu0
        %v1277 = vmul.f32 %v987, %v651
        %v1278 = vmul.f32 %v991, %v651
        %v1279 = vpack.c.bf16 %v1278, %v1277
        %1280 = vmatprep.subr.bf16.mxu0 0
        %1281 = vmatpush1.bf16.xpose.msra.mxu0 %v1279
        %1282 = vmatprep.subr.bf16.mxu0 0
        %1283 = vmatpush1.bf16.xpose.msra.mxu0 0
        %1284 = vmatprep.subr.bf16.mxu0 0
        %1285 = vmatpush1.bf16.xpose.msra.mxu0 0
        %1286 = vmatprep.subr.bf16.mxu0 0
        %1287 = vmatpush1.bf16.xpose.msra.mxu0 0
        %1288 = vmatprep.subr.bf16.mxu0 0
        %1289 = vmatpush1.bf16.xpose.msra.mxu0 0
        %1290 = vmatprep.subr.bf16.mxu0 0
        %1291 = vmatpush1.bf16.xpose.msra.mxu0 0
        %1292 = vmatprep.subr.bf16.mxu0 0
        %1293 = vmatpush1.bf16.xpose.msra.mxu0 0
        %1294 = vmatprep.subr.bf16.mxu0 0
        %1295 = vmatpush1.bf16.xpose.msra.mxu0 0
        %1296 = vmatprep.subr.bf16.mxu0 0
        %1297 = vmatpush1.bf16.xpose.msra.mxu0 0
        %1298 = vmatprep.subr.bf16.mxu0 0
        %1299 = vmatpush1.bf16.xpose.msra.mxu0 0
        %1300 = vmatprep.subr.bf16.mxu0 0
        %1301 = vmatpush1.bf16.xpose.msra.mxu0 0
        %1302 = vmatprep.subr.bf16.mxu0 0
        %1303 = vmatpush1.bf16.xpose.msra.mxu0 0
        %1304 = vmatprep.subr.bf16.mxu0 0
        %1305 = vmatpush1.bf16.xpose.msra.mxu0 0
        %1306 = vmatprep.subr.bf16.mxu0 0
        %1307 = vmatpush1.bf16.xpose.msra.mxu0 0
        %1308 = vmatprep.subr.bf16.mxu0 0
        %1309 = vmatpush1.bf16.xpose.msra.mxu0 0
        %1310 = vmatprep.subr.bf16.mxu0 0
        %1311 = vmatpush1.bf16.xpose.msra.mxu0 0
        %1312 = vmatprep.mubr.bf16.mxu0 0
        %1313 = vmatmul.mubr.bf16.gmra.mrb[0].mxu0 %v1034
        %v1314 = vpop.f32.mrb[0].mxu0
        %v1315 = vadd.f32 0.0, %v1314
        %v1316 = vpop.f32.mrb[0].mxu0
        %v1317 = vpop.f32.mrb[0].mxu0
        %v1318 = vadd.f32 0.0, %v1317
        %v1319 = vpop.f32.mrb[0].mxu0
        %1320 = vdwg.mxu0
        %v1321 = vmul.f32 %v1315, 0.35355338
        %v1322 = vmul.f32 %v1318, 0.35355338
        %v1323 = vsel %vm1081, %v1321, -inf
        %1324 = vmax.xlane.f32.xlu0 %v1323
        %v1325 = vpop.xlane.xlu0 %1324
        %v1326 = vsel %vm1085, %v1322, -inf
        %1327 = vmax.xlane.f32.xlu0 %v1326
        %v1328 = vpop.xlane.xlu0 %1327
        %v1329 = vsub.f32 %v1321, %v1325
        %v1330 = vsub.f32 %v1322, %v1328
        %v1331 = vmul.f32 %v1329, 1.442695
        %v1332 = vpow.pop %v1331
        %v1333 = vmul.f32 %v1330, 1.442695
        %v1334 = vpow.pop %v1333
        %v1335 = vsel %vm1081, %v1332, 0.0
        %1336 = vadd.xlane.f32.xlu0 %v1335
        %v1337 = vpop.xlane.xlu0 %1336
        %v1338 = vsel %vm1085, %v1334, 0.0
        %1339 = vadd.xlane.f32.xlu0 %v1338
        %v1340 = vpop.xlane.xlu0 %1339
        %v1341 = vrcp.pop %v1337
        %v1342 = vrcp.pop %v1340
        %v1343 = vmul.f32 %v1332, %v1341
        %v1344 = vmul.f32 %v1334, %v1342
        %v1345 = vmul.f32 %v1028, %v651
        %v1346 = vmul.f32 %v1031, %v651
        %v1347 = vpack.c.bf16 %v1346, %v1345
        %v1348 = vpack.c.bf16 %v1344, %v1343
        %v1350 = vsel %vm1081, %v1348, 0
        %v1353 = vand.u32 %v1347, %v1185
        %1355 = vmatprep.subr.bf16.mxu0 0
        %1356 = vmatpush1.bf16.msra.mxu0 %v1353
        %1357 = vmatprep.subr.bf16.mxu0 0
        %1358 = vmatpush1.bf16.msra.mxu0 0
        %1359 = vmatprep.subr.bf16.mxu0 0
        %1360 = vmatpush1.bf16.msra.mxu0 0
        %1361 = vmatprep.subr.bf16.mxu0 0
        %1362 = vmatpush1.bf16.msra.mxu0 0
        %1363 = vmatprep.subr.bf16.mxu0 0
        %1364 = vmatpush1.bf16.msra.mxu0 0
        %1365 = vmatprep.subr.bf16.mxu0 0
        %1366 = vmatpush1.bf16.msra.mxu0 0
        %1367 = vmatprep.subr.bf16.mxu0 0
        %1368 = vmatpush1.bf16.msra.mxu0 0
        %1369 = vmatprep.subr.bf16.mxu0 0
        %1370 = vmatpush1.bf16.msra.mxu0 0
        %1371 = vmatprep.subr.bf16.mxu0 0
        %1372 = vmatpush1.bf16.msra.mxu0 0
        %1373 = vmatprep.subr.bf16.mxu0 0
        %1374 = vmatpush1.bf16.msra.mxu0 0
        %1375 = vmatprep.subr.bf16.mxu0 0
        %1376 = vmatpush1.bf16.msra.mxu0 0
        %1377 = vmatprep.subr.bf16.mxu0 0
        %1378 = vmatpush1.bf16.msra.mxu0 0
        %1379 = vmatprep.subr.bf16.mxu0 0
        %1380 = vmatpush1.bf16.msra.mxu0 0
        %1381 = vmatprep.subr.bf16.mxu0 0
        %1382 = vmatpush1.bf16.msra.mxu0 0
        %1383 = vmatprep.subr.bf16.mxu0 0
        %1384 = vmatpush1.bf16.msra.mxu0 0
        %1385 = vmatprep.subr.bf16.mxu0 0
        %1386 = vmatpush1.bf16.msra.mxu0 0
        %1387 = vmatprep.mubr.bf16.mxu0 0
        %1388 = vmatmul.mubr.bf16.gmra.mrb[0].mxu0 %v1350
        %v1389 = vpop.f32.mrb[0].mxu0
        %v1390 = vadd.f32 0.0, %v1389
        %v1391 = vpop.f32.mrb[0].mxu0
        %v1392 = vpop.f32.mrb[0].mxu0
        %v1393 = vadd.f32 0.0, %v1392
        %v1394 = vpop.f32.mrb[0].mxu0
        %1395 = vdwg.mxu0
        %v1396 = vadd.f32 %v1271, %v1390
        %v1397 = vadd.f32 %v1274, %v1393
        %v1398 = vmul.f32 %v987, %v655
        %v1399 = vmul.f32 %v991, %v655
        %v1400 = vpack.c.bf16 %v1399, %v1398
        %1401 = vmatprep.subr.bf16.mxu0 0
        %1402 = vmatpush1.bf16.xpose.msra.mxu0 %v1400
        %1403 = vmatprep.subr.bf16.mxu0 0
        %1404 = vmatpush1.bf16.xpose.msra.mxu0 0
        %1405 = vmatprep.subr.bf16.mxu0 0
        %1406 = vmatpush1.bf16.xpose.msra.mxu0 0
        %1407 = vmatprep.subr.bf16.mxu0 0
        %1408 = vmatpush1.bf16.xpose.msra.mxu0 0
        %1409 = vmatprep.subr.bf16.mxu0 0
        %1410 = vmatpush1.bf16.xpose.msra.mxu0 0
        %1411 = vmatprep.subr.bf16.mxu0 0
        %1412 = vmatpush1.bf16.xpose.msra.mxu0 0
        %1413 = vmatprep.subr.bf16.mxu0 0
        %1414 = vmatpush1.bf16.xpose.msra.mxu0 0
        %1415 = vmatprep.subr.bf16.mxu0 0
        %1416 = vmatpush1.bf16.xpose.msra.mxu0 0
        %1417 = vmatprep.subr.bf16.mxu0 0
        %1418 = vmatpush1.bf16.xpose.msra.mxu0 0
        %1419 = vmatprep.subr.bf16.mxu0 0
        %1420 = vmatpush1.bf16.xpose.msra.mxu0 0
        %1421 = vmatprep.subr.bf16.mxu0 0
        %1422 = vmatpush1.bf16.xpose.msra.mxu0 0
        %1423 = vmatprep.subr.bf16.mxu0 0
        %1424 = vmatpush1.bf16.xpose.msra.mxu0 0
        %1425 = vmatprep.subr.bf16.mxu0 0
        %1426 = vmatpush1.bf16.xpose.msra.mxu0 0
        %1427 = vmatprep.subr.bf16.mxu0 0
        %1428 = vmatpush1.bf16.xpose.msra.mxu0 0
        %1429 = vmatprep.subr.bf16.mxu0 0
        %1430 = vmatpush1.bf16.xpose.msra.mxu0 0
        %1431 = vmatprep.subr.bf16.mxu0 0
        %1432 = vmatpush1.bf16.xpose.msra.mxu0 0
        %1433 = vmatprep.mubr.bf16.mxu0 0
        %1434 = vmatmul.mubr.bf16.gmra.mrb[0].mxu0 %v1034
        %v1435 = vpop.f32.mrb[0].mxu0
        %v1436 = vadd.f32 0.0, %v1435
        %v1437 = vpop.f32.mrb[0].mxu0
        %v1438 = vpop.f32.mrb[0].mxu0
        %v1439 = vadd.f32 0.0, %v1438
        %v1440 = vpop.f32.mrb[0].mxu0
        %1441 = vdwg.mxu0
        %v1442 = vmul.f32 %v1436, 0.35355338
        %v1443 = vmul.f32 %v1439, 0.35355338
        %v1444 = vsel %vm1081, %v1442, -inf
        %1445 = vmax.xlane.f32.xlu0 %v1444
        %v1446 = vpop.xlane.xlu0 %1445
        %v1447 = vsel %vm1085, %v1443, -inf
        %1448 = vmax.xlane.f32.xlu0 %v1447
        %v1449 = vpop.xlane.xlu0 %1448
        %v1450 = vsub.f32 %v1442, %v1446
        %v1451 = vsub.f32 %v1443, %v1449
        %v1452 = vmul.f32 %v1450, 1.442695
        %v1453 = vpow.pop %v1452
        %v1454 = vmul.f32 %v1451, 1.442695
        %v1455 = vpow.pop %v1454
        %v1456 = vsel %vm1081, %v1453, 0.0
        %1457 = vadd.xlane.f32.xlu0 %v1456
        %v1458 = vpop.xlane.xlu0 %1457
        %v1459 = vsel %vm1085, %v1455, 0.0
        %1460 = vadd.xlane.f32.xlu0 %v1459
        %v1461 = vpop.xlane.xlu0 %1460
        %v1462 = vrcp.pop %v1458
        %v1463 = vrcp.pop %v1461
        %v1464 = vmul.f32 %v1453, %v1462
        %v1465 = vmul.f32 %v1455, %v1463
        %v1466 = vmul.f32 %v1028, %v655
        %v1467 = vmul.f32 %v1031, %v655
        %v1468 = vpack.c.bf16 %v1467, %v1466
        %v1469 = vpack.c.bf16 %v1465, %v1464
        %v1471 = vsel %vm1081, %v1469, 0
        %v1474 = vand.u32 %v1468, %v1185
        %1476 = vmatprep.subr.bf16.mxu0 0
        %1477 = vmatpush1.bf16.msra.mxu0 %v1474
        %1478 = vmatprep.subr.bf16.mxu0 0
        %1479 = vmatpush1.bf16.msra.mxu0 0
        %1480 = vmatprep.subr.bf16.mxu0 0
        %1481 = vmatpush1.bf16.msra.mxu0 0
        %1482 = vmatprep.subr.bf16.mxu0 0
        %1483 = vmatpush1.bf16.msra.mxu0 0
        %1484 = vmatprep.subr.bf16.mxu0 0
        %1485 = vmatpush1.bf16.msra.mxu0 0
        %1486 = vmatprep.subr.bf16.mxu0 0
        %1487 = vmatpush1.bf16.msra.mxu0 0
        %1488 = vmatprep.subr.bf16.mxu0 0
        %1489 = vmatpush1.bf16.msra.mxu0 0
        %1490 = vmatprep.subr.bf16.mxu0 0
        %1491 = vmatpush1.bf16.msra.mxu0 0
        %1492 = vmatprep.subr.bf16.mxu0 0
        %1493 = vmatpush1.bf16.msra.mxu0 0
        %1494 = vmatprep.subr.bf16.mxu0 0
        %1495 = vmatpush1.bf16.msra.mxu0 0
        %1496 = vmatprep.subr.bf16.mxu0 0
        %1497 = vmatpush1.bf16.msra.mxu0 0
        %1498 = vmatprep.subr.bf16.mxu0 0
        %1499 = vmatpush1.bf16.msra.mxu0 0
        %1500 = vmatprep.subr.bf16.mxu0 0
        %1501 = vmatpush1.bf16.msra.mxu0 0
        %1502 = vmatprep.subr.bf16.mxu0 0
        %1503 = vmatpush1.bf16.msra.mxu0 0
        %1504 = vmatprep.subr.bf16.mxu0 0
        %1505 = vmatpush1.bf16.msra.mxu0 0
        %1506 = vmatprep.subr.bf16.mxu0 0
        %1507 = vmatpush1.bf16.msra.mxu0 0
        %1508 = vmatprep.mubr.bf16.mxu0 0
        %1509 = vmatmul.mubr.bf16.gmra.mrb[0].mxu0 %v1471
        %v1510 = vpop.f32.mrb[0].mxu0
        %v1511 = vadd.f32 0.0, %v1510
        %v1512 = vpop.f32.mrb[0].mxu0
        %v1513 = vpop.f32.mrb[0].mxu0
        %v1514 = vadd.f32 0.0, %v1513
        %v1515 = vpop.f32.mrb[0].mxu0
        %1516 = vdwg.mxu0
        %v1517 = vadd.f32 %v1396, %v1511
        %v1518 = vadd.f32 %v1397, %v1514
        %v1519 = vpack.c.bf16 %v1518, %v1517
        %v1520 = vld [vmem:[#allocation12] sm:$0xf]
        %v1521 = vld [vmem:[#allocation12 + $0x4] sm:$0xf]
        %v1522 = vld [vmem:[#allocation12 + $0x8] sm:$0xf]
        %v1523 = vld [vmem:[#allocation12 + $0xc] sm:$0xf]
        %v1524 = vld [vmem:[#allocation12 + $0x10] sm:$0xf]
        %v1525 = vld [vmem:[#allocation12 + $0x14] sm:$0xf]
        %v1526 = vld [vmem:[#allocation12 + $0x18] sm:$0xf]
        %v1527 = vld [vmem:[#allocation12 + $0x1c] sm:$0xf]
        %v1528 = vld [vmem:[#allocation12 + $0x20] sm:$0xf]
        %v1529 = vld [vmem:[#allocation12 + $0x24] sm:$0xf]
        %v1530 = vld [vmem:[#allocation12 + $0x28] sm:$0xf]
        %v1531 = vld [vmem:[#allocation12 + $0x2c] sm:$0xf]
        %v1532 = vld [vmem:[#allocation12 + $0x30] sm:$0xf]
        %v1533 = vld [vmem:[#allocation12 + $0x34] sm:$0xf]
        %v1534 = vld [vmem:[#allocation12 + $0x38] sm:$0xf]
        %v1535 = vld [vmem:[#allocation12 + $0x3c] sm:$0xf]
        %v1552 = vunpack.c.l.b16 %v1520
        %v1553 = vunpack.c.l.b16 %v1521
        %v1554 = vunpack.c.l.b16 %v1522
        %v1555 = vunpack.c.l.b16 %v1523
        %v1556 = vunpack.c.l.b16 %v1524
        %v1557 = vunpack.c.l.b16 %v1525
        %v1558 = vunpack.c.l.b16 %v1526
        %v1559 = vunpack.c.l.b16 %v1527
        %v1560 = vunpack.c.l.b16 %v1528
        %v1561 = vunpack.c.l.b16 %v1529
        %v1562 = vunpack.c.l.b16 %v1530
        %v1563 = vunpack.c.l.b16 %v1531
        %v1564 = vunpack.c.l.b16 %v1532
        %v1565 = vunpack.c.l.b16 %v1533
        %v1566 = vunpack.c.l.b16 %v1534
        %v1567 = vunpack.c.l.b16 %v1535
        %v1568 = vpack.c.b16 %v1553, %v1552
        %v1569 = vpack.c.b16 %v1555, %v1554
        %v1570 = vpack.c.b16 %v1557, %v1556
        %v1571 = vpack.c.b16 %v1559, %v1558
        %v1572 = vpack.c.b16 %v1561, %v1560
        %v1573 = vpack.c.b16 %v1563, %v1562
        %v1574 = vpack.c.b16 %v1565, %v1564
        %v1575 = vpack.c.b16 %v1567, %v1566
        %1584 = vmatprep.subr.bf16.mxu0 0
        %1585 = vmatpush1.bf16.msra.mxu0 %v1568
        %1586 = vmatprep.subr.bf16.mxu0 0
        %1587 = vmatpush1.bf16.msra.mxu0 %v1569
        %1588 = vmatprep.subr.bf16.mxu0 0
        %1589 = vmatpush1.bf16.msra.mxu0 %v1570
        %1590 = vmatprep.subr.bf16.mxu0 0
        %1591 = vmatpush1.bf16.msra.mxu0 %v1571
        %1592 = vmatprep.subr.bf16.mxu0 0
        %1593 = vmatpush1.bf16.msra.mxu0 %v1572
        %1594 = vmatprep.subr.bf16.mxu0 0
        %1595 = vmatpush1.bf16.msra.mxu0 %v1573
        %1596 = vmatprep.subr.bf16.mxu0 0
        %1597 = vmatpush1.bf16.msra.mxu0 %v1574
        %1598 = vmatprep.subr.bf16.mxu0 0
        %1599 = vmatpush1.bf16.msra.mxu0 %v1575
        %1600 = vmatprep.subr.bf16.mxu0 0
        %1601 = vmatpush1.bf16.msra.mxu0 0
        %1602 = vmatprep.subr.bf16.mxu0 0
        %1603 = vmatpush1.bf16.msra.mxu0 0
        %1604 = vmatprep.subr.bf16.mxu0 0
        %1605 = vmatpush1.bf16.msra.mxu0 0
        %1606 = vmatprep.subr.bf16.mxu0 0
        %1607 = vmatpush1.bf16.msra.mxu0 0
        %1608 = vmatprep.subr.bf16.mxu0 0
        %1609 = vmatpush1.bf16.msra.mxu0 0
        %1610 = vmatprep.subr.bf16.mxu0 0
        %1611 = vmatpush1.bf16.msra.mxu0 0
        %1612 = vmatprep.subr.bf16.mxu0 0
        %1613 = vmatpush1.bf16.msra.mxu0 0
        %1614 = vmatprep.subr.bf16.mxu0 0
        %1615 = vmatpush1.bf16.msra.mxu0 0
        %1616 = vmatprep.mubr.bf16.mxu0 0
        %1617 = vmatmul.mubr.bf16.gmra.mrb[0].mxu0 %v1519
        %v1618 = vpop.f32.mrb[0].mxu0
        %v1619 = vadd.f32 0.0, %v1618
        %v1620 = vpop.f32.mrb[0].mxu0
        %v1621 = vpop.f32.mrb[0].mxu0
        %v1622 = vadd.f32 0.0, %v1621
        %v1623 = vpop.f32.mrb[0].mxu0
        %1624 = vdwg.mxu0
        %v1625 = vadd.f32 %v726, %v1619
        %v1626 = vadd.f32 %v727, %v1622
        %v1627 = vld [vmem:[%s9] sm:$0x1]
        %v1629 = vlaneseq
        %v1630 = vshrl.u32 %v1629, 7
        %v1631 = vsub.s32 0, %v1630
        %v1632 = vrot.slane %v1627, %v1631
        %v1634 = vadd.f32 %v1625, %v1632
        %v1635 = vadd.f32 %v1626, %v1632
        %v1636 = vld [vmem:[%s10] sm:$0x1]
        %v1637 = vld [vmem:[%s11] sm:$0x1]
        %1638 = vadd.xlane.f32.xlu0 %v1634
        %v1639 = vpop.xlane.xlu0 %1638
        %v1640 = vsel %vm712, %v1635, 0.0
        %1641 = vadd.xlane.f32.xlu0 %v1640
        %v1642 = vpop.xlane.xlu0 %1641
        %v1643 = vmul.f32 %v1639, 0.03125
        %v1644 = vmul.f32 %v1642, 0.03125
        %v1645 = vsub.f32 %v1634, %v1643
        %v1646 = vsub.f32 %v1635, %v1644
        %v1647 = vmul.f32 %v1645, %v636
        %v1648 = vmul.f32 %v1646, %v636
        %v1649 = vmul.f32 %v1647, %v1647
        %v1650 = vmul.f32 %v1648, %v1648
        %1651 = vadd.xlane.f32.xlu0 %v1649
        %v1652 = vpop.xlane.xlu0 %1651
        %v1653 = vsel %vm712, %v1650, 0.0
        %1654 = vadd.xlane.f32.xlu0 %v1653
        %v1655 = vpop.xlane.xlu0 %1654
        %v1656 = vmul.f32 %v1652, 0.03125
        %v1657 = vmul.f32 %v1655, 0.03125
        %v1658 = vadd.f32 %v1656, 1e-05
        %v1659 = vadd.f32 %v1657, 1e-05
        %v1660 = vrsqrt.pop %v1658
        %v1661 = vrsqrt.pop %v1659
        %v1662 = vmul.f32 %v1647, %v1660
        %v1663 = vmul.f32 %v1648, %v1661
        %v1665 = vlaneseq
        %v1666 = vshrl.u32 %v1665, 7
        %v1667 = vsub.s32 0, %v1666
        %v1668 = vrot.slane %v1636, %v1667
        %v1670 = vmul.f32 %v1662, %v1668
        %v1671 = vmul.f32 %v1663, %v1668
        %v1673 = vlaneseq
        %v1674 = vshrl.u32 %v1673, 7
        %v1675 = vsub.s32 0, %v1674
        %v1676 = vrot.slane %v1637, %v1675
        %v1678 = vadd.f32 %v1670, %v1676
        %v1679 = vadd.f32 %v1671, %v1676
        %v1680 = vpack.c.bf16 %v1679, %v1678
        %v1681 = vld [vmem:[#allocation13] sm:$0xf]
        %v1682 = vld [vmem:[#allocation13 + $0x4] sm:$0xf]
        %v1683 = vld [vmem:[#allocation13 + $0x8] sm:$0xf]
        %v1684 = vld [vmem:[#allocation13 + $0xc] sm:$0xf]
        %v1685 = vld [vmem:[#allocation13 + $0x10] sm:$0xf]
        %v1686 = vld [vmem:[#allocation13 + $0x14] sm:$0xf]
        %v1687 = vld [vmem:[#allocation13 + $0x18] sm:$0xf]
        %v1688 = vld [vmem:[#allocation13 + $0x1c] sm:$0xf]
        %v1689 = vld [vmem:[#allocation13 + $0x20] sm:$0xf]
        %v1690 = vld [vmem:[#allocation13 + $0x24] sm:$0xf]
        %v1691 = vld [vmem:[#allocation13 + $0x28] sm:$0xf]
        %v1692 = vld [vmem:[#allocation13 + $0x2c] sm:$0xf]
        %v1693 = vld [vmem:[#allocation13 + $0x30] sm:$0xf]
        %v1694 = vld [vmem:[#allocation13 + $0x34] sm:$0xf]
        %v1695 = vld [vmem:[#allocation13 + $0x38] sm:$0xf]
        %v1696 = vld [vmem:[#allocation13 + $0x3c] sm:$0xf]
        %v1697 = vld [vmem:[%s13] sm:$0x1]
        %v1699 = vlaneseq
        %v1700 = vshrl.u32 %v1699, 7
        %v1701 = vsub.s32 0, %v1700
        %v1702 = vrot.slane %v1697, %v1701
        %v1720 = vunpack.c.l.b16 %v1681
        %v1721 = vunpack.c.l.b16 %v1682
        %v1722 = vunpack.c.l.b16 %v1683
        %v1723 = vunpack.c.l.b16 %v1684
        %v1724 = vunpack.c.l.b16 %v1685
        %v1725 = vunpack.c.l.b16 %v1686
        %v1726 = vunpack.c.l.b16 %v1687
        %v1727 = vunpack.c.l.b16 %v1688
        %v1728 = vunpack.c.l.b16 %v1689
        %v1729 = vunpack.c.l.b16 %v1690
        %v1730 = vunpack.c.l.b16 %v1691
        %v1731 = vunpack.c.l.b16 %v1692
        %v1732 = vunpack.c.l.b16 %v1693
        %v1733 = vunpack.c.l.b16 %v1694
        %v1734 = vunpack.c.l.b16 %v1695
        %v1735 = vunpack.c.l.b16 %v1696
        %v1736 = vpack.c.b16 %v1721, %v1720
        %v1737 = vpack.c.b16 %v1723, %v1722
        %v1738 = vpack.c.b16 %v1725, %v1724
        %v1739 = vpack.c.b16 %v1727, %v1726
        %v1740 = vpack.c.b16 %v1729, %v1728
        %v1741 = vpack.c.b16 %v1731, %v1730
        %v1742 = vpack.c.b16 %v1733, %v1732
        %v1743 = vpack.c.b16 %v1735, %v1734
        %1752 = vmatprep.subr.bf16.mxu0 0
        %1753 = vmatpush1.bf16.msra.mxu0 %v1736
        %1754 = vmatprep.subr.bf16.mxu0 0
        %1755 = vmatpush1.bf16.msra.mxu0 %v1737
        %1756 = vmatprep.subr.bf16.mxu0 0
        %1757 = vmatpush1.bf16.msra.mxu0 %v1738
        %1758 = vmatprep.subr.bf16.mxu0 0
        %1759 = vmatpush1.bf16.msra.mxu0 %v1739
        %1760 = vmatprep.subr.bf16.mxu0 0
        %1761 = vmatpush1.bf16.msra.mxu0 %v1740
        %1762 = vmatprep.subr.bf16.mxu0 0
        %1763 = vmatpush1.bf16.msra.mxu0 %v1741
        %1764 = vmatprep.subr.bf16.mxu0 0
        %1765 = vmatpush1.bf16.msra.mxu0 %v1742
        %1766 = vmatprep.subr.bf16.mxu0 0
        %1767 = vmatpush1.bf16.msra.mxu0 %v1743
        %1768 = vmatprep.subr.bf16.mxu0 0
        %1769 = vmatpush1.bf16.msra.mxu0 0
        %1770 = vmatprep.subr.bf16.mxu0 0
        %1771 = vmatpush1.bf16.msra.mxu0 0
        %1772 = vmatprep.subr.bf16.mxu0 0
        %1773 = vmatpush1.bf16.msra.mxu0 0
        %1774 = vmatprep.subr.bf16.mxu0 0
        %1775 = vmatpush1.bf16.msra.mxu0 0
        %1776 = vmatprep.subr.bf16.mxu0 0
        %1777 = vmatpush1.bf16.msra.mxu0 0
        %1778 = vmatprep.subr.bf16.mxu0 0
        %1779 = vmatpush1.bf16.msra.mxu0 0
        %1780 = vmatprep.subr.bf16.mxu0 0
        %1781 = vmatpush1.bf16.msra.mxu0 0
        %1782 = vmatprep.subr.bf16.mxu0 0
        %1783 = vmatpush1.bf16.msra.mxu0 0
        %1784 = vmatprep.mubr.bf16.mxu0 0
        %1785 = vmatmul.mubr.bf16.gmra.mrb[0].mxu0 %v1680
        %v1786 = vpop.f32.mrb[0].mxu0
        %v1787 = vadd.f32 %v1702, %v1786
        %v1788 = vpop.f32.mrb[0].mxu0
        %v1789 = vpop.f32.mrb[0].mxu0
        %v1790 = vadd.f32 %v1702, %v1789
        %v1791 = vpop.f32.mrb[0].mxu0
        %1792 = vdwg.mxu0
        %v1793 = vmul.f32 %v1787, %v1787
        %v1794 = vmul.f32 %v1790, %v1790
        %v1795 = vmul.f32 %v1787, %v1793
        %v1796 = vmul.f32 %v1790, %v1794
        %v1797 = vmul.f32 %v1795, 0.044715
        %v1798 = vmul.f32 %v1796, 0.044715
        %v1799 = vadd.f32 %v1787, %v1797
        %v1800 = vadd.f32 %v1790, %v1798
        %v1801 = vmul.f32 %v1799, 0.7978846
        %v1802 = vmul.f32 %v1800, 0.7978846
        %v1803 = vtanh.pop %v1801
        %v1804 = vtanh.pop %v1802
        %v1805 = vadd.f32 %v1803, 1.0
        %v1806 = vadd.f32 %v1804, 1.0
        %v1807 = vmul.f32 %v1805, 0.5
        %v1808 = vmul.f32 %v1806, 0.5
        %v1809 = vmul.f32 %v1787, %v1807
        %v1810 = vmul.f32 %v1790, %v1808
        %v1811 = vpack.c.bf16 %v1810, %v1809
        %v1812 = vld [vmem:[#allocation15] sm:$0xf]
        %v1813 = vld [vmem:[#allocation15 + $0x4] sm:$0xf]
        %v1814 = vld [vmem:[#allocation15 + $0x8] sm:$0xf]
        %v1815 = vld [vmem:[#allocation15 + $0xc] sm:$0xf]
        %v1816 = vld [vmem:[#allocation15 + $0x10] sm:$0xf]
        %v1817 = vld [vmem:[#allocation15 + $0x14] sm:$0xf]
        %v1818 = vld [vmem:[#allocation15 + $0x18] sm:$0xf]
        %v1819 = vld [vmem:[#allocation15 + $0x1c] sm:$0xf]
        %v1820 = vld [vmem:[#allocation15 + $0x20] sm:$0xf]
        %v1821 = vld [vmem:[#allocation15 + $0x24] sm:$0xf]
        %v1822 = vld [vmem:[#allocation15 + $0x28] sm:$0xf]
        %v1823 = vld [vmem:[#allocation15 + $0x2c] sm:$0xf]
        %v1824 = vld [vmem:[#allocation15 + $0x30] sm:$0xf]
        %v1825 = vld [vmem:[#allocation15 + $0x34] sm:$0xf]
        %v1826 = vld [vmem:[#allocation15 + $0x38] sm:$0xf]
        %v1827 = vld [vmem:[#allocation15 + $0x3c] sm:$0xf]
        %v1828 = vld [vmem:[%s15] sm:$0x1]
        %v1830 = vlaneseq
        %v1831 = vshrl.u32 %v1830, 7
        %v1832 = vsub.s32 0, %v1831
        %v1833 = vrot.slane %v1828, %v1832
        %v1851 = vunpack.c.l.b16 %v1812
        %v1852 = vunpack.c.l.b16 %v1813
        %v1853 = vunpack.c.l.b16 %v1814
        %v1854 = vunpack.c.l.b16 %v1815
        %v1855 = vunpack.c.l.b16 %v1816
        %v1856 = vunpack.c.l.b16 %v1817
        %v1857 = vunpack.c.l.b16 %v1818
        %v1858 = vunpack.c.l.b16 %v1819
        %v1859 = vunpack.c.l.b16 %v1820
        %v1860 = vunpack.c.l.b16 %v1821
        %v1861 = vunpack.c.l.b16 %v1822
        %v1862 = vunpack.c.l.b16 %v1823
        %v1863 = vunpack.c.l.b16 %v1824
        %v1864 = vunpack.c.l.b16 %v1825
        %v1865 = vunpack.c.l.b16 %v1826
        %v1866 = vunpack.c.l.b16 %v1827
        %v1867 = vpack.c.b16 %v1852, %v1851
        %v1868 = vpack.c.b16 %v1854, %v1853
        %v1869 = vpack.c.b16 %v1856, %v1855
        %v1870 = vpack.c.b16 %v1858, %v1857
        %v1871 = vpack.c.b16 %v1860, %v1859
        %v1872 = vpack.c.b16 %v1862, %v1861
        %v1873 = vpack.c.b16 %v1864, %v1863
        %v1874 = vpack.c.b16 %v1866, %v1865
        %1883 = vmatprep.subr.bf16.mxu0 0
        %1884 = vmatpush1.bf16.msra.mxu0 %v1867
        %1885 = vmatprep.subr.bf16.mxu0 0
        %1886 = vmatpush1.bf16.msra.mxu0 %v1868
        %1887 = vmatprep.subr.bf16.mxu0 0
        %1888 = vmatpush1.bf16.msra.mxu0 %v1869
        %1889 = vmatprep.subr.bf16.mxu0 0
        %1890 = vmatpush1.bf16.msra.mxu0 %v1870
        %1891 = vmatprep.subr.bf16.mxu0 0
        %1892 = vmatpush1.bf16.msra.mxu0 %v1871
        %1893 = vmatprep.subr.bf16.mxu0 0
        %1894 = vmatpush1.bf16.msra.mxu0 %v1872
        %1895 = vmatprep.subr.bf16.mxu0 0
        %1896 = vmatpush1.bf16.msra.mxu0 %v1873
        %1897 = vmatprep.subr.bf16.mxu0 0
        %1898 = vmatpush1.bf16.msra.mxu0 %v1874
        %1899 = vmatprep.subr.bf16.mxu0 0
        %1900 = vmatpush1.bf16.msra.mxu0 0
        %1901 = vmatprep.subr.bf16.mxu0 0
        %1902 = vmatpush1.bf16.msra.mxu0 0
        %1903 = vmatprep.subr.bf16.mxu0 0
        %1904 = vmatpush1.bf16.msra.mxu0 0
        %1905 = vmatprep.subr.bf16.mxu0 0
        %1906 = vmatpush1.bf16.msra.mxu0 0
        %1907 = vmatprep.subr.bf16.mxu0 0
        %1908 = vmatpush1.bf16.msra.mxu0 0
        %1909 = vmatprep.subr.bf16.mxu0 0
        %1910 = vmatpush1.bf16.msra.mxu0 0
        %1911 = vmatprep.subr.bf16.mxu0 0
        %1912 = vmatpush1.bf16.msra.mxu0 0
        %1913 = vmatprep.subr.bf16.mxu0 0
        %1914 = vmatpush1.bf16.msra.mxu0 0
        %1915 = vmatprep.mubr.bf16.mxu0 0
        %1916 = vmatmul.mubr.bf16.gmra.mrb[0].mxu0 %v1811
        %v1917 = vpop.f32.mrb[0].mxu0
        %v1918 = vadd.f32 %v1833, %v1917
        %v1919 = vpop.f32.mrb[0].mxu0
        %v1920 = vpop.f32.mrb[0].mxu0
        %v1921 = vadd.f32 %v1833, %v1920
        %v1922 = vpop.f32.mrb[0].mxu0
        %1923 = vdwg.mxu0
        %v1924 = vadd.f32 %v1634, %v1918
        %v1925 = vadd.f32 %v1635, %v1921
        %s1926 = scalar_lea.vmem %s4, 1
        %v1927 = vld [vmem:[%s1926] sm:$0x1]
        %s1928 = scalar_lea.vmem %s5, 1
        %v1929 = vld [vmem:[%s1928] sm:$0x1]
        %1930 = vadd.xlane.f32.xlu0 %v1924
        %v1931 = vpop.xlane.xlu0 %1930
        %v1932 = vsel %vm712, %v1925, 0.0
        %1933 = vadd.xlane.f32.xlu0 %v1932
        %v1934 = vpop.xlane.xlu0 %1933
        %v1935 = vmul.f32 %v1931, 0.03125
        %v1936 = vmul.f32 %v1934, 0.03125
        %v1937 = vsub.f32 %v1924, %v1935
        %v1938 = vsub.f32 %v1925, %v1936
        %v1939 = vmul.f32 %v1937, %v636
        %v1940 = vmul.f32 %v1938, %v636
        %v1941 = vmul.f32 %v1939, %v1939
        %v1942 = vmul.f32 %v1940, %v1940
        %1943 = vadd.xlane.f32.xlu0 %v1941
        %v1944 = vpop.xlane.xlu0 %1943
        %v1945 = vsel %vm712, %v1942, 0.0
        %1946 = vadd.xlane.f32.xlu0 %v1945
        %v1947 = vpop.xlane.xlu0 %1946
        %v1948 = vmul.f32 %v1944, 0.03125
        %v1949 = vmul.f32 %v1947, 0.03125
        %v1950 = vadd.f32 %v1948, 1e-05
        %v1951 = vadd.f32 %v1949, 1e-05
        %v1952 = vrsqrt.pop %v1950
        %v1953 = vrsqrt.pop %v1951
        %v1954 = vmul.f32 %v1939, %v1952
        %v1955 = vmul.f32 %v1940, %v1953
        %v1957 = vlaneseq
        %v1958 = vshrl.u32 %v1957, 7
        %v1959 = vsub.s32 0, %v1958
        %v1960 = vrot.slane %v1927, %v1959
        %v1962 = vmul.f32 %v1954, %v1960
        %v1963 = vmul.f32 %v1955, %v1960
        %v1965 = vlaneseq
        %v1966 = vshrl.u32 %v1965, 7
        %v1967 = vsub.s32 0, %v1966
        %v1968 = vrot.slane %v1929, %v1967
        %v1970 = vadd.f32 %v1962, %v1968
        %v1971 = vadd.f32 %v1963, %v1968
        %v1972 = vpack.c.bf16 %v1971, %v1970
        %s1973 = scalar_lea.vmem [#allocation10], 192
        %v1974 = vld [vmem:[%s1973] sm:$0xff]
        %v1975 = vld [vmem:[%s1973 + $0x8] sm:$0xf]
        %v1976 = vld [vmem:[%s1973 + $0xc] sm:$0xff]
        %v1977 = vld [vmem:[%s1973 + $0x14] sm:$0xf]
        %v1978 = vld [vmem:[%s1973 + $0x18] sm:$0xff]
        %v1979 = vld [vmem:[%s1973 + $0x20] sm:$0xf]
        %v1980 = vld [vmem:[%s1973 + $0x24] sm:$0xff]
        %v1981 = vld [vmem:[%s1973 + $0x2c] sm:$0xf]
        %v1982 = vld [vmem:[%s1973 + $0x30] sm:$0xff]
        %v1983 = vld [vmem:[%s1973 + $0x38] sm:$0xf]
        %v1984 = vld [vmem:[%s1973 + $0x3c] sm:$0xff]
        %v1985 = vld [vmem:[%s1973 + $0x44] sm:$0xf]
        %v1986 = vld [vmem:[%s1973 + $0x48] sm:$0xff]
        %v1987 = vld [vmem:[%s1973 + $0x50] sm:$0xf]
        %v1988 = vld [vmem:[%s1973 + $0x54] sm:$0xff]
        %v1989 = vld [vmem:[%s1973 + $0x5c] sm:$0xf]
        %v1990 = vld [vmem:[%s1973 + $0x60] sm:$0xff]
        %v1991 = vld [vmem:[%s1973 + $0x68] sm:$0xf]
        %v1992 = vld [vmem:[%s1973 + $0x6c] sm:$0xff]
        %v1993 = vld [vmem:[%s1973 + $0x74] sm:$0xf]
        %v1994 = vld [vmem:[%s1973 + $0x78] sm:$0xff]
        %v1995 = vld [vmem:[%s1973 + $0x80] sm:$0xf]
        %v1996 = vld [vmem:[%s1973 + $0x84] sm:$0xff]
        %v1997 = vld [vmem:[%s1973 + $0x8c] sm:$0xf]
        %v1998 = vld [vmem:[%s1973 + $0x90] sm:$0xff]
        %v1999 = vld [vmem:[%s1973 + $0x98] sm:$0xf]
        %v2000 = vld [vmem:[%s1973 + $0x9c] sm:$0xff]
        %v2001 = vld [vmem:[%s1973 + $0xa4] sm:$0xf]
        %v2002 = vld [vmem:[%s1973 + $0xa8] sm:$0xff]
        %v2003 = vld [vmem:[%s1973 + $0xb0] sm:$0xf]
        %v2004 = vld [vmem:[%s1973 + $0xb4] sm:$0xff]
        %v2005 = vld [vmem:[%s1973 + $0xbc] sm:$0xf]
        %s2006 = scalar_lea.vmem %s7, 3
        %v2007 = vld [vmem:[%s2006] sm:$0x7]
        %v2009 = vlaneseq
        %v2010 = vshrl.u32 %v2009, 7
        %v2011 = vsub.s32 0, %v2010
        %v2012 = vrot.slane %v2007, %v2011
        %v2013 = vlaneseq
        %v2014 = vshrl.u32 %v2013, 7
        %v2015 = vsub.s32 1, %v2014
        %v2016 = vrot.slane %v2007, %v2015
        %v2017 = vlaneseq
        %v2018 = vshrl.u32 %v2017, 7
        %v2019 = vsub.s32 2, %v2018
        %v2020 = vrot.slane %v2007, %v2019
        %v2056 = vunpack.c.l.b16 %v1974
        %v2057 = vunpack.c.h.b16 %v1974
        %v2058 = vunpack.c.l.b16 %v1975
        %v2059 = vunpack.c.l.b16 %v1976
        %v2060 = vunpack.c.h.b16 %v1976
        %v2061 = vunpack.c.l.b16 %v1977
        %v2062 = vunpack.c.l.b16 %v1978
        %v2063 = vunpack.c.h.b16 %v1978
        %v2064 = vunpack.c.l.b16 %v1979
        %v2065 = vunpack.c.l.b16 %v1980
        %v2066 = vunpack.c.h.b16 %v1980
        %v2067 = vunpack.c.l.b16 %v1981
        %v2068 = vunpack.c.l.b16 %v1982
        %v2069 = vunpack.c.h.b16 %v1982
        %v2070 = vunpack.c.l.b16 %v1983
        %v2071 = vunpack.c.l.b16 %v1984
        %v2072 = vunpack.c.h.b16 %v1984
        %v2073 = vunpack.c.l.b16 %v1985
        %v2074 = vunpack.c.l.b16 %v1986
        %v2075 = vunpack.c.h.b16 %v1986
        %v2076 = vunpack.c.l.b16 %v1987
        %v2077 = vunpack.c.l.b16 %v1988
        %v2078 = vunpack.c.h.b16 %v1988
        %v2079 = vunpack.c.l.b16 %v1989
        %v2080 = vunpack.c.l.b16 %v1990
        %v2081 = vunpack.c.h.b16 %v1990
        %v2082 = vunpack.c.l.b16 %v1991
        %v2083 = vunpack.c.l.b16 %v1992
        %v2084 = vunpack.c.h.b16 %v1992
        %v2085 = vunpack.c.l.b16 %v1993
        %v2086 = vunpack.c.l.b16 %v1994
        %v2087 = vunpack.c.h.b16 %v1994
        %v2088 = vunpack.c.l.b16 %v1995
        %v2089 = vunpack.c.l.b16 %v1996
        %v2090 = vunpack.c.h.b16 %v1996
        %v2091 = vunpack.c.l.b16 %v1997
        %v2092 = vunpack.c.l.b16 %v1998
        %v2093 = vunpack.c.h.b16 %v1998
        %v2094 = vunpack.c.l.b16 %v1999
        %v2095 = vunpack.c.l.b16 %v2000
        %v2096 = vunpack.c.h.b16 %v2000
        %v2097 = vunpack.c.l.b16 %v2001
        %v2098 = vunpack.c.l.b16 %v2002
        %v2099 = vunpack.c.h.b16 %v2002
        %v2100 = vunpack.c.l.b16 %v2003
        %v2101 = vunpack.c.l.b16 %v2004
        %v2102 = vunpack.c.h.b16 %v2004
        %v2103 = vunpack.c.l.b16 %v2005
        %v2104 = vpack.c.b16 %v2059, %v2056
        %v2105 = vpack.c.b16 %v2060, %v2057
        %v2106 = vpack.c.b16 %v2061, %v2058
        %v2107 = vpack.c.b16 %v2065, %v2062
        %v2108 = vpack.c.b16 %v2066, %v2063
        %v2109 = vpack.c.b16 %v2067, %v2064
        %v2110 = vpack.c.b16 %v2071, %v2068
        %v2111 = vpack.c.b16 %v2072, %v2069
        %v2112 = vpack.c.b16 %v2073, %v2070
        %v2113 = vpack.c.b16 %v2077, %v2074
        %v2114 = vpack.c.b16 %v2078, %v2075
        %v2115 = vpack.c.b16 %v2079, %v2076
        %v2116 = vpack.c.b16 %v2083, %v2080
        %v2117 = vpack.c.b16 %v2084, %v2081
        %v2118 = vpack.c.b16 %v2085, %v2082
        %v2119 = vpack.c.b16 %v2089, %v2086
        %v2120 = vpack.c.b16 %v2090, %v2087
        %v2121 = vpack.c.b16 %v2091, %v2088
        %v2122 = vpack.c.b16 %v2095, %v2092
        %v2123 = vpack.c.b16 %v2096, %v2093
        %v2124 = vpack.c.b16 %v2097, %v2094
        %v2125 = vpack.c.b16 %v2101, %v2098
        %v2126 = vpack.c.b16 %v2102, %v2099
        %v2127 = vpack.c.b16 %v2103, %v2100
        %2152 = vmatprep.subr.bf16.mxu0 %v2105
        %2153 = vmatpush1.bf16.msra.mxu0 %v2104
        %2154 = vmatprep.subr.bf16.mxu0 %v2108
        %2155 = vmatpush1.bf16.msra.mxu0 %v2107
        %2156 = vmatprep.subr.bf16.mxu0 %v2111
        %2157 = vmatpush1.bf16.msra.mxu0 %v2110
        %2158 = vmatprep.subr.bf16.mxu0 %v2114
        %2159 = vmatpush1.bf16.msra.mxu0 %v2113
        %2160 = vmatprep.subr.bf16.mxu0 %v2117
        %2161 = vmatpush1.bf16.msra.mxu0 %v2116
        %2162 = vmatprep.subr.bf16.mxu0 %v2120
        %2163 = vmatpush1.bf16.msra.mxu0 %v2119
        %2164 = vmatprep.subr.bf16.mxu0 %v2123
        %2165 = vmatpush1.bf16.msra.mxu0 %v2122
        %2166 = vmatprep.subr.bf16.mxu0 %v2126
        %2167 = vmatpush1.bf16.msra.mxu0 %v2125
        %2168 = vmatprep.subr.bf16.mxu0 0
        %2169 = vmatpush1.bf16.msra.mxu0 0
        %2170 = vmatprep.subr.bf16.mxu0 0
        %2171 = vmatpush1.bf16.msra.mxu0 0
        %2172 = vmatprep.subr.bf16.mxu0 0
        %2173 = vmatpush1.bf16.msra.mxu0 0
        %2174 = vmatprep.subr.bf16.mxu0 0
        %2175 = vmatpush1.bf16.msra.mxu0 0
        %2176 = vmatprep.subr.bf16.mxu0 0
        %2177 = vmatpush1.bf16.msra.mxu0 0
        %2178 = vmatprep.subr.bf16.mxu0 0
        %2179 = vmatpush1.bf16.msra.mxu0 0
        %2180 = vmatprep.subr.bf16.mxu0 0
        %2181 = vmatpush1.bf16.msra.mxu0 0
        %2182 = vmatprep.subr.bf16.mxu0 0
        %2183 = vmatpush1.bf16.msra.mxu0 0
        %2184 = vmatprep.mubr.bf16.mxu0 0
        %2185 = vmatmul.mubr.bf16.gmra.mrb[0].mxu0 %v1972
        %v2186 = vpop.f32.mrb[0].mxu0
        %v2187 = vadd.f32 %v2012, %v2186
        %v2188 = vpop.f32.mrb[0].mxu0
        %v2189 = vadd.f32 %v2016, %v2188
        %v2190 = vpop.f32.mrb[0].mxu0
        %v2191 = vadd.f32 %v2012, %v2190
        %v2192 = vpop.f32.mrb[0].mxu0
        %v2193 = vadd.f32 %v2016, %v2192
        %2194 = vdwg.mxu0
        %2195 = vmatprep.subr.bf16.mxu0 0
        %2196 = vmatpush1.bf16.msra.mxu0 %v2106
        %2197 = vmatprep.subr.bf16.mxu0 0
        %2198 = vmatpush1.bf16.msra.mxu0 %v2109
        %2199 = vmatprep.subr.bf16.mxu0 0
        %2200 = vmatpush1.bf16.msra.mxu0 %v2112
        %2201 = vmatprep.subr.bf16.mxu0 0
        %2202 = vmatpush1.bf16.msra.mxu0 %v2115
        %2203 = vmatprep.subr.bf16.mxu0 0
        %2204 = vmatpush1.bf16.msra.mxu0 %v2118
        %2205 = vmatprep.subr.bf16.mxu0 0
        %2206 = vmatpush1.bf16.msra.mxu0 %v2121
        %2207 = vmatprep.subr.bf16.mxu0 0
        %2208 = vmatpush1.bf16.msra.mxu0 %v2124
        %2209 = vmatprep.subr.bf16.mxu0 0
        %2210 = vmatpush1.bf16.msra.mxu0 %v2127
        %2211 = vmatprep.subr.bf16.mxu0 0
        %2212 = vmatpush1.bf16.msra.mxu0 0
        %2213 = vmatprep.subr.bf16.mxu0 0
        %2214 = vmatpush1.bf16.msra.mxu0 0
        %2215 = vmatprep.subr.bf16.mxu0 0
        %2216 = vmatpush1.bf16.msra.mxu0 0
        %2217 = vmatprep.subr.bf16.mxu0 0
        %2218 = vmatpush1.bf16.msra.mxu0 0
        %2219 = vmatprep.subr.bf16.mxu0 0
        %2220 = vmatpush1.bf16.msra.mxu0 0
        %2221 = vmatprep.subr.bf16.mxu0 0
        %2222 = vmatpush1.bf16.msra.mxu0 0
        %2223 = vmatprep.subr.bf16.mxu0 0
        %2224 = vmatpush1.bf16.msra.mxu0 0
        %2225 = vmatprep.subr.bf16.mxu0 0
        %2226 = vmatpush1.bf16.msra.mxu0 0
        %2227 = vmatprep.mubr.bf16.mxu0 0
        %2228 = vmatmul.mubr.bf16.gmra.mrb[0].mxu0 %v1972
        %v2229 = vpop.f32.mrb[0].mxu0
        %v2230 = vadd.f32 %v2020, %v2229
        %v2231 = vpop.f32.mrb[0].mxu0
        %v2232 = vpop.f32.mrb[0].mxu0
        %v2233 = vadd.f32 %v2020, %v2232
        %v2234 = vpop.f32.mrb[0].mxu0
        %2235 = vdwg.mxu0
        %v2236 = vpack.c.bf16 %v2191, %v2187
        %v2237 = vmul.f32 %v2189, %v641
        %v2238 = vmul.f32 %v2193, %v641
        %v2239 = vpack.c.bf16 %v2238, %v2237
        %2240 = vmatprep.subr.bf16.mxu0 0
        %2241 = vmatpush1.bf16.xpose.msra.mxu0 %v2239
        %2242 = vmatprep.subr.bf16.mxu0 0
        %2243 = vmatpush1.bf16.xpose.msra.mxu0 0
        %2244 = vmatprep.subr.bf16.mxu0 0
        %2245 = vmatpush1.bf16.xpose.msra.mxu0 0
        %2246 = vmatprep.subr.bf16.mxu0 0
        %2247 = vmatpush1.bf16.xpose.msra.mxu0 0
        %2248 = vmatprep.subr.bf16.mxu0 0
        %2249 = vmatpush1.bf16.xpose.msra.mxu0 0
        %2250 = vmatprep.subr.bf16.mxu0 0
        %2251 = vmatpush1.bf16.xpose.msra.mxu0 0
        %2252 = vmatprep.subr.bf16.mxu0 0
        %2253 = vmatpush1.bf16.xpose.msra.mxu0 0
        %2254 = vmatprep.subr.bf16.mxu0 0
        %2255 = vmatpush1.bf16.xpose.msra.mxu0 0
        %2256 = vmatprep.subr.bf16.mxu0 0
        %2257 = vmatpush1.bf16.xpose.msra.mxu0 0
        %2258 = vmatprep.subr.bf16.mxu0 0
        %2259 = vmatpush1.bf16.xpose.msra.mxu0 0
        %2260 = vmatprep.subr.bf16.mxu0 0
        %2261 = vmatpush1.bf16.xpose.msra.mxu0 0
        %2262 = vmatprep.subr.bf16.mxu0 0
        %2263 = vmatpush1.bf16.xpose.msra.mxu0 0
        %2264 = vmatprep.subr.bf16.mxu0 0
        %2265 = vmatpush1.bf16.xpose.msra.mxu0 0
        %2266 = vmatprep.subr.bf16.mxu0 0
        %2267 = vmatpush1.bf16.xpose.msra.mxu0 0
        %2268 = vmatprep.subr.bf16.mxu0 0
        %2269 = vmatpush1.bf16.xpose.msra.mxu0 0
        %2270 = vmatprep.subr.bf16.mxu0 0
        %2271 = vmatpush1.bf16.xpose.msra.mxu0 0
        %2272 = vmatprep.mubr.bf16.mxu0 0
        %2273 = vmatmul.mubr.bf16.gmra.mrb[0].mxu0 %v2236
        %v2274 = vpop.f32.mrb[0].mxu0
        %v2275 = vadd.f32 0.0, %v2274
        %v2276 = vpop.f32.mrb[0].mxu0
        %v2277 = vpop.f32.mrb[0].mxu0
        %v2278 = vadd.f32 0.0, %v2277
        %v2279 = vpop.f32.mrb[0].mxu0
        %2280 = vdwg.mxu0
        %v2281 = vmul.f32 %v2275, 0.35355338
        %v2282 = vmul.f32 %v2278, 0.35355338
        %v2283 = vsel %vm1081, %v2281, -inf
        %2284 = vmax.xlane.f32.xlu0 %v2283
        %v2285 = vpop.xlane.xlu0 %2284
        %v2286 = vsel %vm1085, %v2282, -inf
        %2287 = vmax.xlane.f32.xlu0 %v2286
        %v2288 = vpop.xlane.xlu0 %2287
        %v2289 = vsub.f32 %v2281, %v2285
        %v2290 = vsub.f32 %v2282, %v2288
        %v2291 = vmul.f32 %v2289, 1.442695
        %v2292 = vpow.pop %v2291
        %v2293 = vmul.f32 %v2290, 1.442695
        %v2294 = vpow.pop %v2293
        %v2295 = vsel %vm1081, %v2292, 0.0
        %2296 = vadd.xlane.f32.xlu0 %v2295
        %v2297 = vpop.xlane.xlu0 %2296
        %v2298 = vsel %vm1085, %v2294, 0.0
        %2299 = vadd.xlane.f32.xlu0 %v2298
        %v2300 = vpop.xlane.xlu0 %2299
        %v2301 = vrcp.pop %v2297
        %v2302 = vrcp.pop %v2300
        %v2303 = vmul.f32 %v2292, %v2301
        %v2304 = vmul.f32 %v2294, %v2302
        %v2305 = vmul.f32 %v2230, %v641
        %v2306 = vmul.f32 %v2233, %v641
        %v2307 = vpack.c.bf16 %v2306, %v2305
        %v2308 = vpack.c.bf16 %v2304, %v2303
        %v2309 = vmul.f32 %v2189, %v646
        %v2310 = vmul.f32 %v2193, %v646
        %v2311 = vpack.c.bf16 %v2310, %v2309
        %2312 = vmatprep.subr.bf16.mxu0 0
        %2313 = vmatpush1.bf16.xpose.msra.mxu0 %v2311
        %2314 = vmatprep.subr.bf16.mxu0 0
        %2315 = vmatpush1.bf16.xpose.msra.mxu0 0
        %2316 = vmatprep.subr.bf16.mxu0 0
        %2317 = vmatpush1.bf16.xpose.msra.mxu0 0
        %2318 = vmatprep.subr.bf16.mxu0 0
        %2319 = vmatpush1.bf16.xpose.msra.mxu0 0
        %2320 = vmatprep.subr.bf16.mxu0 0
        %2321 = vmatpush1.bf16.xpose.msra.mxu0 0
        %2322 = vmatprep.subr.bf16.mxu0 0
        %2323 = vmatpush1.bf16.xpose.msra.mxu0 0
        %2324 = vmatprep.subr.bf16.mxu0 0
        %2325 = vmatpush1.bf16.xpose.msra.mxu0 0
        %2326 = vmatprep.subr.bf16.mxu0 0
        %2327 = vmatpush1.bf16.xpose.msra.mxu0 0
        %2328 = vmatprep.subr.bf16.mxu0 0
        %2329 = vmatpush1.bf16.xpose.msra.mxu0 0
        %2330 = vmatprep.subr.bf16.mxu0 0
        %2331 = vmatpush1.bf16.xpose.msra.mxu0 0
        %2332 = vmatprep.subr.bf16.mxu0 0
        %2333 = vmatpush1.bf16.xpose.msra.mxu0 0
        %2334 = vmatprep.subr.bf16.mxu0 0
        %2335 = vmatpush1.bf16.xpose.msra.mxu0 0
        %2336 = vmatprep.subr.bf16.mxu0 0
        %2337 = vmatpush1.bf16.xpose.msra.mxu0 0
        %2338 = vmatprep.subr.bf16.mxu0 0
        %2339 = vmatpush1.bf16.xpose.msra.mxu0 0
        %2340 = vmatprep.subr.bf16.mxu0 0
        %2341 = vmatpush1.bf16.xpose.msra.mxu0 0
        %2342 = vmatprep.subr.bf16.mxu0 0
        %2343 = vmatpush1.bf16.xpose.msra.mxu0 0
        %2344 = vmatprep.mubr.bf16.mxu0 0
        %2345 = vmatmul.mubr.bf16.gmra.mrb[0].mxu0 %v2236
        %v2346 = vpop.f32.mrb[0].mxu0
        %v2347 = vadd.f32 0.0, %v2346
        %v2348 = vpop.f32.mrb[0].mxu0
        %v2349 = vpop.f32.mrb[0].mxu0
        %v2350 = vadd.f32 0.0, %v2349
        %v2351 = vpop.f32.mrb[0].mxu0
        %2352 = vdwg.mxu0
        %v2353 = vmul.f32 %v2347, 0.35355338
        %v2354 = vmul.f32 %v2350, 0.35355338
        %v2355 = vsel %vm1081, %v2353, -inf
        %2356 = vmax.xlane.f32.xlu0 %v2355
        %v2357 = vpop.xlane.xlu0 %2356
        %v2358 = vsel %vm1085, %v2354, -inf
        %2359 = vmax.xlane.f32.xlu0 %v2358
        %v2360 = vpop.xlane.xlu0 %2359
        %v2361 = vsub.f32 %v2353, %v2357
        %v2362 = vsub.f32 %v2354, %v2360
        %v2363 = vmul.f32 %v2361, 1.442695
        %v2364 = vpow.pop %v2363
        %v2365 = vmul.f32 %v2362, 1.442695
        %v2366 = vpow.pop %v2365
        %v2367 = vsel %vm1081, %v2364, 0.0
        %2368 = vadd.xlane.f32.xlu0 %v2367
        %v2369 = vpop.xlane.xlu0 %2368
        %v2370 = vsel %vm1085, %v2366, 0.0
        %2371 = vadd.xlane.f32.xlu0 %v2370
        %v2372 = vpop.xlane.xlu0 %2371
        %v2373 = vrcp.pop %v2369
        %v2374 = vrcp.pop %v2372
        %v2375 = vmul.f32 %v2364, %v2373
        %v2376 = vmul.f32 %v2366, %v2374
        %v2377 = vmul.f32 %v2230, %v646
        %v2378 = vmul.f32 %v2233, %v646
        %v2379 = vpack.c.bf16 %v2378, %v2377
        %v2380 = vpack.c.bf16 %v2376, %v2375
        %v2382 = vsel %vm1081, %v2380, 0
        %v2385 = vand.u32 %v2379, %v1185
        %2387 = vmatprep.subr.bf16.mxu0 0
        %2388 = vmatpush1.bf16.msra.mxu0 %v2385
        %2389 = vmatprep.subr.bf16.mxu0 0
        %2390 = vmatpush1.bf16.msra.mxu0 0
        %2391 = vmatprep.subr.bf16.mxu0 0
        %2392 = vmatpush1.bf16.msra.mxu0 0
        %2393 = vmatprep.subr.bf16.mxu0 0
        %2394 = vmatpush1.bf16.msra.mxu0 0
        %2395 = vmatprep.subr.bf16.mxu0 0
        %2396 = vmatpush1.bf16.msra.mxu0 0
        %2397 = vmatprep.subr.bf16.mxu0 0
        %2398 = vmatpush1.bf16.msra.mxu0 0
        %2399 = vmatprep.subr.bf16.mxu0 0
        %2400 = vmatpush1.bf16.msra.mxu0 0
        %2401 = vmatprep.subr.bf16.mxu0 0
        %2402 = vmatpush1.bf16.msra.mxu0 0
        %2403 = vmatprep.subr.bf16.mxu0 0
        %2404 = vmatpush1.bf16.msra.mxu0 0
        %2405 = vmatprep.subr.bf16.mxu0 0
        %2406 = vmatpush1.bf16.msra.mxu0 0
        %2407 = vmatprep.subr.bf16.mxu0 0
        %2408 = vmatpush1.bf16.msra.mxu0 0
        %2409 = vmatprep.subr.bf16.mxu0 0
        %2410 = vmatpush1.bf16.msra.mxu0 0
        %2411 = vmatprep.subr.bf16.mxu0 0
        %2412 = vmatpush1.bf16.msra.mxu0 0
        %2413 = vmatprep.subr.bf16.mxu0 0
        %2414 = vmatpush1.bf16.msra.mxu0 0
        %2415 = vmatprep.subr.bf16.mxu0 0
        %2416 = vmatpush1.bf16.msra.mxu0 0
        %2417 = vmatprep.subr.bf16.mxu0 0
        %2418 = vmatpush1.bf16.msra.mxu0 0
        %2419 = vmatprep.mubr.bf16.mxu0 0
        %2420 = vmatmul.mubr.bf16.gmra.mrb[0].mxu0 %v2382
        %v2421 = vpop.f32.mrb[0].mxu0
        %v2422 = vadd.f32 0.0, %v2421
        %v2423 = vpop.f32.mrb[0].mxu0
        %v2424 = vpop.f32.mrb[0].mxu0
        %v2425 = vadd.f32 0.0, %v2424
        %v2426 = vpop.f32.mrb[0].mxu0
        %2427 = vdwg.mxu0
        %v2429 = vsel %vm1081, %v2308, 0
        %v2432 = vand.u32 %v2307, %v1185
        %2434 = vmatprep.subr.bf16.mxu0 0
        %2435 = vmatpush1.bf16.msra.mxu0 %v2432
        %2436 = vmatprep.subr.bf16.mxu0 0
        %2437 = vmatpush1.bf16.msra.mxu0 0
        %2438 = vmatprep.subr.bf16.mxu0 0
        %2439 = vmatpush1.bf16.msra.mxu0 0
        %2440 = vmatprep.subr.bf16.mxu0 0
        %2441 = vmatpush1.bf16.msra.mxu0 0
        %2442 = vmatprep.subr.bf16.mxu0 0
        %2443 = vmatpush1.bf16.msra.mxu0 0
        %2444 = vmatprep.subr.bf16.mxu0 0
        %2445 = vmatpush1.bf16.msra.mxu0 0
        %2446 = vmatprep.subr.bf16.mxu0 0
        %2447 = vmatpush1.bf16.msra.mxu0 0
        %2448 = vmatprep.subr.bf16.mxu0 0
        %2449 = vmatpush1.bf16.msra.mxu0 0
        %2450 = vmatprep.subr.bf16.mxu0 0
        %2451 = vmatpush1.bf16.msra.mxu0 0
        %2452 = vmatprep.subr.bf16.mxu0 0
        %2453 = vmatpush1.bf16.msra.mxu0 0
        %2454 = vmatprep.subr.bf16.mxu0 0
        %2455 = vmatpush1.bf16.msra.mxu0 0
        %2456 = vmatprep.subr.bf16.mxu0 0
        %2457 = vmatpush1.bf16.msra.mxu0 0
        %2458 = vmatprep.subr.bf16.mxu0 0
        %2459 = vmatpush1.bf16.msra.mxu0 0
        %2460 = vmatprep.subr.bf16.mxu0 0
        %2461 = vmatpush1.bf16.msra.mxu0 0
        %2462 = vmatprep.subr.bf16.mxu0 0
        %2463 = vmatpush1.bf16.msra.mxu0 0
        %2464 = vmatprep.subr.bf16.mxu0 0
        %2465 = vmatpush1.bf16.msra.mxu0 0
        %2466 = vmatprep.mubr.bf16.mxu0 0
        %2467 = vmatmul.mubr.bf16.gmra.mrb[0].mxu0 %v2429
        %v2468 = vpop.f32.mrb[0].mxu0
        %v2469 = vadd.f32 %v2422, %v2468
        %v2470 = vpop.f32.mrb[0].mxu0
        %v2471 = vpop.f32.mrb[0].mxu0
        %v2472 = vadd.f32 %v2425, %v2471
        %v2473 = vpop.f32.mrb[0].mxu0
        %2474 = vdwg.mxu0
        %v2475 = vmul.f32 %v2189, %v651
        %v2476 = vmul.f32 %v2193, %v651
        %v2477 = vpack.c.bf16 %v2476, %v2475
        %2478 = vmatprep.subr.bf16.mxu0 0
        %2479 = vmatpush1.bf16.xpose.msra.mxu0 %v2477
        %2480 = vmatprep.subr.bf16.mxu0 0
        %2481 = vmatpush1.bf16.xpose.msra.mxu0 0
        %2482 = vmatprep.subr.bf16.mxu0 0
        %2483 = vmatpush1.bf16.xpose.msra.mxu0 0
        %2484 = vmatprep.subr.bf16.mxu0 0
        %2485 = vmatpush1.bf16.xpose.msra.mxu0 0
        %2486 = vmatprep.subr.bf16.mxu0 0
        %2487 = vmatpush1.bf16.xpose.msra.mxu0 0
        %2488 = vmatprep.subr.bf16.mxu0 0
        %2489 = vmatpush1.bf16.xpose.msra.mxu0 0
        %2490 = vmatprep.subr.bf16.mxu0 0
        %2491 = vmatpush1.bf16.xpose.msra.mxu0 0
        %2492 = vmatprep.subr.bf16.mxu0 0
        %2493 = vmatpush1.bf16.xpose.msra.mxu0 0
        %2494 = vmatprep.subr.bf16.mxu0 0
        %2495 = vmatpush1.bf16.xpose.msra.mxu0 0
        %2496 = vmatprep.subr.bf16.mxu0 0
        %2497 = vmatpush1.bf16.xpose.msra.mxu0 0
        %2498 = vmatprep.subr.bf16.mxu0 0
        %2499 = vmatpush1.bf16.xpose.msra.mxu0 0
        %2500 = vmatprep.subr.bf16.mxu0 0
        %2501 = vmatpush1.bf16.xpose.msra.mxu0 0
        %2502 = vmatprep.subr.bf16.mxu0 0
        %2503 = vmatpush1.bf16.xpose.msra.mxu0 0
        %2504 = vmatprep.subr.bf16.mxu0 0
        %2505 = vmatpush1.bf16.xpose.msra.mxu0 0
        %2506 = vmatprep.subr.bf16.mxu0 0
        %2507 = vmatpush1.bf16.xpose.msra.mxu0 0
        %2508 = vmatprep.subr.bf16.mxu0 0
        %2509 = vmatpush1.bf16.xpose.msra.mxu0 0
        %2510 = vmatprep.mubr.bf16.mxu0 0
        %2511 = vmatmul.mubr.bf16.gmra.mrb[0].mxu0 %v2236
        %v2512 = vpop.f32.mrb[0].mxu0
        %v2513 = vadd.f32 0.0, %v2512
        %v2514 = vpop.f32.mrb[0].mxu0
        %v2515 = vpop.f32.mrb[0].mxu0
        %v2516 = vadd.f32 0.0, %v2515
        %v2517 = vpop.f32.mrb[0].mxu0
        %2518 = vdwg.mxu0
        %v2519 = vmul.f32 %v2513, 0.35355338
        %v2520 = vmul.f32 %v2516, 0.35355338
        %v2521 = vsel %vm1081, %v2519, -inf
        %2522 = vmax.xlane.f32.xlu0 %v2521
        %v2523 = vpop.xlane.xlu0 %2522
        %v2524 = vsel %vm1085, %v2520, -inf
        %2525 = vmax.xlane.f32.xlu0 %v2524
        %v2526 = vpop.xlane.xlu0 %2525
        %v2527 = vsub.f32 %v2519, %v2523
        %v2528 = vsub.f32 %v2520, %v2526
        %v2529 = vmul.f32 %v2527, 1.442695
        %v2530 = vpow.pop %v2529
        %v2531 = vmul.f32 %v2528, 1.442695
        %v2532 = vpow.pop %v2531
        %v2533 = vsel %vm1081, %v2530, 0.0
        %2534 = vadd.xlane.f32.xlu0 %v2533
        %v2535 = vpop.xlane.xlu0 %2534
        %v2536 = vsel %vm1085, %v2532, 0.0
        %2537 = vadd.xlane.f32.xlu0 %v2536
        %v2538 = vpop.xlane.xlu0 %2537
        %v2539 = vrcp.pop %v2535
        %v2540 = vrcp.pop %v2538
        %v2541 = vmul.f32 %v2530, %v2539
        %v2542 = vmul.f32 %v2532, %v2540
        %v2543 = vmul.f32 %v2230, %v651
        %v2544 = vmul.f32 %v2233, %v651
        %v2545 = vpack.c.bf16 %v2544, %v2543
        %v2546 = vpack.c.bf16 %v2542, %v2541
        %v2548 = vsel %vm1081, %v2546, 0
        %v2551 = vand.u32 %v2545, %v1185
        %2553 = vmatprep.subr.bf16.mxu0 0
        %2554 = vmatpush1.bf16.msra.mxu0 %v2551
        %2555 = vmatprep.subr.bf16.mxu0 0
        %2556 = vmatpush1.bf16.msra.mxu0 0
        %2557 = vmatprep.subr.bf16.mxu0 0
        %2558 = vmatpush1.bf16.msra.mxu0 0
        %2559 = vmatprep.subr.bf16.mxu0 0
        %2560 = vmatpush1.bf16.msra.mxu0 0
        %2561 = vmatprep.subr.bf16.mxu0 0
        %2562 = vmatpush1.bf16.msra.mxu0 0
        %2563 = vmatprep.subr.bf16.mxu0 0
        %2564 = vmatpush1.bf16.msra.mxu0 0
        %2565 = vmatprep.subr.bf16.mxu0 0
        %2566 = vmatpush1.bf16.msra.mxu0 0
        %2567 = vmatprep.subr.bf16.mxu0 0
        %2568 = vmatpush1.bf16.msra.mxu0 0
        %2569 = vmatprep.subr.bf16.mxu0 0
        %2570 = vmatpush1.bf16.msra.mxu0 0
        %2571 = vmatprep.subr.bf16.mxu0 0
        %2572 = vmatpush1.bf16.msra.mxu0 0
        %2573 = vmatprep.subr.bf16.mxu0 0
        %2574 = vmatpush1.bf16.msra.mxu0 0
        %2575 = vmatprep.subr.bf16.mxu0 0
        %2576 = vmatpush1.bf16.msra.mxu0 0
        %2577 = vmatprep.subr.bf16.mxu0 0
        %2578 = vmatpush1.bf16.msra.mxu0 0
        %2579 = vmatprep.subr.bf16.mxu0 0
        %2580 = vmatpush1.bf16.msra.mxu0 0
        %2581 = vmatprep.subr.bf16.mxu0 0
        %2582 = vmatpush1.bf16.msra.mxu0 0
        %2583 = vmatprep.subr.bf16.mxu0 0
        %2584 = vmatpush1.bf16.msra.mxu0 0
        %2585 = vmatprep.mubr.bf16.mxu0 0
        %2586 = vmatmul.mubr.bf16.gmra.mrb[0].mxu0 %v2548
        %v2587 = vpop.f32.mrb[0].mxu0
        %v2588 = vadd.f32 0.0, %v2587
        %v2589 = vpop.f32.mrb[0].mxu0
        %v2590 = vpop.f32.mrb[0].mxu0
        %v2591 = vadd.f32 0.0, %v2590
        %v2592 = vpop.f32.mrb[0].mxu0
        %2593 = vdwg.mxu0
        %v2594 = vadd.f32 %v2469, %v2588
        %v2595 = vadd.f32 %v2472, %v2591
        %v2596 = vmul.f32 %v2189, %v655
        %v2597 = vmul.f32 %v2193, %v655
        %v2598 = vpack.c.bf16 %v2597, %v2596
        %2599 = vmatprep.subr.bf16.mxu0 0
        %2600 = vmatpush1.bf16.xpose.msra.mxu0 %v2598
        %2601 = vmatprep.subr.bf16.mxu0 0
        %2602 = vmatpush1.bf16.xpose.msra.mxu0 0
        %2603 = vmatprep.subr.bf16.mxu0 0
        %2604 = vmatpush1.bf16.xpose.msra.mxu0 0
        %2605 = vmatprep.subr.bf16.mxu0 0
        %2606 = vmatpush1.bf16.xpose.msra.mxu0 0
        %2607 = vmatprep.subr.bf16.mxu0 0
        %2608 = vmatpush1.bf16.xpose.msra.mxu0 0
        %2609 = vmatprep.subr.bf16.mxu0 0
        %2610 = vmatpush1.bf16.xpose.msra.mxu0 0
        %2611 = vmatprep.subr.bf16.mxu0 0
        %2612 = vmatpush1.bf16.xpose.msra.mxu0 0
        %2613 = vmatprep.subr.bf16.mxu0 0
        %2614 = vmatpush1.bf16.xpose.msra.mxu0 0
        %2615 = vmatprep.subr.bf16.mxu0 0
        %2616 = vmatpush1.bf16.xpose.msra.mxu0 0
        %2617 = vmatprep.subr.bf16.mxu0 0
        %2618 = vmatpush1.bf16.xpose.msra.mxu0 0
        %2619 = vmatprep.subr.bf16.mxu0 0
        %2620 = vmatpush1.bf16.xpose.msra.mxu0 0
        %2621 = vmatprep.subr.bf16.mxu0 0
        %2622 = vmatpush1.bf16.xpose.msra.mxu0 0
        %2623 = vmatprep.subr.bf16.mxu0 0
        %2624 = vmatpush1.bf16.xpose.msra.mxu0 0
        %2625 = vmatprep.subr.bf16.mxu0 0
        %2626 = vmatpush1.bf16.xpose.msra.mxu0 0
        %2627 = vmatprep.subr.bf16.mxu0 0
        %2628 = vmatpush1.bf16.xpose.msra.mxu0 0
        %2629 = vmatprep.subr.bf16.mxu0 0
        %2630 = vmatpush1.bf16.xpose.msra.mxu0 0
        %2631 = vmatprep.mubr.bf16.mxu0 0
        %2632 = vmatmul.mubr.bf16.gmra.mrb[0].mxu0 %v2236
        %v2633 = vpop.f32.mrb[0].mxu0
        %v2634 = vadd.f32 0.0, %v2633
        %v2635 = vpop.f32.mrb[0].mxu0
        %v2636 = vpop.f32.mrb[0].mxu0
        %v2637 = vadd.f32 0.0, %v2636
        %v2638 = vpop.f32.mrb[0].mxu0
        %2639 = vdwg.mxu0
        %v2640 = vmul.f32 %v2634, 0.35355338
        %v2641 = vmul.f32 %v2637, 0.35355338
        %v2642 = vsel %vm1081, %v2640, -inf
        %2643 = vmax.xlane.f32.xlu0 %v2642
        %v2644 = vpop.xlane.xlu0 %2643
        %v2645 = vsel %vm1085, %v2641, -inf
        %2646 = vmax.xlane.f32.xlu0 %v2645
        %v2647 = vpop.xlane.xlu0 %2646
        %v2648 = vsub.f32 %v2640, %v2644
        %v2649 = vsub.f32 %v2641, %v2647
        %v2650 = vmul.f32 %v2648, 1.442695
        %v2651 = vpow.pop %v2650
        %v2652 = vmul.f32 %v2649, 1.442695
        %v2653 = vpow.pop %v2652
        %v2654 = vsel %vm1081, %v2651, 0.0
        %2655 = vadd.xlane.f32.xlu0 %v2654
        %v2656 = vpop.xlane.xlu0 %2655
        %v2657 = vsel %vm1085, %v2653, 0.0
        %2658 = vadd.xlane.f32.xlu0 %v2657
        %v2659 = vpop.xlane.xlu0 %2658
        %v2660 = vrcp.pop %v2656
        %v2661 = vrcp.pop %v2659
        %v2662 = vmul.f32 %v2651, %v2660
        %v2663 = vmul.f32 %v2653, %v2661
        %v2664 = vmul.f32 %v2230, %v655
        %v2665 = vmul.f32 %v2233, %v655
        %v2666 = vpack.c.bf16 %v2665, %v2664
        %v2667 = vpack.c.bf16 %v2663, %v2662
        %v2669 = vsel %vm1081, %v2667, 0
        %v2672 = vand.u32 %v2666, %v1185
        %2674 = vmatprep.subr.bf16.mxu0 0
        %2675 = vmatpush1.bf16.msra.mxu0 %v2672
        %2676 = vmatprep.subr.bf16.mxu0 0
        %2677 = vmatpush1.bf16.msra.mxu0 0
        %2678 = vmatprep.subr.bf16.mxu0 0
        %2679 = vmatpush1.bf16.msra.mxu0 0
        %2680 = vmatprep.subr.bf16.mxu0 0
        %2681 = vmatpush1.bf16.msra.mxu0 0
        %2682 = vmatprep.subr.bf16.mxu0 0
        %2683 = vmatpush1.bf16.msra.mxu0 0
        %2684 = vmatprep.subr.bf16.mxu0 0
        %2685 = vmatpush1.bf16.msra.mxu0 0
        %2686 = vmatprep.subr.bf16.mxu0 0
        %2687 = vmatpush1.bf16.msra.mxu0 0
        %2688 = vmatprep.subr.bf16.mxu0 0
        %2689 = vmatpush1.bf16.msra.mxu0 0
        %2690 = vmatprep.subr.bf16.mxu0 0
        %2691 = vmatpush1.bf16.msra.mxu0 0
        %2692 = vmatprep.subr.bf16.mxu0 0
        %2693 = vmatpush1.bf16.msra.mxu0 0
        %2694 = vmatprep.subr.bf16.mxu0 0
        %2695 = vmatpush1.bf16.msra.mxu0 0
        %2696 = vmatprep.subr.bf16.mxu0 0
        %2697 = vmatpush1.bf16.msra.mxu0 0
        %2698 = vmatprep.subr.bf16.mxu0 0
        %2699 = vmatpush1.bf16.msra.mxu0 0
        %2700 = vmatprep.subr.bf16.mxu0 0
        %2701 = vmatpush1.bf16.msra.mxu0 0
        %2702 = vmatprep.subr.bf16.mxu0 0
        %2703 = vmatpush1.bf16.msra.mxu0 0
        %2704 = vmatprep.subr.bf16.mxu0 0
        %2705 = vmatpush1.bf16.msra.mxu0 0
        %2706 = vmatprep.mubr.bf16.mxu0 0
        %2707 = vmatmul.mubr.bf16.gmra.mrb[0].mxu0 %v2669
        %v2708 = vpop.f32.mrb[0].mxu0
        %v2709 = vadd.f32 0.0, %v2708
        %v2710 = vpop.f32.mrb[0].mxu0
        %v2711 = vpop.f32.mrb[0].mxu0
        %v2712 = vadd.f32 0.0, %v2711
        %v2713 = vpop.f32.mrb[0].mxu0
        %2714 = vdwg.mxu0
        %v2715 = vadd.f32 %v2594, %v2709
        %v2716 = vadd.f32 %v2595, %v2712
        %v2717 = vpack.c.bf16 %v2716, %v2715
        %s2718 = scalar_lea.vmem [#allocation12], 64
        %v2719 = vld [vmem:[%s2718] sm:$0xf]
        %v2720 = vld [vmem:[%s2718 + $0x4] sm:$0xf]
        %v2721 = vld [vmem:[%s2718 + $0x8] sm:$0xf]
        %v2722 = vld [vmem:[%s2718 + $0xc] sm:$0xf]
        %v2723 = vld [vmem:[%s2718 + $0x10] sm:$0xf]
        %v2724 = vld [vmem:[%s2718 + $0x14] sm:$0xf]
        %v2725 = vld [vmem:[%s2718 + $0x18] sm:$0xf]
        %v2726 = vld [vmem:[%s2718 + $0x1c] sm:$0xf]
        %v2727 = vld [vmem:[%s2718 + $0x20] sm:$0xf]
        %v2728 = vld [vmem:[%s2718 + $0x24] sm:$0xf]
        %v2729 = vld [vmem:[%s2718 + $0x28] sm:$0xf]
        %v2730 = vld [vmem:[%s2718 + $0x2c] sm:$0xf]
        %v2731 = vld [vmem:[%s2718 + $0x30] sm:$0xf]
        %v2732 = vld [vmem:[%s2718 + $0x34] sm:$0xf]
        %v2733 = vld [vmem:[%s2718 + $0x38] sm:$0xf]
        %v2734 = vld [vmem:[%s2718 + $0x3c] sm:$0xf]
        %v2751 = vunpack.c.l.b16 %v2719
        %v2752 = vunpack.c.l.b16 %v2720
        %v2753 = vunpack.c.l.b16 %v2721
        %v2754 = vunpack.c.l.b16 %v2722
        %v2755 = vunpack.c.l.b16 %v2723
        %v2756 = vunpack.c.l.b16 %v2724
        %v2757 = vunpack.c.l.b16 %v2725
        %v2758 = vunpack.c.l.b16 %v2726
        %v2759 = vunpack.c.l.b16 %v2727
        %v2760 = vunpack.c.l.b16 %v2728
        %v2761 = vunpack.c.l.b16 %v2729
        %v2762 = vunpack.c.l.b16 %v2730
        %v2763 = vunpack.c.l.b16 %v2731
        %v2764 = vunpack.c.l.b16 %v2732
        %v2765 = vunpack.c.l.b16 %v2733
        %v2766 = vunpack.c.l.b16 %v2734
        %v2767 = vpack.c.b16 %v2752, %v2751
        %v2768 = vpack.c.b16 %v2754, %v2753
        %v2769 = vpack.c.b16 %v2756, %v2755
        %v2770 = vpack.c.b16 %v2758, %v2757
        %v2771 = vpack.c.b16 %v2760, %v2759
        %v2772 = vpack.c.b16 %v2762, %v2761
        %v2773 = vpack.c.b16 %v2764, %v2763
        %v2774 = vpack.c.b16 %v2766, %v2765
        %2783 = vmatprep.subr.bf16.mxu0 0
        %2784 = vmatpush1.bf16.msra.mxu0 %v2767
        %2785 = vmatprep.subr.bf16.mxu0 0
        %2786 = vmatpush1.bf16.msra.mxu0 %v2768
        %2787 = vmatprep.subr.bf16.mxu0 0
        %2788 = vmatpush1.bf16.msra.mxu0 %v2769
        %2789 = vmatprep.subr.bf16.mxu0 0
        %2790 = vmatpush1.bf16.msra.mxu0 %v2770
        %2791 = vmatprep.subr.bf16.mxu0 0
        %2792 = vmatpush1.bf16.msra.mxu0 %v2771
        %2793 = vmatprep.subr.bf16.mxu0 0
        %2794 = vmatpush1.bf16.msra.mxu0 %v2772
        %2795 = vmatprep.subr.bf16.mxu0 0
        %2796 = vmatpush1.bf16.msra.mxu0 %v2773
        %2797 = vmatprep.subr.bf16.mxu0 0
        %2798 = vmatpush1.bf16.msra.mxu0 %v2774
        %2799 = vmatprep.subr.bf16.mxu0 0
        %2800 = vmatpush1.bf16.msra.mxu0 0
        %2801 = vmatprep.subr.bf16.mxu0 0
        %2802 = vmatpush1.bf16.msra.mxu0 0
        %2803 = vmatprep.subr.bf16.mxu0 0
        %2804 = vmatpush1.bf16.msra.mxu0 0
        %2805 = vmatprep.subr.bf16.mxu0 0
        %2806 = vmatpush1.bf16.msra.mxu0 0
        %2807 = vmatprep.subr.bf16.mxu0 0
        %2808 = vmatpush1.bf16.msra.mxu0 0
        %2809 = vmatprep.subr.bf16.mxu0 0
        %2810 = vmatpush1.bf16.msra.mxu0 0
        %2811 = vmatprep.subr.bf16.mxu0 0
        %2812 = vmatpush1.bf16.msra.mxu0 0
        %2813 = vmatprep.subr.bf16.mxu0 0
        %2814 = vmatpush1.bf16.msra.mxu0 0
        %2815 = vmatprep.mubr.bf16.mxu0 0
        %2816 = vmatmul.mubr.bf16.gmra.mrb[0].mxu0 %v2717
        %v2817 = vpop.f32.mrb[0].mxu0
        %v2818 = vadd.f32 0.0, %v2817
        %v2819 = vpop.f32.mrb[0].mxu0
        %v2820 = vpop.f32.mrb[0].mxu0
        %v2821 = vadd.f32 0.0, %v2820
        %v2822 = vpop.f32.mrb[0].mxu0
        %2823 = vdwg.mxu0
        %v2824 = vadd.f32 %v1924, %v2818
        %v2825 = vadd.f32 %v1925, %v2821
        %s2826 = scalar_lea.vmem %s9, 1
        %v2827 = vld [vmem:[%s2826] sm:$0x1]
        %v2829 = vlaneseq
        %v2830 = vshrl.u32 %v2829, 7
        %v2831 = vsub.s32 0, %v2830
        %v2832 = vrot.slane %v2827, %v2831
        %v2834 = vadd.f32 %v2824, %v2832
        %v2835 = vadd.f32 %v2825, %v2832
        %s2836 = scalar_lea.vmem %s10, 1
        %v2837 = vld [vmem:[%s2836] sm:$0x1]
        %s2838 = scalar_lea.vmem %s11, 1
        %v2839 = vld [vmem:[%s2838] sm:$0x1]
        %2840 = vadd.xlane.f32.xlu0 %v2834
        %v2841 = vpop.xlane.xlu0 %2840
        %v2842 = vsel %vm712, %v2835, 0.0
        %2843 = vadd.xlane.f32.xlu0 %v2842
        %v2844 = vpop.xlane.xlu0 %2843
        %v2845 = vmul.f32 %v2841, 0.03125
        %v2846 = vmul.f32 %v2844, 0.03125
        %v2847 = vsub.f32 %v2834, %v2845
        %v2848 = vsub.f32 %v2835, %v2846
        %v2849 = vmul.f32 %v2847, %v636
        %v2850 = vmul.f32 %v2848, %v636
        %v2851 = vmul.f32 %v2849, %v2849
        %v2852 = vmul.f32 %v2850, %v2850
        %2853 = vadd.xlane.f32.xlu0 %v2851
        %v2854 = vpop.xlane.xlu0 %2853
        %v2855 = vsel %vm712, %v2852, 0.0
        %2856 = vadd.xlane.f32.xlu0 %v2855
        %v2857 = vpop.xlane.xlu0 %2856
        %v2858 = vmul.f32 %v2854, 0.03125
        %v2859 = vmul.f32 %v2857, 0.03125
        %v2860 = vadd.f32 %v2858, 1e-05
        %v2861 = vadd.f32 %v2859, 1e-05
        %v2862 = vrsqrt.pop %v2860
        %v2863 = vrsqrt.pop %v2861
        %v2864 = vmul.f32 %v2849, %v2862
        %v2865 = vmul.f32 %v2850, %v2863
        %v2867 = vlaneseq
        %v2868 = vshrl.u32 %v2867, 7
        %v2869 = vsub.s32 0, %v2868
        %v2870 = vrot.slane %v2837, %v2869
        %v2872 = vmul.f32 %v2864, %v2870
        %v2873 = vmul.f32 %v2865, %v2870
        %v2875 = vlaneseq
        %v2876 = vshrl.u32 %v2875, 7
        %v2877 = vsub.s32 0, %v2876
        %v2878 = vrot.slane %v2839, %v2877
        %v2880 = vadd.f32 %v2872, %v2878
        %v2881 = vadd.f32 %v2873, %v2878
        %v2882 = vpack.c.bf16 %v2881, %v2880
        %s2883 = scalar_lea.vmem [#allocation13], 64
        %v2884 = vld [vmem:[%s2883] sm:$0xf]
        %v2885 = vld [vmem:[%s2883 + $0x4] sm:$0xf]
        %v2886 = vld [vmem:[%s2883 + $0x8] sm:$0xf]
        %v2887 = vld [vmem:[%s2883 + $0xc] sm:$0xf]
        %v2888 = vld [vmem:[%s2883 + $0x10] sm:$0xf]
        %v2889 = vld [vmem:[%s2883 + $0x14] sm:$0xf]
        %v2890 = vld [vmem:[%s2883 + $0x18] sm:$0xf]
        %v2891 = vld [vmem:[%s2883 + $0x1c] sm:$0xf]
        %v2892 = vld [vmem:[%s2883 + $0x20] sm:$0xf]
        %v2893 = vld [vmem:[%s2883 + $0x24] sm:$0xf]
        %v2894 = vld [vmem:[%s2883 + $0x28] sm:$0xf]
        %v2895 = vld [vmem:[%s2883 + $0x2c] sm:$0xf]
        %v2896 = vld [vmem:[%s2883 + $0x30] sm:$0xf]
        %v2897 = vld [vmem:[%s2883 + $0x34] sm:$0xf]
        %v2898 = vld [vmem:[%s2883 + $0x38] sm:$0xf]
        %v2899 = vld [vmem:[%s2883 + $0x3c] sm:$0xf]
        %s2900 = scalar_lea.vmem %s13, 1
        %v2901 = vld [vmem:[%s2900] sm:$0x1]
        %v2903 = vlaneseq
        %v2904 = vshrl.u32 %v2903, 7
        %v2905 = vsub.s32 0, %v2904
        %v2906 = vrot.slane %v2901, %v2905
        %v2924 = vunpack.c.l.b16 %v2884
        %v2925 = vunpack.c.l.b16 %v2885
        %v2926 = vunpack.c.l.b16 %v2886
        %v2927 = vunpack.c.l.b16 %v2887
        %v2928 = vunpack.c.l.b16 %v2888
        %v2929 = vunpack.c.l.b16 %v2889
        %v2930 = vunpack.c.l.b16 %v2890
        %v2931 = vunpack.c.l.b16 %v2891
        %v2932 = vunpack.c.l.b16 %v2892
        %v2933 = vunpack.c.l.b16 %v2893
        %v2934 = vunpack.c.l.b16 %v2894
        %v2935 = vunpack.c.l.b16 %v2895
        %v2936 = vunpack.c.l.b16 %v2896
        %v2937 = vunpack.c.l.b16 %v2897
        %v2938 = vunpack.c.l.b16 %v2898
        %v2939 = vunpack.c.l.b16 %v2899
        %v2940 = vpack.c.b16 %v2925, %v2924
        %v2941 = vpack.c.b16 %v2927, %v2926
        %v2942 = vpack.c.b16 %v2929, %v2928
        %v2943 = vpack.c.b16 %v2931, %v2930
        %v2944 = vpack.c.b16 %v2933, %v2932
        %v2945 = vpack.c.b16 %v2935, %v2934
        %v2946 = vpack.c.b16 %v2937, %v2936
        %v2947 = vpack.c.b16 %v2939, %v2938
        %2956 = vmatprep.subr.bf16.mxu0 0
        %2957 = vmatpush1.bf16.msra.mxu0 %v2940
        %2958 = vmatprep.subr.bf16.mxu0 0
        %2959 = vmatpush1.bf16.msra.mxu0 %v2941
        %2960 = vmatprep.subr.bf16.mxu0 0
        %2961 = vmatpush1.bf16.msra.mxu0 %v2942
        %2962 = vmatprep.subr.bf16.mxu0 0
        %2963 = vmatpush1.bf16.msra.mxu0 %v2943
        %2964 = vmatprep.subr.bf16.mxu0 0
        %2965 = vmatpush1.bf16.msra.mxu0 %v2944
        %2966 = vmatprep.subr.bf16.mxu0 0
        %2967 = vmatpush1.bf16.msra.mxu0 %v2945
        %2968 = vmatprep.subr.bf16.mxu0 0
        %2969 = vmatpush1.bf16.msra.mxu0 %v2946
        %2970 = vmatprep.subr.bf16.mxu0 0
        %2971 = vmatpush1.bf16.msra.mxu0 %v2947
        %2972 = vmatprep.subr.bf16.mxu0 0
        %2973 = vmatpush1.bf16.msra.mxu0 0
        %2974 = vmatprep.subr.bf16.mxu0 0
        %2975 = vmatpush1.bf16.msra.mxu0 0
        %2976 = vmatprep.subr.bf16.mxu0 0
        %2977 = vmatpush1.bf16.msra.mxu0 0
        %2978 = vmatprep.subr.bf16.mxu0 0
        %2979 = vmatpush1.bf16.msra.mxu0 0
        %2980 = vmatprep.subr.bf16.mxu0 0
        %2981 = vmatpush1.bf16.msra.mxu0 0
        %2982 = vmatprep.subr.bf16.mxu0 0
        %2983 = vmatpush1.bf16.msra.mxu0 0
        %2984 = vmatprep.subr.bf16.mxu0 0
        %2985 = vmatpush1.bf16.msra.mxu0 0
        %2986 = vmatprep.subr.bf16.mxu0 0
        %2987 = vmatpush1.bf16.msra.mxu0 0
        %2988 = vmatprep.mubr.bf16.mxu0 0
        %2989 = vmatmul.mubr.bf16.gmra.mrb[0].mxu0 %v2882
        %v2990 = vpop.f32.mrb[0].mxu0
        %v2991 = vadd.f32 %v2906, %v2990
        %v2992 = vpop.f32.mrb[0].mxu0
        %v2993 = vpop.f32.mrb[0].mxu0
        %v2994 = vadd.f32 %v2906, %v2993
        %v2995 = vpop.f32.mrb[0].mxu0
        %2996 = vdwg.mxu0
        %v2997 = vmul.f32 %v2991, %v2991
        %v2998 = vmul.f32 %v2994, %v2994
        %v2999 = vmul.f32 %v2991, %v2997
        %v3000 = vmul.f32 %v2994, %v2998
        %v3001 = vmul.f32 %v2999, 0.044715
        %v3002 = vmul.f32 %v3000, 0.044715
        %v3003 = vadd.f32 %v2991, %v3001
        %v3004 = vadd.f32 %v2994, %v3002
        %v3005 = vmul.f32 %v3003, 0.7978846
        %v3006 = vmul.f32 %v3004, 0.7978846
        %v3007 = vtanh.pop %v3005
        %v3008 = vtanh.pop %v3006
        %v3009 = vadd.f32 %v3007, 1.0
        %v3010 = vadd.f32 %v3008, 1.0
        %v3011 = vmul.f32 %v3009, 0.5
        %v3012 = vmul.f32 %v3010, 0.5
        %v3013 = vmul.f32 %v2991, %v3011
        %v3014 = vmul.f32 %v2994, %v3012
        %v3015 = vpack.c.bf16 %v3014, %v3013
        %s3016 = scalar_lea.vmem [#allocation15], 64
        %v3017 = vld [vmem:[%s3016] sm:$0xf]
        %v3018 = vld [vmem:[%s3016 + $0x4] sm:$0xf]
        %v3019 = vld [vmem:[%s3016 + $0x8] sm:$0xf]
        %v3020 = vld [vmem:[%s3016 + $0xc] sm:$0xf]
        %v3021 = vld [vmem:[%s3016 + $0x10] sm:$0xf]
        %v3022 = vld [vmem:[%s3016 + $0x14] sm:$0xf]
        %v3023 = vld [vmem:[%s3016 + $0x18] sm:$0xf]
        %v3024 = vld [vmem:[%s3016 + $0x1c] sm:$0xf]
        %v3025 = vld [vmem:[%s3016 + $0x20] sm:$0xf]
        %v3026 = vld [vmem:[%s3016 + $0x24] sm:$0xf]
        %v3027 = vld [vmem:[%s3016 + $0x28] sm:$0xf]
        %v3028 = vld [vmem:[%s3016 + $0x2c] sm:$0xf]
        %v3029 = vld [vmem:[%s3016 + $0x30] sm:$0xf]
        %v3030 = vld [vmem:[%s3016 + $0x34] sm:$0xf]
        %v3031 = vld [vmem:[%s3016 + $0x38] sm:$0xf]
        %v3032 = vld [vmem:[%s3016 + $0x3c] sm:$0xf]
        %s3033 = scalar_lea.vmem %s15, 1
        %v3034 = vld [vmem:[%s3033] sm:$0x1]
        %v3036 = vlaneseq
        %v3037 = vshrl.u32 %v3036, 7
        %v3038 = vsub.s32 0, %v3037
        %v3039 = vrot.slane %v3034, %v3038
        %v3057 = vunpack.c.l.b16 %v3017
        %v3058 = vunpack.c.l.b16 %v3018
        %v3059 = vunpack.c.l.b16 %v3019
        %v3060 = vunpack.c.l.b16 %v3020
        %v3061 = vunpack.c.l.b16 %v3021
        %v3062 = vunpack.c.l.b16 %v3022
        %v3063 = vunpack.c.l.b16 %v3023
        %v3064 = vunpack.c.l.b16 %v3024
        %v3065 = vunpack.c.l.b16 %v3025
        %v3066 = vunpack.c.l.b16 %v3026
        %v3067 = vunpack.c.l.b16 %v3027
        %v3068 = vunpack.c.l.b16 %v3028
        %v3069 = vunpack.c.l.b16 %v3029
        %v3070 = vunpack.c.l.b16 %v3030
        %v3071 = vunpack.c.l.b16 %v3031
        %v3072 = vunpack.c.l.b16 %v3032
        %v3073 = vpack.c.b16 %v3058, %v3057
        %v3074 = vpack.c.b16 %v3060, %v3059
        %v3075 = vpack.c.b16 %v3062, %v3061
        %v3076 = vpack.c.b16 %v3064, %v3063
        %v3077 = vpack.c.b16 %v3066, %v3065
        %v3078 = vpack.c.b16 %v3068, %v3067
        %v3079 = vpack.c.b16 %v3070, %v3069
        %v3080 = vpack.c.b16 %v3072, %v3071
        %3089 = vmatprep.subr.bf16.mxu0 0
        %3090 = vmatpush1.bf16.msra.mxu0 %v3073
        %3091 = vmatprep.subr.bf16.mxu0 0
        %3092 = vmatpush1.bf16.msra.mxu0 %v3074
        %3093 = vmatprep.subr.bf16.mxu0 0
        %3094 = vmatpush1.bf16.msra.mxu0 %v3075
        %3095 = vmatprep.subr.bf16.mxu0 0
        %3096 = vmatpush1.bf16.msra.mxu0 %v3076
        %3097 = vmatprep.subr.bf16.mxu0 0
        %3098 = vmatpush1.bf16.msra.mxu0 %v3077
        %3099 = vmatprep.subr.bf16.mxu0 0
        %3100 = vmatpush1.bf16.msra.mxu0 %v3078
        %3101 = vmatprep.subr.bf16.mxu0 0
        %3102 = vmatpush1.bf16.msra.mxu0 %v3079
        %3103 = vmatprep.subr.bf16.mxu0 0
        %3104 = vmatpush1.bf16.msra.mxu0 %v3080
        %3105 = vmatprep.subr.bf16.mxu0 0
        %3106 = vmatpush1.bf16.msra.mxu0 0
        %3107 = vmatprep.subr.bf16.mxu0 0
        %3108 = vmatpush1.bf16.msra.mxu0 0
        %3109 = vmatprep.subr.bf16.mxu0 0
        %3110 = vmatpush1.bf16.msra.mxu0 0
        %3111 = vmatprep.subr.bf16.mxu0 0
        %3112 = vmatpush1.bf16.msra.mxu0 0
        %3113 = vmatprep.subr.bf16.mxu0 0
        %3114 = vmatpush1.bf16.msra.mxu0 0
        %3115 = vmatprep.subr.bf16.mxu0 0
        %3116 = vmatpush1.bf16.msra.mxu0 0
        %3117 = vmatprep.subr.bf16.mxu0 0
        %3118 = vmatpush1.bf16.msra.mxu0 0
        %3119 = vmatprep.subr.bf16.mxu0 0
        %3120 = vmatpush1.bf16.msra.mxu0 0
        %3121 = vmatprep.mubr.bf16.mxu0 0
        %3122 = vmatmul.mubr.bf16.gmra.mrb[0].mxu0 %v3015
        %v3123 = vpop.f32.mrb[0].mxu0
        %v3124 = vadd.f32 %v3039, %v3123
        %v3125 = vpop.f32.mrb[0].mxu0
        %v3126 = vpop.f32.mrb[0].mxu0
        %v3127 = vpop.f32.mrb[0].mxu0
        %3128 = vdwg.mxu0
        %v3129 = vadd.f32 %v2834, %v3124
        %v3130 = vld [vmem:[%s16] sm:$0x1]
        %v3131 = vld [vmem:[%s17] sm:$0x1]
        %v3132 = vsel %vm712, %v3129, 0.0
        %3133 = vadd.xlane.f32.xlu0 %v3132
        %v3134 = vpop.xlane.xlu0 %3133
        %v3135 = vmul.f32 %v3134, 0.03125
        %v3136 = vsub.f32 %v3129, %v3135
        %v3137 = vmul.f32 %v3136, %v636
        %v3138 = vmul.f32 %v3137, %v3137
        %v3139 = vsel %vm712, %v3138, 0.0
        %3140 = vadd.xlane.f32.xlu0 %v3139
        %v3141 = vpop.xlane.xlu0 %3140
        %v3142 = vmul.f32 %v3141, 0.03125
        %v3143 = vadd.f32 %v3142, 1e-05
        %v3144 = vrsqrt.pop %v3143
        %v3145 = vmul.f32 %v3137, %v3144
        %v3146 = vmul.f32 %v3145, %v3130
        %v3147 = vadd.f32 %v3146, %v3131
        %3148 = vst [vmem:[%s630] sm:$0x1] %v3147
        %s3149 = sand.u32 %s405, 1
        %s3150 = scalar_lea.sflag [#allocation6], %s3149
        %s3151 = sand.u32 %s405, 1
        %s3152 = scalar_lea.vmem [#allocation16], %s3151
        // Predicated region
        $region117: #{tpu_custom_call.1} parent=87 // pred_check
          %p3153 = pneg %p415
        $region118: #{tpu_custom_call.1} parent=87 // pred_check_branch
          %3155 = sbr.rel (%p3153) target = $region120
        $region119: #{tpu_custom_call.1} parent=87 // pred_region
          %s3157 = ssub.s32 16, 16
          %3158 = vsyncadd %s3150, %s3157
          %s3159 = smul.addr %s40, 16
          %s3160 = scalar_lea.hbm %s18, %s3159
          %s3162 = sshll.u32 %s3152, 4
          %s3163 = int_to_ptr.vmem [resolvable:$true] %s3162
          %3165 = dma.vmem_to_hbm [thread:$0]  %s3163, 16, %s3160, %s3150
        $region120: #{tpu_custom_call.1} parent=87 // pred_fallthru
          _
      $region88: #{tpu_custom_call.1} parent=5 // pred_fallthru
        _
      %p3166 = scmp.le.s32.totalorder 2, %s35
      // Predicated region
      $region121: #{tpu_custom_call.1} parent=5 // pred_check
        %p3167 = pneg %p3166
      $region122: #{tpu_custom_call.1} parent=5 // pred_check_branch
        %3169 = sbr.rel (%p3167) target = $region124
      $region123: #{tpu_custom_call.1} parent=5 // pred_region
        %s3170 = ssub.s32 %s35, 2
        // Predicated region
        $region125: #{tpu_custom_call.1} parent=123 // pred_check
          %p3171 = pneg %p421
        $region126: #{tpu_custom_call.1} parent=123 // pred_check_branch
          %3173 = sbr.rel (%p3171) target = $region128
        $region127: #{tpu_custom_call.1} parent=123 // pred_region
          %s3174 = sand.u32 %s406, 1
          %s3175 = scalar_lea.sflag [#allocation6], %s3174
          %s3176 = sand.u32 %s406, 1
          %s3177 = scalar_lea.vmem [#allocation16], %s3176
          %3178 = dma.done %s3175, 16
        $region128: #{tpu_custom_call.1} parent=123 // pred_fallthru
          _
      $region124: #{tpu_custom_call.1} parent=5 // pred_fallthru
        _
    $region6: #{tpu_custom_call.1} parent=1 // loop_footer
      %s39 = sadd.s32 1, %s35
    $region7: #{tpu_custom_call.1} parent=1 // loop_footer_branch
      %34 = sbr.rel target = $region3
    $region8: #{tpu_custom_call.1} parent=1 // loop_exit
      _
    %3179 = vsyncpa [#allocation5], 1
    %s3180 = scalar_lea.sflag [#allocation5], 1
    %3181 = vsyncpa %s3180, 1
    %3182 = vsyncpa [#allocation8], 1
    %3183 = vsyncpa [#allocation11], 1
    %3184 = vsyncpa [#allocation14], 1
    %3185 = vsyncpa [#allocation6], 1
    %s3186 = scalar_lea.sflag [#allocation6], 1
    %3187 = vsyncpa %s3186, 1

</llo_original>
